<compile_context>
chip_gen: v5e
topology: v5e:2x2
jax: 0.10.0
libtpu: 0.0.40
codegen_flags: <defaults>
</compile_context>

<pallas_src>
import functools

import jax
import jax.numpy as jnp
from jax.experimental import pallas as pl
from jax.experimental.pallas import tpu as pltpu

N_FEAT = 16
C_FEAT = 48
D_IN = N_FEAT * C_FEAT        # 768
D_H1 = 256
D_H2 = 512
BN_EPS = 1e-5
LANE = 128


def _round_up(x, m):
    return ((x + m - 1) // m) * m


def _solver_kernel(P, TOTAL,
                   feat_d_ref, feat_m_ref, stress_ref,
                   w1_ref, b1_ref, g1_ref, be1_ref,
                   w2_hbm, b2_ref, g2_ref, be2_ref,
                   w3_hbm, b3_ref,
                   wc_ref, bc_ref, consts_ref,
                   out_ref,
                   w2_vmem, w3_vmem, dma_sem):
    # Kick off the two big weight DMAs first so they hide under fc1/BN1 and
    # the stress-physics precompute (w1 is a regular VMEM input, needed first).
    w2_cp = pltpu.make_async_copy(w2_hbm, w2_vmem, dma_sem.at[0])
    w3_cp = pltpu.make_async_copy(w3_hbm, w3_vmem, dma_sem.at[1])
    w2_cp.start()
    w3_cp.start()

    E = consts_ref[0]
    Hp = consts_ref[1]
    nu = consts_ref[2]

    # ---------------- fc1 + BatchNorm(train) + ReLU -------------------------
    x = feat_m_ref[...] - feat_d_ref[...]                                # [B, 768]
    h1 = jnp.dot(x, w1_ref[...], preferred_element_type=jnp.float32) + b1_ref[...]
    m1 = jnp.mean(h1, axis=0, keepdims=True)
    v1 = jnp.mean((h1 - m1) ** 2, axis=0, keepdims=True)
    h1 = jnp.maximum(
        g1_ref[...] * (h1 - m1) * jax.lax.rsqrt(v1 + BN_EPS) + be1_ref[...], 0.0)

    # -------- stress physics (independent of the MLP; hides w2/w3 DMA) ------
    s_all = stress_ref[...]                                              # [B, 6*P]
    s = [s_all[:, i * P:(i + 1) * P] for i in range(6)]

    # eq is only ever squared -> skip the sqrt entirely.
    eq2 = jnp.sum(0.5 * ((s[0] - s[1]) ** 2 + (s[1] - s[2]) ** 2 + (s[2] - s[0]) ** 2)
                  + 3.0 * (s[3] ** 2 + s[4] ** 2 + s[5] ** 2),
                  axis=-1, keepdims=True)                                # [B, 1]
    avg = (s[0] + s[1] + s[2]) * (1.0 / 3.0)
    d = [s[0] - avg, s[1] - avg, s[2] - avg, s[3], s[4], s[5]]           # deviatoric

    lam = E * nu / ((1.0 + nu) * (1.0 - 2.0 * nu))
    G = E / (2.0 * (1.0 + nu))
    H_d = Hp / (1.0 - Hp / E)
    # NOTE: divides by eq2; all-zero stress gives inf/NaN exactly like the reference.
    coef = (9.0 * G * G / (H_d + 3.0 * G)) / eq2                         # [B, 1]

    # 21 unique cross-lane reductions (d_i . d_j is symmetric).
    g = [[None] * 6 for _ in range(6)]
    for i in range(6):
        for j in range(i, 6):
            gij = jnp.sum(d[i] * d[j], axis=-1, keepdims=True)           # [B, 1]
            g[i][j] = gij
            g[j][i] = gij

    def elastic_entry(i, j):
        # lower-triangular 3x3 lambda block + (lam+2G) diagonal, G shear diagonal.
        if i < 3 and j < 3:
            if i == j:
                return lam + 2.0 * G
            if j < i:
                return lam
            return 0.0
        if i == j:
            return G
        return 0.0

    # ---------------- fc2 + BatchNorm(train) + ReLU -------------------------
    w2_cp.wait()
    h2 = jnp.dot(h1, w2_vmem[...], preferred_element_type=jnp.float32) + b2_ref[...]
    m2 = jnp.mean(h2, axis=0, keepdims=True)
    v2 = jnp.mean((h2 - m2) ** 2, axis=0, keepdims=True)
    h2 = jnp.maximum(
        g2_ref[...] * (h2 - m2) * jax.lax.rsqrt(v2 + BN_EPS) + be2_ref[...], 0.0)

    # --------- fc3: bf16 storage (DMA), f32 operands/accumulation (MXU) -----
    w3_cp.wait()
    h3 = jnp.dot(h2, w3_vmem[...].astype(jnp.float32),
                 preferred_element_type=jnp.float32) + b3_ref[...]
    h3 = jnp.maximum(h3, 0.0)                                            # [B, TOTAL]

    # -------- 1x1 Conv1d(6,6): unrolled 6x6 channel mix (no kron matmul) ----
    ch = [h3[:, i * P:(i + 1) * P] for i in range(6)]
    strain = []
    for o in range(6):
        acc = ch[0] * wc_ref[o * 6 + 0]
        for i in range(1, 6):
            acc = acc + ch[i] * wc_ref[o * 6 + i]
        strain.append(acc + bc_ref[o])                                   # [B, P]

    # stress_field: out[b, j*P + p] = sum_i strain_i[b, p] * ep_ij[b]
    # Each output channel is stored directly (no concat temp).
    for j in range(6):
        acc = None
        for i in range(6):
            ep_ij = (elastic_entry(i, j) - coef * g[i][j]) * 1e-11       # [B, 1]
            term = ep_ij * strain[i]
            acc = term if acc is None else acc + term
        out_ref[:, j * P:(j + 1) * P] = acc

    if TOTAL > 6 * P:   # static: zero any padded tail so HBM never sees garbage
        out_ref[:, 6 * P:TOTAL] = jnp.zeros(
            (out_ref.shape[0], TOTAL - 6 * P), jnp.float32)


def init_params(key, pnum):
    """Raw f32 'module' parameters (what PyTorch would hold)."""
    ks = jax.random.split(key, 8)

    def linear(k, fan_in, fan_out):
        bound = 1.0 / (fan_in ** 0.5)
        kw, kb = jax.random.split(k)
        w = jax.random.uniform(kw, (fan_in, fan_out), jnp.float32, -bound, bound)
        b = jax.random.uniform(kb, (1, fan_out), jnp.float32, -bound, bound)
        return w, b

    w1, b1 = linear(ks[0], D_IN, D_H1)
    w2, b2 = linear(ks[1], D_H1, D_H2)
    w3, b3 = linear(ks[2], D_H2, pnum * 6)
    wc = jax.random.uniform(ks[3], (6, 6), jnp.float32, -1.0 / 6 ** 0.5, 1.0 / 6 ** 0.5)
    bc = jax.random.uniform(ks[4], (6,), jnp.float32, -1.0 / 6 ** 0.5, 1.0 / 6 ** 0.5)
    g1 = 1.0 + 0.1 * jax.random.normal(ks[5], (1, D_H1), jnp.float32)
    be1 = 0.1 * jax.random.normal(ks[6], (1, D_H1), jnp.float32)
    g2 = 1.0 + 0.1 * jax.random.normal(ks[7], (1, D_H2), jnp.float32)
    be2 = 0.1 * jax.random.normal(jax.random.fold_in(key, 99), (1, D_H2), jnp.float32)
    return dict(pnum=pnum, w1=w1, b1=b1, g1=g1, be1=be1,
                w2=w2, b2=b2, g2=g2, be2=be2,
                w3=w3, b3=b3, wc=wc, bc=bc)


def prepare_params(params):
    """One-time, outside the hot path: kernel-ready weight layouts.

    fc3 weight/bias: natural column order is already channel-major [6, P];
    only the concatenated 6*P axis is (tail-)padded to a lane multiple.
    For P=64, 6*P=384 is already 128-aligned -> no padding, and w3 bf16 is
    half the bytes of the old per-channel-padded layout.
    """
    P = params["pnum"]
    TOTAL = _round_up(6 * P, LANE)
    pad = TOTAL - 6 * P
    weights = dict(
        w1=params["w1"].astype(jnp.float32), b1=params["b1"].astype(jnp.float32),
        g1=params["g1"].astype(jnp.float32), be1=params["be1"].astype(jnp.float32),
        w2=params["w2"].astype(jnp.float32), b2=params["b2"].astype(jnp.float32),
        g2=params["g2"].astype(jnp.float32), be2=params["be2"].astype(jnp.float32),
        w3=jnp.pad(params["w3"], ((0, 0), (0, pad))).astype(jnp.bfloat16),
        b3=jnp.pad(params["b3"], ((0, 0), (0, pad))).astype(jnp.float32),
        wc=params["wc"].reshape(-1).astype(jnp.float32),   # [36] SMEM scalars
        bc=params["bc"].astype(jnp.float32),               # [6]  SMEM scalars
    )
    weights = jax.device_put(weights)
    return P, weights


@functools.partial(jax.jit, static_argnums=(0,))
def _forward_jit(pnum, weights, feat_d, feat_m, stress_m, consts):
    B, N, C = feat_d.shape
    P = pnum
    TOTAL = _round_up(6 * P, LANE)

    feat_d_flat = feat_d.reshape(B, N * C).astype(jnp.float32)
    feat_m_flat = feat_m.reshape(B, N * C).astype(jnp.float32)
    # Channel-major flat stress: [B, 6*P] (no padding needed for the input).
    stress_flat = jnp.transpose(stress_m, (0, 2, 1)).astype(jnp.float32).reshape(B, 6 * P)

    vspec = pl.BlockSpec(memory_space=pltpu.MemorySpace.VMEM)
    sspec = pl.BlockSpec(memory_space=pltpu.MemorySpace.SMEM)
    aspec = pl.BlockSpec(memory_space=pl.ANY)   # raw HBM ref; DMA'd in-kernel

    inputs = (feat_d_flat, feat_m_flat, stress_flat,
              weights["w1"], weights["b1"], weights["g1"], weights["be1"],
              weights["w2"], weights["b2"], weights["g2"], weights["be2"],
              weights["w3"], weights["b3"],
              weights["wc"], weights["bc"], consts)
    in_specs = [vspec, vspec, vspec,
                vspec, vspec, vspec, vspec,
                aspec, vspec, vspec, vspec,    # w2 via manual DMA
                aspec, vspec,                  # w3 via manual DMA
                sspec, sspec, sspec]

    flops = (2 * B * (D_IN * D_H1 + D_H1 * D_H2 + D_H2 * TOTAL)
             + B * P * (6 * 6 * 2 + 21 * 2 + 40 + 6 * 6 * 2))
    bytes_accessed = (sum(int(a.size) * a.dtype.itemsize for a in inputs)
                      + B * TOTAL * 4)
    cost = pl.CostEstimate(flops=int(flops), transcendentals=D_H1 + D_H2,
                           bytes_accessed=int(bytes_accessed))

    out_flat = pl.pallas_call(
        functools.partial(_solver_kernel, P, TOTAL),
        out_shape=jax.ShapeDtypeStruct((B, TOTAL), jnp.float32),
        in_specs=in_specs,
        out_specs=vspec,
        scratch_shapes=[
            pltpu.VMEM((D_H1, D_H2), jnp.float32),      # w2 landing buffer
            pltpu.VMEM((D_H2, TOTAL), jnp.bfloat16),    # w3 landing buffer
            pltpu.SemaphoreType.DMA((2,)),
        ],
        compiler_params=pltpu.CompilerParams(vmem_limit_bytes=32 * 1024 * 1024),
        cost_estimate=cost,
    )(*inputs)

    out_t = out_flat[:, :6 * P].reshape(B, 6, P)                          # [B, 6, P]
    output_stress_incre = jnp.transpose(out_t, (0, 2, 1))                 # [B, P, 6]
    pred_stress_increment = output_stress_incre.reshape(B, -1, C_FEAT)
    return pred_stress_increment, output_stress_incre


def stress_increment_solver_forward(prep, feat_d, feat_m, stress_m,
                                    elastic_modulus, plastic_modulus, poisson_ratio):
    pnum, weights = prep
    consts = jnp.array([elastic_modulus, plastic_modulus, poisson_ratio], jnp.float32)
    return _forward_jit(pnum, weights, feat_d, feat_m, stress_m, consts)


def reference_forward(params, feat_d, feat_m, stress_m, E, H, nu):
    """Pure-JAX f32 reference mirroring the PyTorch forward (training-mode BN)."""
    B, N, C = feat_d.shape
    P = params["pnum"]
    x = (feat_m - feat_d).reshape(B, N * C)

    def bn_relu(h, g, be):
        m = h.mean(0, keepdims=True)
        v = ((h - m) ** 2).mean(0, keepdims=True)
        return jnp.maximum(g * (h - m) / jnp.sqrt(v + BN_EPS) + be, 0.0)

    h1 = bn_relu(x @ params["w1"] + params["b1"], params["g1"], params["be1"])
    h2 = bn_relu(h1 @ params["w2"] + params["b2"], params["g2"], params["be2"])
    h3 = jnp.maximum(h2 @ params["w3"] + params["b3"], 0.0)
    x3 = h3.reshape(B, 6, P)
    conv = jnp.einsum("oi,bip->bop", params["wc"], x3) + params["bc"][None, :, None]
    strain = jnp.transpose(conv, (0, 2, 1))                               # [B, P, 6]

    s = stress_m
    lam = E * nu / ((1 + nu) * (1 - 2 * nu))
    G = E / (2 * (1 + nu))
    eq = jnp.sqrt(0.5 * ((s[..., 0] - s[..., 1]) ** 2 + (s[..., 1] - s[..., 2]) ** 2
                         + (s[..., 2] - s[..., 0]) ** 2
                         + 6 * (s[..., 3] ** 2 + s[..., 4] ** 2 + s[..., 5] ** 2)))
    eq2 = jnp.sum(eq * eq, axis=-1)[:, None, None]
    avg = (s[..., 0] + s[..., 1] + s[..., 2]) / 3
    bias = jnp.stack([s[..., 0] - avg, s[..., 1] - avg, s[..., 2] - avg,
                      s[..., 3], s[..., 4], s[..., 5]], axis=-1)
    biasT = jnp.transpose(bias, (0, 2, 1))
    H_d = H / (1 - H / E)
    elastic = jnp.array([[lam + 2 * G, 0, 0, 0, 0, 0],
                         [lam, lam + 2 * G, 0, 0, 0, 0],
                         [lam, lam, lam + 2 * G, 0, 0, 0],
                         [0, 0, 0, G, 0, 0],
                         [0, 0, 0, 0, G, 0],
                         [0, 0, 0, 0, 0, G]], jnp.float32)
    plastic = 9 * G * G / ((H_d + 3 * G) * eq2) * jnp.einsum("bip,bjp->bij", biasT, biasT)
    ep = (elastic[None] - plastic) * 1e-11
    out = jnp.einsum("bpi,bij->bpj", strain, ep)
    return out.reshape(B, -1, C_FEAT), out


if __name__ == "__main__":
    B, PNUM = 2, 64
    E_MOD, H_MOD, NU = 2.1e11, 1.0e9, 0.3

    key = jax.random.PRNGKey(0)
    k_fd, k_fm, k_s, k_p = jax.random.split(key, 4)
    feat_d = jax.random.normal(k_fd, (B, N_FEAT, C_FEAT), jnp.float32)
    feat_m = jax.random.normal(k_fm, (B, N_FEAT, C_FEAT), jnp.float32)
    stress_m = jax.random.normal(k_s, (B, PNUM, 6), jnp.float32)

    params = init_params(k_p, PNUM)
    prep = prepare_params(params)          # one-time weight prep, off the hot path

    pred, out = stress_increment_solver_forward(prep, feat_d, feat_m, stress_m,
                                                E_MOD, H_MOD, NU)
    jax.block_until_ready((pred, out))

    ref_pred, ref_out = reference_forward(params, feat_d, feat_m, stress_m,
                                          E_MOD, H_MOD, NU)
    assert pred.shape == (B, PNUM * 6 // C_FEAT, C_FEAT)
    assert out.shape == (B, PNUM, 6)
    assert jnp.allclose(out, ref_out, rtol=2e-2, atol=2e-2), "kernel/reference mismatch"
    assert jnp.allclose(pred, ref_pred, rtol=2e-2, atol=2e-2), "kernel/reference mismatch"

    print("KERNEL_OK")
</pallas_src>

<mosaic_0001>
module attributes {stable_mosaic.version = 11 : i64} {
  func.func @_solver_kernel(%arg0: memref<2x768xf32, #tpu.memory_space<vmem>>, %arg1: memref<2x768xf32, #tpu.memory_space<vmem>>, %arg2: memref<2x384xf32, #tpu.memory_space<vmem>>, %arg3: memref<768x256xf32, #tpu.memory_space<vmem>>, %arg4: memref<1x256xf32, #tpu.memory_space<vmem>>, %arg5: memref<1x256xf32, #tpu.memory_space<vmem>>, %arg6: memref<1x256xf32, #tpu.memory_space<vmem>>, %arg7: memref<256x512xf32, #tpu.memory_space<any>>, %arg8: memref<1x512xf32, #tpu.memory_space<vmem>>, %arg9: memref<1x512xf32, #tpu.memory_space<vmem>>, %arg10: memref<1x512xf32, #tpu.memory_space<vmem>>, %arg11: memref<512x384xbf16, #tpu.memory_space<any>>, %arg12: memref<1x384xf32, #tpu.memory_space<vmem>>, %arg13: memref<36xf32, #tpu.memory_space<smem>>, %arg14: memref<6xf32, #tpu.memory_space<smem>>, %arg15: memref<3xf32, #tpu.memory_space<smem>>, %arg16: memref<2x384xf32, #tpu.memory_space<vmem>>, %arg17: memref<256x512xf32, #tpu.memory_space<vmem>>, %arg18: memref<512x384xbf16, #tpu.memory_space<vmem>>, %arg19: memref<2x!tpu.dma_semaphore, #tpu.memory_space<semaphore_mem>>) attributes {dimension_semantics = [], scalar_prefetch = 0 : i64, scratch_operands = 3 : i64, tpu.core_type = #tpu.core_type<tc>} {
    %c0_i32 = arith.constant 0 : i32
    %0 = tpu.memref_slice %arg19[%c0_i32] : memref<2x!tpu.dma_semaphore, #tpu.memory_space<semaphore_mem>> -> memref<1x!tpu.dma_semaphore, #tpu.memory_space<semaphore_mem>>
    %1 = tpu.memref_squeeze %0 : memref<1x!tpu.dma_semaphore, #tpu.memory_space<semaphore_mem>> -> memref<!tpu.dma_semaphore, #tpu.memory_space<semaphore_mem>>
    tpu.enqueue_dma source(%arg7 : memref<256x512xf32, #tpu.memory_space<any>>) target(%arg17 : memref<256x512xf32, #tpu.memory_space<vmem>>) target_semaphore(%1 : memref<!tpu.dma_semaphore, #tpu.memory_space<semaphore_mem>>)
    %c1_i32 = arith.constant 1 : i32
    %2 = tpu.memref_slice %arg19[%c1_i32] : memref<2x!tpu.dma_semaphore, #tpu.memory_space<semaphore_mem>> -> memref<1x!tpu.dma_semaphore, #tpu.memory_space<semaphore_mem>>
    %3 = tpu.memref_squeeze %2 : memref<1x!tpu.dma_semaphore, #tpu.memory_space<semaphore_mem>> -> memref<!tpu.dma_semaphore, #tpu.memory_space<semaphore_mem>>
    tpu.enqueue_dma source(%arg11 : memref<512x384xbf16, #tpu.memory_space<any>>) target(%arg18 : memref<512x384xbf16, #tpu.memory_space<vmem>>) target_semaphore(%3 : memref<!tpu.dma_semaphore, #tpu.memory_space<semaphore_mem>>)
    %c0 = arith.constant 0 : index
    %4 = memref.load %arg15[%c0] : memref<3xf32, #tpu.memory_space<smem>>
    %c1 = arith.constant 1 : index
    %5 = memref.load %arg15[%c1] : memref<3xf32, #tpu.memory_space<smem>>
    %c2 = arith.constant 2 : index
    %6 = memref.load %arg15[%c2] : memref<3xf32, #tpu.memory_space<smem>>
    %c0_0 = arith.constant 0 : index
    %c0_1 = arith.constant 0 : index
    %7 = vector.load %arg1[%c0_0, %c0_1] : memref<2x768xf32, #tpu.memory_space<vmem>>, vector<2x768xf32>
    %c0_2 = arith.constant 0 : index
    %c0_3 = arith.constant 0 : index
    %8 = vector.load %arg0[%c0_2, %c0_3] : memref<2x768xf32, #tpu.memory_space<vmem>>, vector<2x768xf32>
    %9 = arith.subf %7, %8 : vector<2x768xf32>
    %c0_4 = arith.constant 0 : index
    %c0_5 = arith.constant 0 : index
    %10 = vector.load %arg3[%c0_4, %c0_5] : memref<768x256xf32, #tpu.memory_space<vmem>>, vector<768x256xf32>
    %cst = arith.constant dense<0.000000e+00> : vector<2x256xf32>
    %11 = tpu.matmul %9, %10, %cst {dimension_numbers = #tpu.dot_dimension_numbers<[1], [0], [0], [1], [0, 0, 1, 1], [], []>} : vector<2x768xf32>, vector<768x256xf32>, vector<2x256xf32> -> vector<2x256xf32>
    %c0_6 = arith.constant 0 : index
    %c0_7 = arith.constant 0 : index
    %12 = vector.load %arg4[%c0_6, %c0_7] : memref<1x256xf32, #tpu.memory_space<vmem>>, vector<1x256xf32>
    %13 = vector.broadcast %12 : vector<1x256xf32> to vector<2x256xf32>
    %14 = arith.addf %11, %13 : vector<2x256xf32>
    %cst_8 = arith.constant dense<0.000000e+00> : vector<256xf32>
    %15 = vector.multi_reduction <add>, %14, %cst_8 [0] : vector<2x256xf32> to vector<256xf32>
    %16 = vector.shape_cast %15 : vector<256xf32> to vector<1x256xf32>
    %cst_9 = arith.constant 2.000000e+00 : f32
    %17 = vector.broadcast %cst_9 : f32 to vector<1x256xf32>
    %18 = arith.divf %16, %17 : vector<1x256xf32>
    %19 = vector.broadcast %18 : vector<1x256xf32> to vector<2x256xf32>
    %20 = arith.subf %14, %19 : vector<2x256xf32>
    %21 = arith.mulf %20, %20 : vector<2x256xf32>
    %cst_10 = arith.constant dense<0.000000e+00> : vector<256xf32>
    %22 = vector.multi_reduction <add>, %21, %cst_10 [0] : vector<2x256xf32> to vector<256xf32>
    %23 = vector.shape_cast %22 : vector<256xf32> to vector<1x256xf32>
    %cst_11 = arith.constant 2.000000e+00 : f32
    %24 = vector.broadcast %cst_11 : f32 to vector<1x256xf32>
    %25 = arith.divf %23, %24 : vector<1x256xf32>
    %c0_12 = arith.constant 0 : index
    %c0_13 = arith.constant 0 : index
    %26 = vector.load %arg5[%c0_12, %c0_13] : memref<1x256xf32, #tpu.memory_space<vmem>>, vector<1x256xf32>
    %27 = vector.broadcast %18 : vector<1x256xf32> to vector<2x256xf32>
    %28 = arith.subf %14, %27 : vector<2x256xf32>
    %29 = vector.broadcast %26 : vector<1x256xf32> to vector<2x256xf32>
    %30 = arith.mulf %29, %28 : vector<2x256xf32>
    %cst_14 = arith.constant 9.99999974E-6 : f32
    %31 = vector.broadcast %cst_14 : f32 to vector<1x256xf32>
    %32 = arith.addf %25, %31 : vector<1x256xf32>
    %33 = math.rsqrt %32 : vector<1x256xf32>
    %34 = vector.broadcast %33 : vector<1x256xf32> to vector<2x256xf32>
    %35 = arith.mulf %30, %34 : vector<2x256xf32>
    %c0_15 = arith.constant 0 : index
    %c0_16 = arith.constant 0 : index
    %36 = vector.load %arg6[%c0_15, %c0_16] : memref<1x256xf32, #tpu.memory_space<vmem>>, vector<1x256xf32>
    %37 = vector.broadcast %36 : vector<1x256xf32> to vector<2x256xf32>
    %38 = arith.addf %35, %37 : vector<2x256xf32>
    %cst_17 = arith.constant 0.000000e+00 : f32
    %39 = vector.broadcast %cst_17 : f32 to vector<2x256xf32>
    %40 = arith.maximumf %38, %39 : vector<2x256xf32>
    %c0_18 = arith.constant 0 : index
    %c0_19 = arith.constant 0 : index
    %41 = vector.load %arg2[%c0_18, %c0_19] : memref<2x384xf32, #tpu.memory_space<vmem>>, vector<2x384xf32>
    %42 = vector.extract_strided_slice %41 {offsets = [0, 0], sizes = [2, 64], strides = [1, 1]} : vector<2x384xf32> to vector<2x64xf32>
    %43 = vector.extract_strided_slice %41 {offsets = [0, 64], sizes = [2, 64], strides = [1, 1]} : vector<2x384xf32> to vector<2x64xf32>
    %44 = vector.extract_strided_slice %41 {offsets = [0, 128], sizes = [2, 64], strides = [1, 1]} : vector<2x384xf32> to vector<2x64xf32>
    %45 = vector.extract_strided_slice %41 {offsets = [0, 192], sizes = [2, 64], strides = [1, 1]} : vector<2x384xf32> to vector<2x64xf32>
    %46 = vector.extract_strided_slice %41 {offsets = [0, 256], sizes = [2, 64], strides = [1, 1]} : vector<2x384xf32> to vector<2x64xf32>
    %47 = vector.extract_strided_slice %41 {offsets = [0, 320], sizes = [2, 64], strides = [1, 1]} : vector<2x384xf32> to vector<2x64xf32>
    %48 = arith.subf %42, %43 : vector<2x64xf32>
    %49 = arith.mulf %48, %48 : vector<2x64xf32>
    %50 = arith.subf %43, %44 : vector<2x64xf32>
    %51 = arith.mulf %50, %50 : vector<2x64xf32>
    %52 = arith.addf %49, %51 : vector<2x64xf32>
    %53 = arith.subf %44, %42 : vector<2x64xf32>
    %54 = arith.mulf %53, %53 : vector<2x64xf32>
    %55 = arith.addf %52, %54 : vector<2x64xf32>
    %cst_20 = arith.constant 5.000000e-01 : f32
    %56 = vector.broadcast %cst_20 : f32 to vector<2x64xf32>
    %57 = arith.mulf %56, %55 : vector<2x64xf32>
    %58 = arith.mulf %45, %45 : vector<2x64xf32>
    %59 = arith.mulf %46, %46 : vector<2x64xf32>
    %60 = arith.addf %58, %59 : vector<2x64xf32>
    %61 = arith.mulf %47, %47 : vector<2x64xf32>
    %62 = arith.addf %60, %61 : vector<2x64xf32>
    %cst_21 = arith.constant 3.000000e+00 : f32
    %63 = vector.broadcast %cst_21 : f32 to vector<2x64xf32>
    %64 = arith.mulf %63, %62 : vector<2x64xf32>
    %65 = arith.addf %57, %64 : vector<2x64xf32>
    %cst_22 = arith.constant dense<0.000000e+00> : vector<2xf32>
    %66 = vector.multi_reduction <add>, %65, %cst_22 [1] : vector<2x64xf32> to vector<2xf32>
    %67 = vector.shape_cast %66 : vector<2xf32> to vector<2x1xf32>
    %68 = arith.addf %42, %43 : vector<2x64xf32>
    %69 = arith.addf %68, %44 : vector<2x64xf32>
    %cst_23 = arith.constant 0.333333343 : f32
    %70 = vector.broadcast %cst_23 : f32 to vector<2x64xf32>
    %71 = arith.mulf %69, %70 : vector<2x64xf32>
    %72 = arith.subf %42, %71 : vector<2x64xf32>
    %73 = arith.subf %43, %71 : vector<2x64xf32>
    %74 = arith.subf %44, %71 : vector<2x64xf32>
    %75 = arith.mulf %4, %6 : f32
    %cst_24 = arith.constant 1.000000e+00 : f32
    %76 = arith.addf %cst_24, %6 : f32
    %cst_25 = arith.constant 2.000000e+00 : f32
    %77 = arith.mulf %cst_25, %6 : f32
    %cst_26 = arith.constant 1.000000e+00 : f32
    %78 = arith.subf %cst_26, %77 : f32
    %79 = arith.mulf %76, %78 : f32
    %80 = arith.divf %75, %79 : f32
    %cst_27 = arith.constant 1.000000e+00 : f32
    %81 = arith.addf %cst_27, %6 : f32
    %cst_28 = arith.constant 2.000000e+00 : f32
    %82 = arith.mulf %cst_28, %81 : f32
    %83 = arith.divf %4, %82 : f32
    %84 = arith.divf %5, %4 : f32
    %cst_29 = arith.constant 1.000000e+00 : f32
    %85 = arith.subf %cst_29, %84 : f32
    %86 = arith.divf %5, %85 : f32
    %cst_30 = arith.constant 9.000000e+00 : f32
    %87 = arith.mulf %cst_30, %83 : f32
    %88 = arith.mulf %87, %83 : f32
    %cst_31 = arith.constant 3.000000e+00 : f32
    %89 = arith.mulf %cst_31, %83 : f32
    %90 = arith.addf %86, %89 : f32
    %91 = arith.divf %88, %90 : f32
    %92 = vector.broadcast %91 : f32 to vector<2x1xf32>
    %93 = arith.divf %92, %67 : vector<2x1xf32>
    %94 = arith.mulf %72, %72 : vector<2x64xf32>
    %cst_32 = arith.constant dense<0.000000e+00> : vector<2xf32>
    %95 = vector.multi_reduction <add>, %94, %cst_32 [1] : vector<2x64xf32> to vector<2xf32>
    %96 = vector.shape_cast %95 : vector<2xf32> to vector<2x1xf32>
    %97 = arith.mulf %72, %73 : vector<2x64xf32>
    %cst_33 = arith.constant dense<0.000000e+00> : vector<2xf32>
    %98 = vector.multi_reduction <add>, %97, %cst_33 [1] : vector<2x64xf32> to vector<2xf32>
    %99 = vector.shape_cast %98 : vector<2xf32> to vector<2x1xf32>
    %100 = arith.mulf %72, %74 : vector<2x64xf32>
    %cst_34 = arith.constant dense<0.000000e+00> : vector<2xf32>
    %101 = vector.multi_reduction <add>, %100, %cst_34 [1] : vector<2x64xf32> to vector<2xf32>
    %102 = vector.shape_cast %101 : vector<2xf32> to vector<2x1xf32>
    %103 = arith.mulf %72, %45 : vector<2x64xf32>
    %cst_35 = arith.constant dense<0.000000e+00> : vector<2xf32>
    %104 = vector.multi_reduction <add>, %103, %cst_35 [1] : vector<2x64xf32> to vector<2xf32>
    %105 = vector.shape_cast %104 : vector<2xf32> to vector<2x1xf32>
    %106 = arith.mulf %72, %46 : vector<2x64xf32>
    %cst_36 = arith.constant dense<0.000000e+00> : vector<2xf32>
    %107 = vector.multi_reduction <add>, %106, %cst_36 [1] : vector<2x64xf32> to vector<2xf32>
    %108 = vector.shape_cast %107 : vector<2xf32> to vector<2x1xf32>
    %109 = arith.mulf %72, %47 : vector<2x64xf32>
    %cst_37 = arith.constant dense<0.000000e+00> : vector<2xf32>
    %110 = vector.multi_reduction <add>, %109, %cst_37 [1] : vector<2x64xf32> to vector<2xf32>
    %111 = vector.shape_cast %110 : vector<2xf32> to vector<2x1xf32>
    %112 = arith.mulf %73, %73 : vector<2x64xf32>
    %cst_38 = arith.constant dense<0.000000e+00> : vector<2xf32>
    %113 = vector.multi_reduction <add>, %112, %cst_38 [1] : vector<2x64xf32> to vector<2xf32>
    %114 = vector.shape_cast %113 : vector<2xf32> to vector<2x1xf32>
    %115 = arith.mulf %73, %74 : vector<2x64xf32>
    %cst_39 = arith.constant dense<0.000000e+00> : vector<2xf32>
    %116 = vector.multi_reduction <add>, %115, %cst_39 [1] : vector<2x64xf32> to vector<2xf32>
    %117 = vector.shape_cast %116 : vector<2xf32> to vector<2x1xf32>
    %118 = arith.mulf %73, %45 : vector<2x64xf32>
    %cst_40 = arith.constant dense<0.000000e+00> : vector<2xf32>
    %119 = vector.multi_reduction <add>, %118, %cst_40 [1] : vector<2x64xf32> to vector<2xf32>
    %120 = vector.shape_cast %119 : vector<2xf32> to vector<2x1xf32>
    %121 = arith.mulf %73, %46 : vector<2x64xf32>
    %cst_41 = arith.constant dense<0.000000e+00> : vector<2xf32>
    %122 = vector.multi_reduction <add>, %121, %cst_41 [1] : vector<2x64xf32> to vector<2xf32>
    %123 = vector.shape_cast %122 : vector<2xf32> to vector<2x1xf32>
    %124 = arith.mulf %73, %47 : vector<2x64xf32>
    %cst_42 = arith.constant dense<0.000000e+00> : vector<2xf32>
    %125 = vector.multi_reduction <add>, %124, %cst_42 [1] : vector<2x64xf32> to vector<2xf32>
    %126 = vector.shape_cast %125 : vector<2xf32> to vector<2x1xf32>
    %127 = arith.mulf %74, %74 : vector<2x64xf32>
    %cst_43 = arith.constant dense<0.000000e+00> : vector<2xf32>
    %128 = vector.multi_reduction <add>, %127, %cst_43 [1] : vector<2x64xf32> to vector<2xf32>
    %129 = vector.shape_cast %128 : vector<2xf32> to vector<2x1xf32>
    %130 = arith.mulf %74, %45 : vector<2x64xf32>
    %cst_44 = arith.constant dense<0.000000e+00> : vector<2xf32>
    %131 = vector.multi_reduction <add>, %130, %cst_44 [1] : vector<2x64xf32> to vector<2xf32>
    %132 = vector.shape_cast %131 : vector<2xf32> to vector<2x1xf32>
    %133 = arith.mulf %74, %46 : vector<2x64xf32>
    %cst_45 = arith.constant dense<0.000000e+00> : vector<2xf32>
    %134 = vector.multi_reduction <add>, %133, %cst_45 [1] : vector<2x64xf32> to vector<2xf32>
    %135 = vector.shape_cast %134 : vector<2xf32> to vector<2x1xf32>
    %136 = arith.mulf %74, %47 : vector<2x64xf32>
    %cst_46 = arith.constant dense<0.000000e+00> : vector<2xf32>
    %137 = vector.multi_reduction <add>, %136, %cst_46 [1] : vector<2x64xf32> to vector<2xf32>
    %138 = vector.shape_cast %137 : vector<2xf32> to vector<2x1xf32>
    %139 = arith.mulf %45, %45 : vector<2x64xf32>
    %cst_47 = arith.constant dense<0.000000e+00> : vector<2xf32>
    %140 = vector.multi_reduction <add>, %139, %cst_47 [1] : vector<2x64xf32> to vector<2xf32>
    %141 = vector.shape_cast %140 : vector<2xf32> to vector<2x1xf32>
    %142 = arith.mulf %45, %46 : vector<2x64xf32>
    %cst_48 = arith.constant dense<0.000000e+00> : vector<2xf32>
    %143 = vector.multi_reduction <add>, %142, %cst_48 [1] : vector<2x64xf32> to vector<2xf32>
    %144 = vector.shape_cast %143 : vector<2xf32> to vector<2x1xf32>
    %145 = arith.mulf %45, %47 : vector<2x64xf32>
    %cst_49 = arith.constant dense<0.000000e+00> : vector<2xf32>
    %146 = vector.multi_reduction <add>, %145, %cst_49 [1] : vector<2x64xf32> to vector<2xf32>
    %147 = vector.shape_cast %146 : vector<2xf32> to vector<2x1xf32>
    %148 = arith.mulf %46, %46 : vector<2x64xf32>
    %cst_50 = arith.constant dense<0.000000e+00> : vector<2xf32>
    %149 = vector.multi_reduction <add>, %148, %cst_50 [1] : vector<2x64xf32> to vector<2xf32>
    %150 = vector.shape_cast %149 : vector<2xf32> to vector<2x1xf32>
    %151 = arith.mulf %46, %47 : vector<2x64xf32>
    %cst_51 = arith.constant dense<0.000000e+00> : vector<2xf32>
    %152 = vector.multi_reduction <add>, %151, %cst_51 [1] : vector<2x64xf32> to vector<2xf32>
    %153 = vector.shape_cast %152 : vector<2xf32> to vector<2x1xf32>
    %154 = arith.mulf %47, %47 : vector<2x64xf32>
    %cst_52 = arith.constant dense<0.000000e+00> : vector<2xf32>
    %155 = vector.multi_reduction <add>, %154, %cst_52 [1] : vector<2x64xf32> to vector<2xf32>
    %156 = vector.shape_cast %155 : vector<2xf32> to vector<2x1xf32>
    %c0_i32_53 = arith.constant 0 : i32
    %157 = tpu.memref_slice %arg19[%c0_i32_53] : memref<2x!tpu.dma_semaphore, #tpu.memory_space<semaphore_mem>> -> memref<1x!tpu.dma_semaphore, #tpu.memory_space<semaphore_mem>>
    %158 = tpu.memref_squeeze %157 : memref<1x!tpu.dma_semaphore, #tpu.memory_space<semaphore_mem>> -> memref<!tpu.dma_semaphore, #tpu.memory_space<semaphore_mem>>
    tpu.wait_dma2 semaphore(%158 : memref<!tpu.dma_semaphore, #tpu.memory_space<semaphore_mem>>) src(%arg7 : memref<256x512xf32, #tpu.memory_space<any>>) dst(%arg17 : memref<256x512xf32, #tpu.memory_space<vmem>>)
    %c0_54 = arith.constant 0 : index
    %c0_55 = arith.constant 0 : index
    %159 = vector.load %arg17[%c0_54, %c0_55] : memref<256x512xf32, #tpu.memory_space<vmem>>, vector<256x512xf32>
    %cst_56 = arith.constant dense<0.000000e+00> : vector<2x512xf32>
    %160 = tpu.matmul %40, %159, %cst_56 {dimension_numbers = #tpu.dot_dimension_numbers<[1], [0], [0], [1], [0, 0, 1, 1], [], []>} : vector<2x256xf32>, vector<256x512xf32>, vector<2x512xf32> -> vector<2x512xf32>
    %c0_57 = arith.constant 0 : index
    %c0_58 = arith.constant 0 : index
    %161 = vector.load %arg8[%c0_57, %c0_58] : memref<1x512xf32, #tpu.memory_space<vmem>>, vector<1x512xf32>
    %162 = vector.broadcast %161 : vector<1x512xf32> to vector<2x512xf32>
    %163 = arith.addf %160, %162 : vector<2x512xf32>
    %cst_59 = arith.constant dense<0.000000e+00> : vector<512xf32>
    %164 = vector.multi_reduction <add>, %163, %cst_59 [0] : vector<2x512xf32> to vector<512xf32>
    %165 = vector.shape_cast %164 : vector<512xf32> to vector<1x512xf32>
    %cst_60 = arith.constant 2.000000e+00 : f32
    %166 = vector.broadcast %cst_60 : f32 to vector<1x512xf32>
    %167 = arith.divf %165, %166 : vector<1x512xf32>
    %168 = vector.broadcast %167 : vector<1x512xf32> to vector<2x512xf32>
    %169 = arith.subf %163, %168 : vector<2x512xf32>
    %170 = arith.mulf %169, %169 : vector<2x512xf32>
    %cst_61 = arith.constant dense<0.000000e+00> : vector<512xf32>
    %171 = vector.multi_reduction <add>, %170, %cst_61 [0] : vector<2x512xf32> to vector<512xf32>
    %172 = vector.shape_cast %171 : vector<512xf32> to vector<1x512xf32>
    %cst_62 = arith.constant 2.000000e+00 : f32
    %173 = vector.broadcast %cst_62 : f32 to vector<1x512xf32>
    %174 = arith.divf %172, %173 : vector<1x512xf32>
    %c0_63 = arith.constant 0 : index
    %c0_64 = arith.constant 0 : index
    %175 = vector.load %arg9[%c0_63, %c0_64] : memref<1x512xf32, #tpu.memory_space<vmem>>, vector<1x512xf32>
    %176 = vector.broadcast %167 : vector<1x512xf32> to vector<2x512xf32>
    %177 = arith.subf %163, %176 : vector<2x512xf32>
    %178 = vector.broadcast %175 : vector<1x512xf32> to vector<2x512xf32>
    %179 = arith.mulf %178, %177 : vector<2x512xf32>
    %cst_65 = arith.constant 9.99999974E-6 : f32
    %180 = vector.broadcast %cst_65 : f32 to vector<1x512xf32>
    %181 = arith.addf %174, %180 : vector<1x512xf32>
    %182 = math.rsqrt %181 : vector<1x512xf32>
    %183 = vector.broadcast %182 : vector<1x512xf32> to vector<2x512xf32>
    %184 = arith.mulf %179, %183 : vector<2x512xf32>
    %c0_66 = arith.constant 0 : index
    %c0_67 = arith.constant 0 : index
    %185 = vector.load %arg10[%c0_66, %c0_67] : memref<1x512xf32, #tpu.memory_space<vmem>>, vector<1x512xf32>
    %186 = vector.broadcast %185 : vector<1x512xf32> to vector<2x512xf32>
    %187 = arith.addf %184, %186 : vector<2x512xf32>
    %cst_68 = arith.constant 0.000000e+00 : f32
    %188 = vector.broadcast %cst_68 : f32 to vector<2x512xf32>
    %189 = arith.maximumf %187, %188 : vector<2x512xf32>
    %c1_i32_69 = arith.constant 1 : i32
    %190 = tpu.memref_slice %arg19[%c1_i32_69] : memref<2x!tpu.dma_semaphore, #tpu.memory_space<semaphore_mem>> -> memref<1x!tpu.dma_semaphore, #tpu.memory_space<semaphore_mem>>
    %191 = tpu.memref_squeeze %190 : memref<1x!tpu.dma_semaphore, #tpu.memory_space<semaphore_mem>> -> memref<!tpu.dma_semaphore, #tpu.memory_space<semaphore_mem>>
    tpu.wait_dma2 semaphore(%191 : memref<!tpu.dma_semaphore, #tpu.memory_space<semaphore_mem>>) src(%arg11 : memref<512x384xbf16, #tpu.memory_space<any>>) dst(%arg18 : memref<512x384xbf16, #tpu.memory_space<vmem>>)
    %c0_70 = arith.constant 0 : index
    %c0_71 = arith.constant 0 : index
    %192 = vector.load %arg18[%c0_70, %c0_71] : memref<512x384xbf16, #tpu.memory_space<vmem>>, vector<512x384xbf16>
    %193 = arith.extf %192 : vector<512x384xbf16> to vector<512x384xf32>
    %cst_72 = arith.constant dense<0.000000e+00> : vector<2x384xf32>
    %194 = tpu.matmul %189, %193, %cst_72 {dimension_numbers = #tpu.dot_dimension_numbers<[1], [0], [0], [1], [0, 0, 1, 1], [], []>} : vector<2x512xf32>, vector<512x384xf32>, vector<2x384xf32> -> vector<2x384xf32>
    %c0_73 = arith.constant 0 : index
    %c0_74 = arith.constant 0 : index
    %195 = vector.load %arg12[%c0_73, %c0_74] : memref<1x384xf32, #tpu.memory_space<vmem>>, vector<1x384xf32>
    %196 = vector.broadcast %195 : vector<1x384xf32> to vector<2x384xf32>
    %197 = arith.addf %194, %196 : vector<2x384xf32>
    %cst_75 = arith.constant 0.000000e+00 : f32
    %198 = vector.broadcast %cst_75 : f32 to vector<2x384xf32>
    %199 = arith.maximumf %197, %198 : vector<2x384xf32>
    %200 = vector.extract_strided_slice %199 {offsets = [0, 0], sizes = [2, 64], strides = [1, 1]} : vector<2x384xf32> to vector<2x64xf32>
    %201 = vector.extract_strided_slice %199 {offsets = [0, 64], sizes = [2, 64], strides = [1, 1]} : vector<2x384xf32> to vector<2x64xf32>
    %202 = vector.extract_strided_slice %199 {offsets = [0, 128], sizes = [2, 64], strides = [1, 1]} : vector<2x384xf32> to vector<2x64xf32>
    %203 = vector.extract_strided_slice %199 {offsets = [0, 192], sizes = [2, 64], strides = [1, 1]} : vector<2x384xf32> to vector<2x64xf32>
    %204 = vector.extract_strided_slice %199 {offsets = [0, 256], sizes = [2, 64], strides = [1, 1]} : vector<2x384xf32> to vector<2x64xf32>
    %205 = vector.extract_strided_slice %199 {offsets = [0, 320], sizes = [2, 64], strides = [1, 1]} : vector<2x384xf32> to vector<2x64xf32>
    %c0_76 = arith.constant 0 : index
    %206 = memref.load %arg13[%c0_76] : memref<36xf32, #tpu.memory_space<smem>>
    %207 = vector.broadcast %206 : f32 to vector<2x64xf32>
    %208 = arith.mulf %200, %207 : vector<2x64xf32>
    %c1_77 = arith.constant 1 : index
    %209 = memref.load %arg13[%c1_77] : memref<36xf32, #tpu.memory_space<smem>>
    %210 = vector.broadcast %209 : f32 to vector<2x64xf32>
    %211 = arith.mulf %201, %210 : vector<2x64xf32>
    %212 = arith.addf %208, %211 : vector<2x64xf32>
    %c2_78 = arith.constant 2 : index
    %213 = memref.load %arg13[%c2_78] : memref<36xf32, #tpu.memory_space<smem>>
    %214 = vector.broadcast %213 : f32 to vector<2x64xf32>
    %215 = arith.mulf %202, %214 : vector<2x64xf32>
    %216 = arith.addf %212, %215 : vector<2x64xf32>
    %c3 = arith.constant 3 : index
    %217 = memref.load %arg13[%c3] : memref<36xf32, #tpu.memory_space<smem>>
    %218 = vector.broadcast %217 : f32 to vector<2x64xf32>
    %219 = arith.mulf %203, %218 : vector<2x64xf32>
    %220 = arith.addf %216, %219 : vector<2x64xf32>
    %c4 = arith.constant 4 : index
    %221 = memref.load %arg13[%c4] : memref<36xf32, #tpu.memory_space<smem>>
    %222 = vector.broadcast %221 : f32 to vector<2x64xf32>
    %223 = arith.mulf %204, %222 : vector<2x64xf32>
    %224 = arith.addf %220, %223 : vector<2x64xf32>
    %c5 = arith.constant 5 : index
    %225 = memref.load %arg13[%c5] : memref<36xf32, #tpu.memory_space<smem>>
    %226 = vector.broadcast %225 : f32 to vector<2x64xf32>
    %227 = arith.mulf %205, %226 : vector<2x64xf32>
    %228 = arith.addf %224, %227 : vector<2x64xf32>
    %c0_79 = arith.constant 0 : index
    %229 = memref.load %arg14[%c0_79] : memref<6xf32, #tpu.memory_space<smem>>
    %230 = vector.broadcast %229 : f32 to vector<2x64xf32>
    %231 = arith.addf %228, %230 : vector<2x64xf32>
    %c6 = arith.constant 6 : index
    %232 = memref.load %arg13[%c6] : memref<36xf32, #tpu.memory_space<smem>>
    %233 = vector.broadcast %232 : f32 to vector<2x64xf32>
    %234 = arith.mulf %200, %233 : vector<2x64xf32>
    %c7 = arith.constant 7 : index
    %235 = memref.load %arg13[%c7] : memref<36xf32, #tpu.memory_space<smem>>
    %236 = vector.broadcast %235 : f32 to vector<2x64xf32>
    %237 = arith.mulf %201, %236 : vector<2x64xf32>
    %238 = arith.addf %234, %237 : vector<2x64xf32>
    %c8 = arith.constant 8 : index
    %239 = memref.load %arg13[%c8] : memref<36xf32, #tpu.memory_space<smem>>
    %240 = vector.broadcast %239 : f32 to vector<2x64xf32>
    %241 = arith.mulf %202, %240 : vector<2x64xf32>
    %242 = arith.addf %238, %241 : vector<2x64xf32>
    %c9 = arith.constant 9 : index
    %243 = memref.load %arg13[%c9] : memref<36xf32, #tpu.memory_space<smem>>
    %244 = vector.broadcast %243 : f32 to vector<2x64xf32>
    %245 = arith.mulf %203, %244 : vector<2x64xf32>
    %246 = arith.addf %242, %245 : vector<2x64xf32>
    %c10 = arith.constant 10 : index
    %247 = memref.load %arg13[%c10] : memref<36xf32, #tpu.memory_space<smem>>
    %248 = vector.broadcast %247 : f32 to vector<2x64xf32>
    %249 = arith.mulf %204, %248 : vector<2x64xf32>
    %250 = arith.addf %246, %249 : vector<2x64xf32>
    %c11 = arith.constant 11 : index
    %251 = memref.load %arg13[%c11] : memref<36xf32, #tpu.memory_space<smem>>
    %252 = vector.broadcast %251 : f32 to vector<2x64xf32>
    %253 = arith.mulf %205, %252 : vector<2x64xf32>
    %254 = arith.addf %250, %253 : vector<2x64xf32>
    %c1_80 = arith.constant 1 : index
    %255 = memref.load %arg14[%c1_80] : memref<6xf32, #tpu.memory_space<smem>>
    %256 = vector.broadcast %255 : f32 to vector<2x64xf32>
    %257 = arith.addf %254, %256 : vector<2x64xf32>
    %c12 = arith.constant 12 : index
    %258 = memref.load %arg13[%c12] : memref<36xf32, #tpu.memory_space<smem>>
    %259 = vector.broadcast %258 : f32 to vector<2x64xf32>
    %260 = arith.mulf %200, %259 : vector<2x64xf32>
    %c13 = arith.constant 13 : index
    %261 = memref.load %arg13[%c13] : memref<36xf32, #tpu.memory_space<smem>>
    %262 = vector.broadcast %261 : f32 to vector<2x64xf32>
    %263 = arith.mulf %201, %262 : vector<2x64xf32>
    %264 = arith.addf %260, %263 : vector<2x64xf32>
    %c14 = arith.constant 14 : index
    %265 = memref.load %arg13[%c14] : memref<36xf32, #tpu.memory_space<smem>>
    %266 = vector.broadcast %265 : f32 to vector<2x64xf32>
    %267 = arith.mulf %202, %266 : vector<2x64xf32>
    %268 = arith.addf %264, %267 : vector<2x64xf32>
    %c15 = arith.constant 15 : index
    %269 = memref.load %arg13[%c15] : memref<36xf32, #tpu.memory_space<smem>>
    %270 = vector.broadcast %269 : f32 to vector<2x64xf32>
    %271 = arith.mulf %203, %270 : vector<2x64xf32>
    %272 = arith.addf %268, %271 : vector<2x64xf32>
    %c16 = arith.constant 16 : index
    %273 = memref.load %arg13[%c16] : memref<36xf32, #tpu.memory_space<smem>>
    %274 = vector.broadcast %273 : f32 to vector<2x64xf32>
    %275 = arith.mulf %204, %274 : vector<2x64xf32>
    %276 = arith.addf %272, %275 : vector<2x64xf32>
    %c17 = arith.constant 17 : index
    %277 = memref.load %arg13[%c17] : memref<36xf32, #tpu.memory_space<smem>>
    %278 = vector.broadcast %277 : f32 to vector<2x64xf32>
    %279 = arith.mulf %205, %278 : vector<2x64xf32>
    %280 = arith.addf %276, %279 : vector<2x64xf32>
    %c2_81 = arith.constant 2 : index
    %281 = memref.load %arg14[%c2_81] : memref<6xf32, #tpu.memory_space<smem>>
    %282 = vector.broadcast %281 : f32 to vector<2x64xf32>
    %283 = arith.addf %280, %282 : vector<2x64xf32>
    %c18 = arith.constant 18 : index
    %284 = memref.load %arg13[%c18] : memref<36xf32, #tpu.memory_space<smem>>
    %285 = vector.broadcast %284 : f32 to vector<2x64xf32>
    %286 = arith.mulf %200, %285 : vector<2x64xf32>
    %c19 = arith.constant 19 : index
    %287 = memref.load %arg13[%c19] : memref<36xf32, #tpu.memory_space<smem>>
    %288 = vector.broadcast %287 : f32 to vector<2x64xf32>
    %289 = arith.mulf %201, %288 : vector<2x64xf32>
    %290 = arith.addf %286, %289 : vector<2x64xf32>
    %c20 = arith.constant 20 : index
    %291 = memref.load %arg13[%c20] : memref<36xf32, #tpu.memory_space<smem>>
    %292 = vector.broadcast %291 : f32 to vector<2x64xf32>
    %293 = arith.mulf %202, %292 : vector<2x64xf32>
    %294 = arith.addf %290, %293 : vector<2x64xf32>
    %c21 = arith.constant 21 : index
    %295 = memref.load %arg13[%c21] : memref<36xf32, #tpu.memory_space<smem>>
    %296 = vector.broadcast %295 : f32 to vector<2x64xf32>
    %297 = arith.mulf %203, %296 : vector<2x64xf32>
    %298 = arith.addf %294, %297 : vector<2x64xf32>
    %c22 = arith.constant 22 : index
    %299 = memref.load %arg13[%c22] : memref<36xf32, #tpu.memory_space<smem>>
    %300 = vector.broadcast %299 : f32 to vector<2x64xf32>
    %301 = arith.mulf %204, %300 : vector<2x64xf32>
    %302 = arith.addf %298, %301 : vector<2x64xf32>
    %c23 = arith.constant 23 : index
    %303 = memref.load %arg13[%c23] : memref<36xf32, #tpu.memory_space<smem>>
    %304 = vector.broadcast %303 : f32 to vector<2x64xf32>
    %305 = arith.mulf %205, %304 : vector<2x64xf32>
    %306 = arith.addf %302, %305 : vector<2x64xf32>
    %c3_82 = arith.constant 3 : index
    %307 = memref.load %arg14[%c3_82] : memref<6xf32, #tpu.memory_space<smem>>
    %308 = vector.broadcast %307 : f32 to vector<2x64xf32>
    %309 = arith.addf %306, %308 : vector<2x64xf32>
    %c24 = arith.constant 24 : index
    %310 = memref.load %arg13[%c24] : memref<36xf32, #tpu.memory_space<smem>>
    %311 = vector.broadcast %310 : f32 to vector<2x64xf32>
    %312 = arith.mulf %200, %311 : vector<2x64xf32>
    %c25 = arith.constant 25 : index
    %313 = memref.load %arg13[%c25] : memref<36xf32, #tpu.memory_space<smem>>
    %314 = vector.broadcast %313 : f32 to vector<2x64xf32>
    %315 = arith.mulf %201, %314 : vector<2x64xf32>
    %316 = arith.addf %312, %315 : vector<2x64xf32>
    %c26 = arith.constant 26 : index
    %317 = memref.load %arg13[%c26] : memref<36xf32, #tpu.memory_space<smem>>
    %318 = vector.broadcast %317 : f32 to vector<2x64xf32>
    %319 = arith.mulf %202, %318 : vector<2x64xf32>
    %320 = arith.addf %316, %319 : vector<2x64xf32>
    %c27 = arith.constant 27 : index
    %321 = memref.load %arg13[%c27] : memref<36xf32, #tpu.memory_space<smem>>
    %322 = vector.broadcast %321 : f32 to vector<2x64xf32>
    %323 = arith.mulf %203, %322 : vector<2x64xf32>
    %324 = arith.addf %320, %323 : vector<2x64xf32>
    %c28 = arith.constant 28 : index
    %325 = memref.load %arg13[%c28] : memref<36xf32, #tpu.memory_space<smem>>
    %326 = vector.broadcast %325 : f32 to vector<2x64xf32>
    %327 = arith.mulf %204, %326 : vector<2x64xf32>
    %328 = arith.addf %324, %327 : vector<2x64xf32>
    %c29 = arith.constant 29 : index
    %329 = memref.load %arg13[%c29] : memref<36xf32, #tpu.memory_space<smem>>
    %330 = vector.broadcast %329 : f32 to vector<2x64xf32>
    %331 = arith.mulf %205, %330 : vector<2x64xf32>
    %332 = arith.addf %328, %331 : vector<2x64xf32>
    %c4_83 = arith.constant 4 : index
    %333 = memref.load %arg14[%c4_83] : memref<6xf32, #tpu.memory_space<smem>>
    %334 = vector.broadcast %333 : f32 to vector<2x64xf32>
    %335 = arith.addf %332, %334 : vector<2x64xf32>
    %c30 = arith.constant 30 : index
    %336 = memref.load %arg13[%c30] : memref<36xf32, #tpu.memory_space<smem>>
    %337 = vector.broadcast %336 : f32 to vector<2x64xf32>
    %338 = arith.mulf %200, %337 : vector<2x64xf32>
    %c31 = arith.constant 31 : index
    %339 = memref.load %arg13[%c31] : memref<36xf32, #tpu.memory_space<smem>>
    %340 = vector.broadcast %339 : f32 to vector<2x64xf32>
    %341 = arith.mulf %201, %340 : vector<2x64xf32>
    %342 = arith.addf %338, %341 : vector<2x64xf32>
    %c32 = arith.constant 32 : index
    %343 = memref.load %arg13[%c32] : memref<36xf32, #tpu.memory_space<smem>>
    %344 = vector.broadcast %343 : f32 to vector<2x64xf32>
    %345 = arith.mulf %202, %344 : vector<2x64xf32>
    %346 = arith.addf %342, %345 : vector<2x64xf32>
    %c33 = arith.constant 33 : index
    %347 = memref.load %arg13[%c33] : memref<36xf32, #tpu.memory_space<smem>>
    %348 = vector.broadcast %347 : f32 to vector<2x64xf32>
    %349 = arith.mulf %203, %348 : vector<2x64xf32>
    %350 = arith.addf %346, %349 : vector<2x64xf32>
    %c34 = arith.constant 34 : index
    %351 = memref.load %arg13[%c34] : memref<36xf32, #tpu.memory_space<smem>>
    %352 = vector.broadcast %351 : f32 to vector<2x64xf32>
    %353 = arith.mulf %204, %352 : vector<2x64xf32>
    %354 = arith.addf %350, %353 : vector<2x64xf32>
    %c35 = arith.constant 35 : index
    %355 = memref.load %arg13[%c35] : memref<36xf32, #tpu.memory_space<smem>>
    %356 = vector.broadcast %355 : f32 to vector<2x64xf32>
    %357 = arith.mulf %205, %356 : vector<2x64xf32>
    %358 = arith.addf %354, %357 : vector<2x64xf32>
    %c5_84 = arith.constant 5 : index
    %359 = memref.load %arg14[%c5_84] : memref<6xf32, #tpu.memory_space<smem>>
    %360 = vector.broadcast %359 : f32 to vector<2x64xf32>
    %361 = arith.addf %358, %360 : vector<2x64xf32>
    %cst_85 = arith.constant 2.000000e+00 : f32
    %362 = arith.mulf %cst_85, %83 : f32
    %363 = arith.addf %80, %362 : f32
    %364 = arith.mulf %93, %96 : vector<2x1xf32>
    %365 = vector.broadcast %363 : f32 to vector<2x1xf32>
    %366 = arith.subf %365, %364 : vector<2x1xf32>
    %cst_86 = arith.constant 9.99999996E-12 : f32
    %367 = vector.broadcast %cst_86 : f32 to vector<2x1xf32>
    %368 = arith.mulf %366, %367 : vector<2x1xf32>
    %369 = vector.broadcast %368 : vector<2x1xf32> to vector<2x64xf32>
    %370 = arith.mulf %369, %231 : vector<2x64xf32>
    %371 = arith.mulf %93, %99 : vector<2x1xf32>
    %372 = vector.broadcast %80 : f32 to vector<2x1xf32>
    %373 = arith.subf %372, %371 : vector<2x1xf32>
    %cst_87 = arith.constant 9.99999996E-12 : f32
    %374 = vector.broadcast %cst_87 : f32 to vector<2x1xf32>
    %375 = arith.mulf %373, %374 : vector<2x1xf32>
    %376 = vector.broadcast %375 : vector<2x1xf32> to vector<2x64xf32>
    %377 = arith.mulf %376, %257 : vector<2x64xf32>
    %378 = arith.addf %370, %377 : vector<2x64xf32>
    %379 = arith.mulf %93, %102 : vector<2x1xf32>
    %380 = vector.broadcast %80 : f32 to vector<2x1xf32>
    %381 = arith.subf %380, %379 : vector<2x1xf32>
    %cst_88 = arith.constant 9.99999996E-12 : f32
    %382 = vector.broadcast %cst_88 : f32 to vector<2x1xf32>
    %383 = arith.mulf %381, %382 : vector<2x1xf32>
    %384 = vector.broadcast %383 : vector<2x1xf32> to vector<2x64xf32>
    %385 = arith.mulf %384, %283 : vector<2x64xf32>
    %386 = arith.addf %378, %385 : vector<2x64xf32>
    %387 = arith.mulf %93, %105 : vector<2x1xf32>
    %cst_89 = arith.constant 0.000000e+00 : f32
    %388 = vector.broadcast %cst_89 : f32 to vector<2x1xf32>
    %389 = arith.subf %388, %387 : vector<2x1xf32>
    %cst_90 = arith.constant 9.99999996E-12 : f32
    %390 = vector.broadcast %cst_90 : f32 to vector<2x1xf32>
    %391 = arith.mulf %389, %390 : vector<2x1xf32>
    %392 = vector.broadcast %391 : vector<2x1xf32> to vector<2x64xf32>
    %393 = arith.mulf %392, %309 : vector<2x64xf32>
    %394 = arith.addf %386, %393 : vector<2x64xf32>
    %395 = arith.mulf %93, %108 : vector<2x1xf32>
    %cst_91 = arith.constant 0.000000e+00 : f32
    %396 = vector.broadcast %cst_91 : f32 to vector<2x1xf32>
    %397 = arith.subf %396, %395 : vector<2x1xf32>
    %cst_92 = arith.constant 9.99999996E-12 : f32
    %398 = vector.broadcast %cst_92 : f32 to vector<2x1xf32>
    %399 = arith.mulf %397, %398 : vector<2x1xf32>
    %400 = vector.broadcast %399 : vector<2x1xf32> to vector<2x64xf32>
    %401 = arith.mulf %400, %335 : vector<2x64xf32>
    %402 = arith.addf %394, %401 : vector<2x64xf32>
    %403 = arith.mulf %93, %111 : vector<2x1xf32>
    %cst_93 = arith.constant 0.000000e+00 : f32
    %404 = vector.broadcast %cst_93 : f32 to vector<2x1xf32>
    %405 = arith.subf %404, %403 : vector<2x1xf32>
    %cst_94 = arith.constant 9.99999996E-12 : f32
    %406 = vector.broadcast %cst_94 : f32 to vector<2x1xf32>
    %407 = arith.mulf %405, %406 : vector<2x1xf32>
    %408 = vector.broadcast %407 : vector<2x1xf32> to vector<2x64xf32>
    %409 = arith.mulf %408, %361 : vector<2x64xf32>
    %410 = arith.addf %402, %409 : vector<2x64xf32>
    %c0_95 = arith.constant 0 : index
    %c0_96 = arith.constant 0 : index
    %411 = vector.load %arg16[%c0_95, %c0_96] : memref<2x384xf32, #tpu.memory_space<vmem>>, vector<2x64xf32>
    tpu.vector_store %arg16[%c0_95, %c0_96], %410 {strides = array<i32>} : memref<2x384xf32, #tpu.memory_space<vmem>>, vector<2x64xf32>,
    %412 = arith.mulf %93, %99 : vector<2x1xf32>
    %cst_97 = arith.constant 0.000000e+00 : f32
    %413 = vector.broadcast %cst_97 : f32 to vector<2x1xf32>
    %414 = arith.subf %413, %412 : vector<2x1xf32>
    %cst_98 = arith.constant 9.99999996E-12 : f32
    %415 = vector.broadcast %cst_98 : f32 to vector<2x1xf32>
    %416 = arith.mulf %414, %415 : vector<2x1xf32>
    %417 = vector.broadcast %416 : vector<2x1xf32> to vector<2x64xf32>
    %418 = arith.mulf %417, %231 : vector<2x64xf32>
    %cst_99 = arith.constant 2.000000e+00 : f32
    %419 = arith.mulf %cst_99, %83 : f32
    %420 = arith.addf %80, %419 : f32
    %421 = arith.mulf %93, %114 : vector<2x1xf32>
    %422 = vector.broadcast %420 : f32 to vector<2x1xf32>
    %423 = arith.subf %422, %421 : vector<2x1xf32>
    %cst_100 = arith.constant 9.99999996E-12 : f32
    %424 = vector.broadcast %cst_100 : f32 to vector<2x1xf32>
    %425 = arith.mulf %423, %424 : vector<2x1xf32>
    %426 = vector.broadcast %425 : vector<2x1xf32> to vector<2x64xf32>
    %427 = arith.mulf %426, %257 : vector<2x64xf32>
    %428 = arith.addf %418, %427 : vector<2x64xf32>
    %429 = arith.mulf %93, %117 : vector<2x1xf32>
    %430 = vector.broadcast %80 : f32 to vector<2x1xf32>
    %431 = arith.subf %430, %429 : vector<2x1xf32>
    %cst_101 = arith.constant 9.99999996E-12 : f32
    %432 = vector.broadcast %cst_101 : f32 to vector<2x1xf32>
    %433 = arith.mulf %431, %432 : vector<2x1xf32>
    %434 = vector.broadcast %433 : vector<2x1xf32> to vector<2x64xf32>
    %435 = arith.mulf %434, %283 : vector<2x64xf32>
    %436 = arith.addf %428, %435 : vector<2x64xf32>
    %437 = arith.mulf %93, %120 : vector<2x1xf32>
    %cst_102 = arith.constant 0.000000e+00 : f32
    %438 = vector.broadcast %cst_102 : f32 to vector<2x1xf32>
    %439 = arith.subf %438, %437 : vector<2x1xf32>
    %cst_103 = arith.constant 9.99999996E-12 : f32
    %440 = vector.broadcast %cst_103 : f32 to vector<2x1xf32>
    %441 = arith.mulf %439, %440 : vector<2x1xf32>
    %442 = vector.broadcast %441 : vector<2x1xf32> to vector<2x64xf32>
    %443 = arith.mulf %442, %309 : vector<2x64xf32>
    %444 = arith.addf %436, %443 : vector<2x64xf32>
    %445 = arith.mulf %93, %123 : vector<2x1xf32>
    %cst_104 = arith.constant 0.000000e+00 : f32
    %446 = vector.broadcast %cst_104 : f32 to vector<2x1xf32>
    %447 = arith.subf %446, %445 : vector<2x1xf32>
    %cst_105 = arith.constant 9.99999996E-12 : f32
    %448 = vector.broadcast %cst_105 : f32 to vector<2x1xf32>
    %449 = arith.mulf %447, %448 : vector<2x1xf32>
    %450 = vector.broadcast %449 : vector<2x1xf32> to vector<2x64xf32>
    %451 = arith.mulf %450, %335 : vector<2x64xf32>
    %452 = arith.addf %444, %451 : vector<2x64xf32>
    %453 = arith.mulf %93, %126 : vector<2x1xf32>
    %cst_106 = arith.constant 0.000000e+00 : f32
    %454 = vector.broadcast %cst_106 : f32 to vector<2x1xf32>
    %455 = arith.subf %454, %453 : vector<2x1xf32>
    %cst_107 = arith.constant 9.99999996E-12 : f32
    %456 = vector.broadcast %cst_107 : f32 to vector<2x1xf32>
    %457 = arith.mulf %455, %456 : vector<2x1xf32>
    %458 = vector.broadcast %457 : vector<2x1xf32> to vector<2x64xf32>
    %459 = arith.mulf %458, %361 : vector<2x64xf32>
    %460 = arith.addf %452, %459 : vector<2x64xf32>
    %c0_108 = arith.constant 0 : index
    %c64 = arith.constant 64 : index
    %461 = vector.load %arg16[%c0_108, %c64] : memref<2x384xf32, #tpu.memory_space<vmem>>, vector<2x64xf32>
    tpu.vector_store %arg16[%c0_108, %c64], %460 {strides = array<i32>} : memref<2x384xf32, #tpu.memory_space<vmem>>, vector<2x64xf32>,
    %462 = arith.mulf %93, %102 : vector<2x1xf32>
    %cst_109 = arith.constant 0.000000e+00 : f32
    %463 = vector.broadcast %cst_109 : f32 to vector<2x1xf32>
    %464 = arith.subf %463, %462 : vector<2x1xf32>
    %cst_110 = arith.constant 9.99999996E-12 : f32
    %465 = vector.broadcast %cst_110 : f32 to vector<2x1xf32>
    %466 = arith.mulf %464, %465 : vector<2x1xf32>
    %467 = vector.broadcast %466 : vector<2x1xf32> to vector<2x64xf32>
    %468 = arith.mulf %467, %231 : vector<2x64xf32>
    %469 = arith.mulf %93, %117 : vector<2x1xf32>
    %cst_111 = arith.constant 0.000000e+00 : f32
    %470 = vector.broadcast %cst_111 : f32 to vector<2x1xf32>
    %471 = arith.subf %470, %469 : vector<2x1xf32>
    %cst_112 = arith.constant 9.99999996E-12 : f32
    %472 = vector.broadcast %cst_112 : f32 to vector<2x1xf32>
    %473 = arith.mulf %471, %472 : vector<2x1xf32>
    %474 = vector.broadcast %473 : vector<2x1xf32> to vector<2x64xf32>
    %475 = arith.mulf %474, %257 : vector<2x64xf32>
    %476 = arith.addf %468, %475 : vector<2x64xf32>
    %cst_113 = arith.constant 2.000000e+00 : f32
    %477 = arith.mulf %cst_113, %83 : f32
    %478 = arith.addf %80, %477 : f32
    %479 = arith.mulf %93, %129 : vector<2x1xf32>
    %480 = vector.broadcast %478 : f32 to vector<2x1xf32>
    %481 = arith.subf %480, %479 : vector<2x1xf32>
    %cst_114 = arith.constant 9.99999996E-12 : f32
    %482 = vector.broadcast %cst_114 : f32 to vector<2x1xf32>
    %483 = arith.mulf %481, %482 : vector<2x1xf32>
    %484 = vector.broadcast %483 : vector<2x1xf32> to vector<2x64xf32>
    %485 = arith.mulf %484, %283 : vector<2x64xf32>
    %486 = arith.addf %476, %485 : vector<2x64xf32>
    %487 = arith.mulf %93, %132 : vector<2x1xf32>
    %cst_115 = arith.constant 0.000000e+00 : f32
    %488 = vector.broadcast %cst_115 : f32 to vector<2x1xf32>
    %489 = arith.subf %488, %487 : vector<2x1xf32>
    %cst_116 = arith.constant 9.99999996E-12 : f32
    %490 = vector.broadcast %cst_116 : f32 to vector<2x1xf32>
    %491 = arith.mulf %489, %490 : vector<2x1xf32>
    %492 = vector.broadcast %491 : vector<2x1xf32> to vector<2x64xf32>
    %493 = arith.mulf %492, %309 : vector<2x64xf32>
    %494 = arith.addf %486, %493 : vector<2x64xf32>
    %495 = arith.mulf %93, %135 : vector<2x1xf32>
    %cst_117 = arith.constant 0.000000e+00 : f32
    %496 = vector.broadcast %cst_117 : f32 to vector<2x1xf32>
    %497 = arith.subf %496, %495 : vector<2x1xf32>
    %cst_118 = arith.constant 9.99999996E-12 : f32
    %498 = vector.broadcast %cst_118 : f32 to vector<2x1xf32>
    %499 = arith.mulf %497, %498 : vector<2x1xf32>
    %500 = vector.broadcast %499 : vector<2x1xf32> to vector<2x64xf32>
    %501 = arith.mulf %500, %335 : vector<2x64xf32>
    %502 = arith.addf %494, %501 : vector<2x64xf32>
    %503 = arith.mulf %93, %138 : vector<2x1xf32>
    %cst_119 = arith.constant 0.000000e+00 : f32
    %504 = vector.broadcast %cst_119 : f32 to vector<2x1xf32>
    %505 = arith.subf %504, %503 : vector<2x1xf32>
    %cst_120 = arith.constant 9.99999996E-12 : f32
    %506 = vector.broadcast %cst_120 : f32 to vector<2x1xf32>
    %507 = arith.mulf %505, %506 : vector<2x1xf32>
    %508 = vector.broadcast %507 : vector<2x1xf32> to vector<2x64xf32>
    %509 = arith.mulf %508, %361 : vector<2x64xf32>
    %510 = arith.addf %502, %509 : vector<2x64xf32>
    %c0_121 = arith.constant 0 : index
    %c128 = arith.constant 128 : index
    %511 = vector.load %arg16[%c0_121, %c128] : memref<2x384xf32, #tpu.memory_space<vmem>>, vector<2x64xf32>
    tpu.vector_store %arg16[%c0_121, %c128], %510 {strides = array<i32>} : memref<2x384xf32, #tpu.memory_space<vmem>>, vector<2x64xf32>,
    %512 = arith.mulf %93, %105 : vector<2x1xf32>
    %cst_122 = arith.constant 0.000000e+00 : f32
    %513 = vector.broadcast %cst_122 : f32 to vector<2x1xf32>
    %514 = arith.subf %513, %512 : vector<2x1xf32>
    %cst_123 = arith.constant 9.99999996E-12 : f32
    %515 = vector.broadcast %cst_123 : f32 to vector<2x1xf32>
    %516 = arith.mulf %514, %515 : vector<2x1xf32>
    %517 = vector.broadcast %516 : vector<2x1xf32> to vector<2x64xf32>
    %518 = arith.mulf %517, %231 : vector<2x64xf32>
    %519 = arith.mulf %93, %120 : vector<2x1xf32>
    %cst_124 = arith.constant 0.000000e+00 : f32
    %520 = vector.broadcast %cst_124 : f32 to vector<2x1xf32>
    %521 = arith.subf %520, %519 : vector<2x1xf32>
    %cst_125 = arith.constant 9.99999996E-12 : f32
    %522 = vector.broadcast %cst_125 : f32 to vector<2x1xf32>
    %523 = arith.mulf %521, %522 : vector<2x1xf32>
    %524 = vector.broadcast %523 : vector<2x1xf32> to vector<2x64xf32>
    %525 = arith.mulf %524, %257 : vector<2x64xf32>
    %526 = arith.addf %518, %525 : vector<2x64xf32>
    %527 = arith.mulf %93, %132 : vector<2x1xf32>
    %cst_126 = arith.constant 0.000000e+00 : f32
    %528 = vector.broadcast %cst_126 : f32 to vector<2x1xf32>
    %529 = arith.subf %528, %527 : vector<2x1xf32>
    %cst_127 = arith.constant 9.99999996E-12 : f32
    %530 = vector.broadcast %cst_127 : f32 to vector<2x1xf32>
    %531 = arith.mulf %529, %530 : vector<2x1xf32>
    %532 = vector.broadcast %531 : vector<2x1xf32> to vector<2x64xf32>
    %533 = arith.mulf %532, %283 : vector<2x64xf32>
    %534 = arith.addf %526, %533 : vector<2x64xf32>
    %535 = arith.mulf %93, %141 : vector<2x1xf32>
    %536 = vector.broadcast %83 : f32 to vector<2x1xf32>
    %537 = arith.subf %536, %535 : vector<2x1xf32>
    %cst_128 = arith.constant 9.99999996E-12 : f32
    %538 = vector.broadcast %cst_128 : f32 to vector<2x1xf32>
    %539 = arith.mulf %537, %538 : vector<2x1xf32>
    %540 = vector.broadcast %539 : vector<2x1xf32> to vector<2x64xf32>
    %541 = arith.mulf %540, %309 : vector<2x64xf32>
    %542 = arith.addf %534, %541 : vector<2x64xf32>
    %543 = arith.mulf %93, %144 : vector<2x1xf32>
    %cst_129 = arith.constant 0.000000e+00 : f32
    %544 = vector.broadcast %cst_129 : f32 to vector<2x1xf32>
    %545 = arith.subf %544, %543 : vector<2x1xf32>
    %cst_130 = arith.constant 9.99999996E-12 : f32
    %546 = vector.broadcast %cst_130 : f32 to vector<2x1xf32>
    %547 = arith.mulf %545, %546 : vector<2x1xf32>
    %548 = vector.broadcast %547 : vector<2x1xf32> to vector<2x64xf32>
    %549 = arith.mulf %548, %335 : vector<2x64xf32>
    %550 = arith.addf %542, %549 : vector<2x64xf32>
    %551 = arith.mulf %93, %147 : vector<2x1xf32>
    %cst_131 = arith.constant 0.000000e+00 : f32
    %552 = vector.broadcast %cst_131 : f32 to vector<2x1xf32>
    %553 = arith.subf %552, %551 : vector<2x1xf32>
    %cst_132 = arith.constant 9.99999996E-12 : f32
    %554 = vector.broadcast %cst_132 : f32 to vector<2x1xf32>
    %555 = arith.mulf %553, %554 : vector<2x1xf32>
    %556 = vector.broadcast %555 : vector<2x1xf32> to vector<2x64xf32>
    %557 = arith.mulf %556, %361 : vector<2x64xf32>
    %558 = arith.addf %550, %557 : vector<2x64xf32>
    %c0_133 = arith.constant 0 : index
    %c192 = arith.constant 192 : index
    %559 = vector.load %arg16[%c0_133, %c192] : memref<2x384xf32, #tpu.memory_space<vmem>>, vector<2x64xf32>
    tpu.vector_store %arg16[%c0_133, %c192], %558 {strides = array<i32>} : memref<2x384xf32, #tpu.memory_space<vmem>>, vector<2x64xf32>,
    %560 = arith.mulf %93, %108 : vector<2x1xf32>
    %cst_134 = arith.constant 0.000000e+00 : f32
    %561 = vector.broadcast %cst_134 : f32 to vector<2x1xf32>
    %562 = arith.subf %561, %560 : vector<2x1xf32>
    %cst_135 = arith.constant 9.99999996E-12 : f32
    %563 = vector.broadcast %cst_135 : f32 to vector<2x1xf32>
    %564 = arith.mulf %562, %563 : vector<2x1xf32>
    %565 = vector.broadcast %564 : vector<2x1xf32> to vector<2x64xf32>
    %566 = arith.mulf %565, %231 : vector<2x64xf32>
    %567 = arith.mulf %93, %123 : vector<2x1xf32>
    %cst_136 = arith.constant 0.000000e+00 : f32
    %568 = vector.broadcast %cst_136 : f32 to vector<2x1xf32>
    %569 = arith.subf %568, %567 : vector<2x1xf32>
    %cst_137 = arith.constant 9.99999996E-12 : f32
    %570 = vector.broadcast %cst_137 : f32 to vector<2x1xf32>
    %571 = arith.mulf %569, %570 : vector<2x1xf32>
    %572 = vector.broadcast %571 : vector<2x1xf32> to vector<2x64xf32>
    %573 = arith.mulf %572, %257 : vector<2x64xf32>
    %574 = arith.addf %566, %573 : vector<2x64xf32>
    %575 = arith.mulf %93, %135 : vector<2x1xf32>
    %cst_138 = arith.constant 0.000000e+00 : f32
    %576 = vector.broadcast %cst_138 : f32 to vector<2x1xf32>
    %577 = arith.subf %576, %575 : vector<2x1xf32>
    %cst_139 = arith.constant 9.99999996E-12 : f32
    %578 = vector.broadcast %cst_139 : f32 to vector<2x1xf32>
    %579 = arith.mulf %577, %578 : vector<2x1xf32>
    %580 = vector.broadcast %579 : vector<2x1xf32> to vector<2x64xf32>
    %581 = arith.mulf %580, %283 : vector<2x64xf32>
    %582 = arith.addf %574, %581 : vector<2x64xf32>
    %583 = arith.mulf %93, %144 : vector<2x1xf32>
    %cst_140 = arith.constant 0.000000e+00 : f32
    %584 = vector.broadcast %cst_140 : f32 to vector<2x1xf32>
    %585 = arith.subf %584, %583 : vector<2x1xf32>
    %cst_141 = arith.constant 9.99999996E-12 : f32
    %586 = vector.broadcast %cst_141 : f32 to vector<2x1xf32>
    %587 = arith.mulf %585, %586 : vector<2x1xf32>
    %588 = vector.broadcast %587 : vector<2x1xf32> to vector<2x64xf32>
    %589 = arith.mulf %588, %309 : vector<2x64xf32>
    %590 = arith.addf %582, %589 : vector<2x64xf32>
    %591 = arith.mulf %93, %150 : vector<2x1xf32>
    %592 = vector.broadcast %83 : f32 to vector<2x1xf32>
    %593 = arith.subf %592, %591 : vector<2x1xf32>
    %cst_142 = arith.constant 9.99999996E-12 : f32
    %594 = vector.broadcast %cst_142 : f32 to vector<2x1xf32>
    %595 = arith.mulf %593, %594 : vector<2x1xf32>
    %596 = vector.broadcast %595 : vector<2x1xf32> to vector<2x64xf32>
    %597 = arith.mulf %596, %335 : vector<2x64xf32>
    %598 = arith.addf %590, %597 : vector<2x64xf32>
    %599 = arith.mulf %93, %153 : vector<2x1xf32>
    %cst_143 = arith.constant 0.000000e+00 : f32
    %600 = vector.broadcast %cst_143 : f32 to vector<2x1xf32>
    %601 = arith.subf %600, %599 : vector<2x1xf32>
    %cst_144 = arith.constant 9.99999996E-12 : f32
    %602 = vector.broadcast %cst_144 : f32 to vector<2x1xf32>
    %603 = arith.mulf %601, %602 : vector<2x1xf32>
    %604 = vector.broadcast %603 : vector<2x1xf32> to vector<2x64xf32>
    %605 = arith.mulf %604, %361 : vector<2x64xf32>
    %606 = arith.addf %598, %605 : vector<2x64xf32>
    %c0_145 = arith.constant 0 : index
    %c256 = arith.constant 256 : index
    %607 = vector.load %arg16[%c0_145, %c256] : memref<2x384xf32, #tpu.memory_space<vmem>>, vector<2x64xf32>
    tpu.vector_store %arg16[%c0_145, %c256], %606 {strides = array<i32>} : memref<2x384xf32, #tpu.memory_space<vmem>>, vector<2x64xf32>,
    %608 = arith.mulf %93, %111 : vector<2x1xf32>
    %cst_146 = arith.constant 0.000000e+00 : f32
    %609 = vector.broadcast %cst_146 : f32 to vector<2x1xf32>
    %610 = arith.subf %609, %608 : vector<2x1xf32>
    %cst_147 = arith.constant 9.99999996E-12 : f32
    %611 = vector.broadcast %cst_147 : f32 to vector<2x1xf32>
    %612 = arith.mulf %610, %611 : vector<2x1xf32>
    %613 = vector.broadcast %612 : vector<2x1xf32> to vector<2x64xf32>
    %614 = arith.mulf %613, %231 : vector<2x64xf32>
    %615 = arith.mulf %93, %126 : vector<2x1xf32>
    %cst_148 = arith.constant 0.000000e+00 : f32
    %616 = vector.broadcast %cst_148 : f32 to vector<2x1xf32>
    %617 = arith.subf %616, %615 : vector<2x1xf32>
    %cst_149 = arith.constant 9.99999996E-12 : f32
    %618 = vector.broadcast %cst_149 : f32 to vector<2x1xf32>
    %619 = arith.mulf %617, %618 : vector<2x1xf32>
    %620 = vector.broadcast %619 : vector<2x1xf32> to vector<2x64xf32>
    %621 = arith.mulf %620, %257 : vector<2x64xf32>
    %622 = arith.addf %614, %621 : vector<2x64xf32>
    %623 = arith.mulf %93, %138 : vector<2x1xf32>
    %cst_150 = arith.constant 0.000000e+00 : f32
    %624 = vector.broadcast %cst_150 : f32 to vector<2x1xf32>
    %625 = arith.subf %624, %623 : vector<2x1xf32>
    %cst_151 = arith.constant 9.99999996E-12 : f32
    %626 = vector.broadcast %cst_151 : f32 to vector<2x1xf32>
    %627 = arith.mulf %625, %626 : vector<2x1xf32>
    %628 = vector.broadcast %627 : vector<2x1xf32> to vector<2x64xf32>
    %629 = arith.mulf %628, %283 : vector<2x64xf32>
    %630 = arith.addf %622, %629 : vector<2x64xf32>
    %631 = arith.mulf %93, %147 : vector<2x1xf32>
    %cst_152 = arith.constant 0.000000e+00 : f32
    %632 = vector.broadcast %cst_152 : f32 to vector<2x1xf32>
    %633 = arith.subf %632, %631 : vector<2x1xf32>
    %cst_153 = arith.constant 9.99999996E-12 : f32
    %634 = vector.broadcast %cst_153 : f32 to vector<2x1xf32>
    %635 = arith.mulf %633, %634 : vector<2x1xf32>
    %636 = vector.broadcast %635 : vector<2x1xf32> to vector<2x64xf32>
    %637 = arith.mulf %636, %309 : vector<2x64xf32>
    %638 = arith.addf %630, %637 : vector<2x64xf32>
    %639 = arith.mulf %93, %153 : vector<2x1xf32>
    %cst_154 = arith.constant 0.000000e+00 : f32
    %640 = vector.broadcast %cst_154 : f32 to vector<2x1xf32>
    %641 = arith.subf %640, %639 : vector<2x1xf32>
    %cst_155 = arith.constant 9.99999996E-12 : f32
    %642 = vector.broadcast %cst_155 : f32 to vector<2x1xf32>
    %643 = arith.mulf %641, %642 : vector<2x1xf32>
    %644 = vector.broadcast %643 : vector<2x1xf32> to vector<2x64xf32>
    %645 = arith.mulf %644, %335 : vector<2x64xf32>
    %646 = arith.addf %638, %645 : vector<2x64xf32>
    %647 = arith.mulf %93, %156 : vector<2x1xf32>
    %648 = vector.broadcast %83 : f32 to vector<2x1xf32>
    %649 = arith.subf %648, %647 : vector<2x1xf32>
    %cst_156 = arith.constant 9.99999996E-12 : f32
    %650 = vector.broadcast %cst_156 : f32 to vector<2x1xf32>
    %651 = arith.mulf %649, %650 : vector<2x1xf32>
    %652 = vector.broadcast %651 : vector<2x1xf32> to vector<2x64xf32>
    %653 = arith.mulf %652, %361 : vector<2x64xf32>
    %654 = arith.addf %646, %653 : vector<2x64xf32>
    %c0_157 = arith.constant 0 : index
    %c320 = arith.constant 320 : index
    %655 = vector.load %arg16[%c0_157, %c320] : memref<2x384xf32, #tpu.memory_space<vmem>>, vector<2x64xf32>
    tpu.vector_store %arg16[%c0_157, %c320], %654 {strides = array<i32>} : memref<2x384xf32, #tpu.memory_space<vmem>>, vector<2x64xf32>,
    return
  }
}

</mosaic_0001>

<llo_original>
// kernel: _forward_jit.1
$region0: #{_forward_jit.1}
  #allocation0 [shape = 'u32[]', space=smem, size = 0x4, offset = 0x4, fixed_abs, tag = 'smem constant byte address 0x4 - core index']
  #allocation1 [shape = 'u32[72,128]{1,0:T(1,128)}', space=vmem, size = 0x9000, scoped, tag = 'internal scratch']
  #allocation2 [shape = 'f32[256,512]{1,0:T(8,128)}', space=vmem, size = 0x80000, scoped, tag = 'scratch operand']
  #allocation3 [shape = 'bf16[512,384]{1,0:T(8,128)(2,1)}', space=vmem, size = 0x60000, scoped, tag = 'scratch operand']
  #allocation4 [shape = 's32[2]{0}', space=sflag, size = 0x8, scoped, tag = 'scratch operand']
  #allocation12 [shape = 's32[]', space=sflag, size = 0x4, offset = 0, fixed_abs, tag = 'sflag constant byte address 0x0 - dummy sync flag']
  #allocation13 [shape = 's32[]', space=sflag, size = 0x4, offset = 0, fixed_abs, tag = 'sflag constant byte address 0x0 - dummy sync flag']
  #allocation14 [shape = 'u32[]', space=smem, size = 0x4, offset = 0x44, fixed_abs, tag = 'smem constant byte address 0x44 - assertion arg 0']
  #allocation15 [shape = 'u32[]', space=smem, size = 0x4, offset = 0x48, fixed_abs, tag = 'smem constant byte address 0x48 - assertion arg 1']
  #allocation16 [shape = 's32[]', space=sflag, size = 0x4, offset = 0, fixed_abs, tag = 'sflag constant byte address 0x0 - dummy sync flag']
  #allocation17 [shape = 's32[]', space=sflag, size = 0x4, offset = 0, fixed_abs, tag = 'sflag constant byte address 0x0 - dummy sync flag']
  %s0 = inlined_call_operand.vmem [shape: f32[2,768], index: 0, kind: input, shape index: {}]
  %s1 = inlined_call_operand.vmem [shape: f32[2,768], index: 1, kind: input, shape index: {}]
  %s2 = inlined_call_operand.vmem [shape: f32[2,384], index: 2, kind: input, shape index: {}]
  %s3 = inlined_call_operand.hbm [shape: f32[768,256], index: 3, kind: input, shape index: {}]
  %s4 = inlined_call_operand.vmem [shape: f32[1,256], index: 4, kind: input, shape index: {}]
  %s5 = inlined_call_operand.vmem [shape: f32[1,256], index: 5, kind: input, shape index: {}]
  %s6 = inlined_call_operand.vmem [shape: f32[1,256], index: 6, kind: input, shape index: {}]
  %s7 = inlined_call_operand.hbm [shape: f32[256,512], index: 7, kind: input, shape index: {}]
  %s8 = inlined_call_operand.vmem [shape: f32[1,512], index: 8, kind: input, shape index: {}]
  %s9 = inlined_call_operand.vmem [shape: f32[1,512], index: 9, kind: input, shape index: {}]
  %s10 = inlined_call_operand.vmem [shape: f32[1,512], index: 10, kind: input, shape index: {}]
  %s11 = inlined_call_operand.hbm [shape: bf16[512,384], index: 11, kind: input, shape index: {}]
  %s12 = inlined_call_operand.vmem [shape: f32[1,384], index: 12, kind: input, shape index: {}]
  %s13 = inlined_call_operand.vmem [shape: f32[36], index: 13, kind: input, shape index: {}]
  %s14 = inlined_call_operand.vmem [shape: f32[6], index: 14, kind: input, shape index: {}]
  %s15 = inlined_call_operand.vmem [shape: f32[3], index: 15, kind: input, shape index: {}]
  %s16 = inlined_call_operand.vmem [shape: f32[2,384], index: 16, kind: output, shape index: {}]
  %s17 = sld [smem:[#allocation0]]
  $region90: #{_forward_jit.1} parent=0
    _
  %s19 = ssub.s32 1, %s17
  %s20 = scalar_select 0, %s19, %s17
  $region1: #{_forward_jit.1} parent=0
    #allocation5 [shape = 'u8[786432]{0}', space=vmem, size = 0xc0000, scoped, tag = 'input window, operand 3, single buffered']
    #allocation6 [shape = 's32[1]{0}', space=sflag, size = 0x4, scoped, tag = 'scoped memory for _forward_jit.1']
    #allocation7 [shape = 's32[1]{0}', space=sflag, size = 0x4, scoped, tag = 'scoped memory for _forward_jit.1']
    #allocation8 [shape = 'u8[512]{0}', space=smem, size = 0x200, scoped, tag = 'input window, operand 13, single buffered']
    #allocation9 [shape = 'u8[512]{0}', space=smem, size = 0x200, scoped, tag = 'input window, operand 14, single buffered']
    #allocation10 [shape = 's32[1]{0}', space=sflag, size = 0x4, scoped, tag = 'scoped memory for _forward_jit.1']
    #allocation11 [shape = 'u8[512]{0}', space=smem, size = 0x200, scoped, tag = 'input window, operand 15, single buffered']
    %21 = vsyncpa [#allocation6], 0
    %22 = vsyncpa [#allocation7], 0
    %23 = vsyncpa [#allocation10], 0
    // Predicated region
    $region2: #{_forward_jit.1} parent=1 // pred_check
      _
    $region3: #{_forward_jit.1} parent=1 // pred_check_branch
      %25 = sbr.rel (0) target = $region5
    $region4: #{_forward_jit.1} parent=1 // pred_region
      _
    $region5: #{_forward_jit.1} parent=1 // pred_fallthru
      _
    // Predicated region
    $region6: #{_forward_jit.1} parent=1 // pred_check
      _
    $region7: #{_forward_jit.1} parent=1 // pred_check_branch
      %27 = sbr.rel (0) target = $region9
    $region8: #{_forward_jit.1} parent=1 // pred_region
      _
    $region9: #{_forward_jit.1} parent=1 // pred_fallthru
      _
    // Predicated region
    $region10: #{_forward_jit.1} parent=1 // pred_check
      _
    $region11: #{_forward_jit.1} parent=1 // pred_check_branch
      %29 = sbr.rel (0) target = $region13
    $region12: #{_forward_jit.1} parent=1 // pred_region
      _
    $region13: #{_forward_jit.1} parent=1 // pred_fallthru
      _
    // Predicated region
    $region14: #{_forward_jit.1} parent=1 // pred_check
      _
    $region15: #{_forward_jit.1} parent=1 // pred_check_branch
      %31 = sbr.rel (0) target = $region17
    $region16: #{_forward_jit.1} parent=1 // pred_region
      %33 = vsyncadd [#allocation6], 0
      %s34 = sshll.u32 %s3, 4
      %s35 = int_to_ptr.hbm [resolvable:$true] %s34
      %s36 = sshll.u32 [#allocation5], 4
      %s37 = int_to_ptr.vmem [resolvable:$true] %s36
      %42 = dma.hbm_to_vmem [thread:$0]  %s35, 24576, %s37, [#allocation6], 256, 256, 16
    $region17: #{_forward_jit.1} parent=1 // pred_fallthru
      _
    // Predicated region
    $region18: #{_forward_jit.1} parent=1 // pred_check
      _
    $region19: #{_forward_jit.1} parent=1 // pred_check_branch
      %44 = sbr.rel (0) target = $region21
    $region20: #{_forward_jit.1} parent=1 // pred_region
      _
    $region21: #{_forward_jit.1} parent=1 // pred_fallthru
      _
    // Predicated region
    $region22: #{_forward_jit.1} parent=1 // pred_check
      _
    $region23: #{_forward_jit.1} parent=1 // pred_check_branch
      %46 = sbr.rel (0) target = $region25
    $region24: #{_forward_jit.1} parent=1 // pred_region
      _
    $region25: #{_forward_jit.1} parent=1 // pred_fallthru
      _
    // Predicated region
    $region26: #{_forward_jit.1} parent=1 // pred_check
      _
    $region27: #{_forward_jit.1} parent=1 // pred_check_branch
      %48 = sbr.rel (0) target = $region29
    $region28: #{_forward_jit.1} parent=1 // pred_region
      _
    $region29: #{_forward_jit.1} parent=1 // pred_fallthru
      _
    // Predicated region
    $region30: #{_forward_jit.1} parent=1 // pred_check
      _
    $region31: #{_forward_jit.1} parent=1 // pred_check_branch
      %50 = sbr.rel (0) target = $region33
    $region32: #{_forward_jit.1} parent=1 // pred_region
      _
    $region33: #{_forward_jit.1} parent=1 // pred_fallthru
      _
    // Predicated region
    $region34: #{_forward_jit.1} parent=1 // pred_check
      _
    $region35: #{_forward_jit.1} parent=1 // pred_check_branch
      %52 = sbr.rel (0) target = $region37
    $region36: #{_forward_jit.1} parent=1 // pred_region
      _
    $region37: #{_forward_jit.1} parent=1 // pred_fallthru
      _
    // Predicated region
    $region38: #{_forward_jit.1} parent=1 // pred_check
      _
    $region39: #{_forward_jit.1} parent=1 // pred_check_branch
      %54 = sbr.rel (0) target = $region41
    $region40: #{_forward_jit.1} parent=1 // pred_region
      _
    $region41: #{_forward_jit.1} parent=1 // pred_fallthru
      _
    // Predicated region
    $region42: #{_forward_jit.1} parent=1 // pred_check
      _
    $region43: #{_forward_jit.1} parent=1 // pred_check_branch
      %56 = sbr.rel (0) target = $region45
    $region44: #{_forward_jit.1} parent=1 // pred_region
      _
    $region45: #{_forward_jit.1} parent=1 // pred_fallthru
      _
    // Predicated region
    $region46: #{_forward_jit.1} parent=1 // pred_check
      _
    $region47: #{_forward_jit.1} parent=1 // pred_check_branch
      %58 = sbr.rel (0) target = $region49
    $region48: #{_forward_jit.1} parent=1 // pred_region
      %60 = vsyncadd [#allocation7], 0
      %s62 = sshll.u32 %s13, 4
      %s63 = int_to_ptr.vmem [resolvable:$true] %s62
      %65 = dma.vmem_to_smem %s63, 16, [#allocation8], [#allocation7]
    $region49: #{_forward_jit.1} parent=1 // pred_fallthru
      _
    // Predicated region
    $region50: #{_forward_jit.1} parent=1 // pred_check
      _
    $region51: #{_forward_jit.1} parent=1 // pred_check_branch
      %67 = sbr.rel (0) target = $region53
    $region52: #{_forward_jit.1} parent=1 // pred_region
      %69 = vsyncadd [#allocation10], 0
      %s71 = sshll.u32 %s14, 4
      %s72 = int_to_ptr.vmem [resolvable:$true] %s71
      %74 = dma.vmem_to_smem %s72, 16, [#allocation9], [#allocation10]
    $region53: #{_forward_jit.1} parent=1 // pred_fallthru
      _
    // Predicated region
    $region54: #{_forward_jit.1} parent=1 // pred_check
      _
    $region55: #{_forward_jit.1} parent=1 // pred_check_branch
      %76 = sbr.rel (0) target = $region57
    $region56: #{_forward_jit.1} parent=1 // pred_region
      %78 = vsyncadd [#allocation10], 0
      %s80 = sshll.u32 %s15, 4
      %s81 = int_to_ptr.vmem [resolvable:$true] %s80
      %83 = dma.vmem_to_smem %s81, 16, [#allocation11], [#allocation10]
    $region57: #{_forward_jit.1} parent=1 // pred_fallthru
      _
    // Predicated region
    $region58: #{_forward_jit.1} parent=1 // pred_check
      _
    $region59: #{_forward_jit.1} parent=1 // pred_check_branch
      %85 = sbr.rel (0) target = $region61
    $region60: #{_forward_jit.1} parent=1 // pred_region
      %87 = dma.done [#allocation6], 24576
    $region61: #{_forward_jit.1} parent=1 // pred_fallthru
      _
    // Predicated region
    $region62: #{_forward_jit.1} parent=1 // pred_check
      _
    $region63: #{_forward_jit.1} parent=1 // pred_check_branch
      %89 = sbr.rel (0) target = $region65
    $region64: #{_forward_jit.1} parent=1 // pred_region
      %91 = dma.done [#allocation7], 16
    $region65: #{_forward_jit.1} parent=1 // pred_fallthru
      _
    // Predicated region
    $region66: #{_forward_jit.1} parent=1 // pred_check
      _
    $region67: #{_forward_jit.1} parent=1 // pred_check_branch
      %93 = sbr.rel (0) target = $region69
    $region68: #{_forward_jit.1} parent=1 // pred_region
      %95 = dma.done [#allocation10], 16
    $region69: #{_forward_jit.1} parent=1 // pred_fallthru
      _
    // Predicated region
    $region70: #{_forward_jit.1} parent=1 // pred_check
      _
    $region71: #{_forward_jit.1} parent=1 // pred_check_branch
      %97 = sbr.rel (0) target = $region73
    $region72: #{_forward_jit.1} parent=1 // pred_region
      %99 = dma.done [#allocation10], 16
    $region73: #{_forward_jit.1} parent=1 // pred_fallthru
      _
    %100 = sfence
    // Predicated region
    $region74: #{_forward_jit.1} parent=1 // pred_check
      _
    $region75: #{_forward_jit.1} parent=1 // pred_check_branch
      %102 = sbr.rel target = $region77
    $region76: #{_forward_jit.1} parent=1 // pred_region
      %103 = sst [smem:[#allocation14]] [#allocation13]
      %104 = sst [smem:[#allocation15]] [#allocation12]
    $region77: #{_forward_jit.1} parent=1 // pred_fallthru
      _
    %106 = shalt.err (0)
    %s108 = sshll.u32 %s7, 4
    %s109 = int_to_ptr.hbm [resolvable:$true] %s108
    %s110 = sshll.u32 [#allocation2], 4
    %s111 = int_to_ptr.vmem [resolvable:$true] %s110
    %113 = dma.hbm_to_vmem [thread:$0]  %s109, 16384, %s111, [#allocation4]
    %s114 = scalar_lea.sflag [#allocation4], 1
    // Predicated region
    $region78: #{_forward_jit.1} parent=1 // pred_check
      _
    $region79: #{_forward_jit.1} parent=1 // pred_check_branch
      %116 = sbr.rel target = $region81
    $region80: #{_forward_jit.1} parent=1 // pred_region
      %117 = sst [smem:[#allocation14]] [#allocation17]
      %118 = sst [smem:[#allocation15]] [#allocation16]
    $region81: #{_forward_jit.1} parent=1 // pred_fallthru
      _
    %120 = shalt.err (0)
    %s122 = sshll.u32 %s11, 4
    %s123 = int_to_ptr.hbm [resolvable:$true] %s122
    %s124 = sshll.u32 [#allocation3], 4
    %s125 = int_to_ptr.vmem [resolvable:$true] %s124
    %127 = dma.hbm_to_vmem [thread:$0]  %s123, 12288, %s125, %s114
    %s128 = sld [smem:[#allocation11]]
    %s129 = sld [smem:[#allocation11 + $0x1]]
    %s130 = sld [smem:[#allocation11 + $0x2]]
    %v131 = vld [vmem:[%s1] sm:$0xff]
    %v132 = vld [vmem:[%s1 + $0x8] sm:$0xf]
    %v133 = vld [vmem:[%s0] sm:$0xff]
    %v134 = vld [vmem:[%s0 + $0x8] sm:$0xf]
    %v135 = vsub.f32 %v131, %v133
    %v136 = vsub.f32 %v132, %v134
    %v137 = vld [vmem:[#allocation5] sm:$0xff]
    %v138 = vld [vmem:[#allocation5 + $0x8] sm:$0xff]
    %v139 = vld [vmem:[#allocation5 + $0x10] sm:$0xff]
    %v140 = vld [vmem:[#allocation5 + $0x18] sm:$0xff]
    %v141 = vld [vmem:[#allocation5 + $0x20] sm:$0xff]
    %v142 = vld [vmem:[#allocation5 + $0x28] sm:$0xff]
    %v143 = vld [vmem:[#allocation5 + $0x30] sm:$0xff]
    %v144 = vld [vmem:[#allocation5 + $0x38] sm:$0xff]
    %v145 = vld [vmem:[#allocation5 + $0x40] sm:$0xff]
    %v146 = vld [vmem:[#allocation5 + $0x48] sm:$0xff]
    %v147 = vld [vmem:[#allocation5 + $0x50] sm:$0xff]
    %v148 = vld [vmem:[#allocation5 + $0x58] sm:$0xff]
    %v149 = vld [vmem:[#allocation5 + $0x60] sm:$0xff]
    %v150 = vld [vmem:[#allocation5 + $0x68] sm:$0xff]
    %v151 = vld [vmem:[#allocation5 + $0x70] sm:$0xff]
    %v152 = vld [vmem:[#allocation5 + $0x78] sm:$0xff]
    %v153 = vld [vmem:[#allocation5 + $0x80] sm:$0xff]
    %v154 = vld [vmem:[#allocation5 + $0x88] sm:$0xff]
    %v155 = vld [vmem:[#allocation5 + $0x90] sm:$0xff]
    %v156 = vld [vmem:[#allocation5 + $0x98] sm:$0xff]
    %v157 = vld [vmem:[#allocation5 + $0xa0] sm:$0xff]
    %v158 = vld [vmem:[#allocation5 + $0xa8] sm:$0xff]
    %v159 = vld [vmem:[#allocation5 + $0xb0] sm:$0xff]
    %v160 = vld [vmem:[#allocation5 + $0xb8] sm:$0xff]
    %v161 = vld [vmem:[#allocation5 + $0xc0] sm:$0xff]
    %v162 = vld [vmem:[#allocation5 + $0xc8] sm:$0xff]
    %v163 = vld [vmem:[#allocation5 + $0xd0] sm:$0xff]
    %v164 = vld [vmem:[#allocation5 + $0xd8] sm:$0xff]
    %v165 = vld [vmem:[#allocation5 + $0xe0] sm:$0xff]
    %v166 = vld [vmem:[#allocation5 + $0xe8] sm:$0xff]
    %v167 = vld [vmem:[#allocation5 + $0xf0] sm:$0xff]
    %v168 = vld [vmem:[#allocation5 + $0xf8] sm:$0xff]
    %v169 = vld [vmem:[#allocation5 + $0x100] sm:$0xff]
    %v170 = vld [vmem:[#allocation5 + $0x108] sm:$0xff]
    %v171 = vld [vmem:[#allocation5 + $0x110] sm:$0xff]
    %v172 = vld [vmem:[#allocation5 + $0x118] sm:$0xff]
    %v173 = vld [vmem:[#allocation5 + $0x120] sm:$0xff]
    %v174 = vld [vmem:[#allocation5 + $0x128] sm:$0xff]
    %v175 = vld [vmem:[#allocation5 + $0x130] sm:$0xff]
    %v176 = vld [vmem:[#allocation5 + $0x138] sm:$0xff]
    %v177 = vld [vmem:[#allocation5 + $0x140] sm:$0xff]
    %v178 = vld [vmem:[#allocation5 + $0x148] sm:$0xff]
    %v179 = vld [vmem:[#allocation5 + $0x150] sm:$0xff]
    %v180 = vld [vmem:[#allocation5 + $0x158] sm:$0xff]
    %v181 = vld [vmem:[#allocation5 + $0x160] sm:$0xff]
    %v182 = vld [vmem:[#allocation5 + $0x168] sm:$0xff]
    %v183 = vld [vmem:[#allocation5 + $0x170] sm:$0xff]
    %v184 = vld [vmem:[#allocation5 + $0x178] sm:$0xff]
    %v185 = vld [vmem:[#allocation5 + $0x180] sm:$0xff]
    %v186 = vld [vmem:[#allocation5 + $0x188] sm:$0xff]
    %v187 = vld [vmem:[#allocation5 + $0x190] sm:$0xff]
    %v188 = vld [vmem:[#allocation5 + $0x198] sm:$0xff]
    %v189 = vld [vmem:[#allocation5 + $0x1a0] sm:$0xff]
    %v190 = vld [vmem:[#allocation5 + $0x1a8] sm:$0xff]
    %v191 = vld [vmem:[#allocation5 + $0x1b0] sm:$0xff]
    %v192 = vld [vmem:[#allocation5 + $0x1b8] sm:$0xff]
    %v193 = vld [vmem:[#allocation5 + $0x1c0] sm:$0xff]
    %v194 = vld [vmem:[#allocation5 + $0x1c8] sm:$0xff]
    %v195 = vld [vmem:[#allocation5 + $0x1d0] sm:$0xff]
    %v196 = vld [vmem:[#allocation5 + $0x1d8] sm:$0xff]
    %v197 = vld [vmem:[#allocation5 + $0x1e0] sm:$0xff]
    %v198 = vld [vmem:[#allocation5 + $0x1e8] sm:$0xff]
    %v199 = vld [vmem:[#allocation5 + $0x1f0] sm:$0xff]
    %v200 = vld [vmem:[#allocation5 + $0x1f8] sm:$0xff]
    %v201 = vld [vmem:[#allocation5 + $0x200] sm:$0xff]
    %v202 = vld [vmem:[#allocation5 + $0x208] sm:$0xff]
    %v203 = vld [vmem:[#allocation5 + $0x210] sm:$0xff]
    %v204 = vld [vmem:[#allocation5 + $0x218] sm:$0xff]
    %v205 = vld [vmem:[#allocation5 + $0x220] sm:$0xff]
    %v206 = vld [vmem:[#allocation5 + $0x228] sm:$0xff]
    %v207 = vld [vmem:[#allocation5 + $0x230] sm:$0xff]
    %v208 = vld [vmem:[#allocation5 + $0x238] sm:$0xff]
    %v209 = vld [vmem:[#allocation5 + $0x240] sm:$0xff]
    %v210 = vld [vmem:[#allocation5 + $0x248] sm:$0xff]
    %v211 = vld [vmem:[#allocation5 + $0x250] sm:$0xff]
    %v212 = vld [vmem:[#allocation5 + $0x258] sm:$0xff]
    %v213 = vld [vmem:[#allocation5 + $0x260] sm:$0xff]
    %v214 = vld [vmem:[#allocation5 + $0x268] sm:$0xff]
    %v215 = vld [vmem:[#allocation5 + $0x270] sm:$0xff]
    %v216 = vld [vmem:[#allocation5 + $0x278] sm:$0xff]
    %v217 = vld [vmem:[#allocation5 + $0x280] sm:$0xff]
    %v218 = vld [vmem:[#allocation5 + $0x288] sm:$0xff]
    %v219 = vld [vmem:[#allocation5 + $0x290] sm:$0xff]
    %v220 = vld [vmem:[#allocation5 + $0x298] sm:$0xff]
    %v221 = vld [vmem:[#allocation5 + $0x2a0] sm:$0xff]
    %v222 = vld [vmem:[#allocation5 + $0x2a8] sm:$0xff]
    %v223 = vld [vmem:[#allocation5 + $0x2b0] sm:$0xff]
    %v224 = vld [vmem:[#allocation5 + $0x2b8] sm:$0xff]
    %v225 = vld [vmem:[#allocation5 + $0x2c0] sm:$0xff]
    %v226 = vld [vmem:[#allocation5 + $0x2c8] sm:$0xff]
    %v227 = vld [vmem:[#allocation5 + $0x2d0] sm:$0xff]
    %v228 = vld [vmem:[#allocation5 + $0x2d8] sm:$0xff]
    %v229 = vld [vmem:[#allocation5 + $0x2e0] sm:$0xff]
    %v230 = vld [vmem:[#allocation5 + $0x2e8] sm:$0xff]
    %v231 = vld [vmem:[#allocation5 + $0x2f0] sm:$0xff]
    %v232 = vld [vmem:[#allocation5 + $0x2f8] sm:$0xff]
    %v233 = vld [vmem:[#allocation5 + $0x300] sm:$0xff]
    %v234 = vld [vmem:[#allocation5 + $0x308] sm:$0xff]
    %v235 = vld [vmem:[#allocation5 + $0x310] sm:$0xff]
    %v236 = vld [vmem:[#allocation5 + $0x318] sm:$0xff]
    %v237 = vld [vmem:[#allocation5 + $0x320] sm:$0xff]
    %v238 = vld [vmem:[#allocation5 + $0x328] sm:$0xff]
    %v239 = vld [vmem:[#allocation5 + $0x330] sm:$0xff]
    %v240 = vld [vmem:[#allocation5 + $0x338] sm:$0xff]
    %v241 = vld [vmem:[#allocation5 + $0x340] sm:$0xff]
    %v242 = vld [vmem:[#allocation5 + $0x348] sm:$0xff]
    %v243 = vld [vmem:[#allocation5 + $0x350] sm:$0xff]
    %v244 = vld [vmem:[#allocation5 + $0x358] sm:$0xff]
    %v245 = vld [vmem:[#allocation5 + $0x360] sm:$0xff]
    %v246 = vld [vmem:[#allocation5 + $0x368] sm:$0xff]
    %v247 = vld [vmem:[#allocation5 + $0x370] sm:$0xff]
    %v248 = vld [vmem:[#allocation5 + $0x378] sm:$0xff]
    %v249 = vld [vmem:[#allocation5 + $0x380] sm:$0xff]
    %v250 = vld [vmem:[#allocation5 + $0x388] sm:$0xff]
    %v251 = vld [vmem:[#allocation5 + $0x390] sm:$0xff]
    %v252 = vld [vmem:[#allocation5 + $0x398] sm:$0xff]
    %v253 = vld [vmem:[#allocation5 + $0x3a0] sm:$0xff]
    %v254 = vld [vmem:[#allocation5 + $0x3a8] sm:$0xff]
    %v255 = vld [vmem:[#allocation5 + $0x3b0] sm:$0xff]
    %v256 = vld [vmem:[#allocation5 + $0x3b8] sm:$0xff]
    %v257 = vld [vmem:[#allocation5 + $0x3c0] sm:$0xff]
    %v258 = vld [vmem:[#allocation5 + $0x3c8] sm:$0xff]
    %v259 = vld [vmem:[#allocation5 + $0x3d0] sm:$0xff]
    %v260 = vld [vmem:[#allocation5 + $0x3d8] sm:$0xff]
    %v261 = vld [vmem:[#allocation5 + $0x3e0] sm:$0xff]
    %v262 = vld [vmem:[#allocation5 + $0x3e8] sm:$0xff]
    %v263 = vld [vmem:[#allocation5 + $0x3f0] sm:$0xff]
    %v264 = vld [vmem:[#allocation5 + $0x3f8] sm:$0xff]
    %v265 = vld [vmem:[#allocation5 + $0x400] sm:$0xff]
    %v266 = vld [vmem:[#allocation5 + $0x408] sm:$0xff]
    %v267 = vld [vmem:[#allocation5 + $0x410] sm:$0xff]
    %v268 = vld [vmem:[#allocation5 + $0x418] sm:$0xff]
    %v269 = vld [vmem:[#allocation5 + $0x420] sm:$0xff]
    %v270 = vld [vmem:[#allocation5 + $0x428] sm:$0xff]
    %v271 = vld [vmem:[#allocation5 + $0x430] sm:$0xff]
    %v272 = vld [vmem:[#allocation5 + $0x438] sm:$0xff]
    %v273 = vld [vmem:[#allocation5 + $0x440] sm:$0xff]
    %v274 = vld [vmem:[#allocation5 + $0x448] sm:$0xff]
    %v275 = vld [vmem:[#allocation5 + $0x450] sm:$0xff]
    %v276 = vld [vmem:[#allocation5 + $0x458] sm:$0xff]
    %v277 = vld [vmem:[#allocation5 + $0x460] sm:$0xff]
    %v278 = vld [vmem:[#allocation5 + $0x468] sm:$0xff]
    %v279 = vld [vmem:[#allocation5 + $0x470] sm:$0xff]
    %v280 = vld [vmem:[#allocation5 + $0x478] sm:$0xff]
    %v281 = vld [vmem:[#allocation5 + $0x480] sm:$0xff]
    %v282 = vld [vmem:[#allocation5 + $0x488] sm:$0xff]
    %v283 = vld [vmem:[#allocation5 + $0x490] sm:$0xff]
    %v284 = vld [vmem:[#allocation5 + $0x498] sm:$0xff]
    %v285 = vld [vmem:[#allocation5 + $0x4a0] sm:$0xff]
    %v286 = vld [vmem:[#allocation5 + $0x4a8] sm:$0xff]
    %v287 = vld [vmem:[#allocation5 + $0x4b0] sm:$0xff]
    %v288 = vld [vmem:[#allocation5 + $0x4b8] sm:$0xff]
    %v289 = vld [vmem:[#allocation5 + $0x4c0] sm:$0xff]
    %v290 = vld [vmem:[#allocation5 + $0x4c8] sm:$0xff]
    %v291 = vld [vmem:[#allocation5 + $0x4d0] sm:$0xff]
    %v292 = vld [vmem:[#allocation5 + $0x4d8] sm:$0xff]
    %v293 = vld [vmem:[#allocation5 + $0x4e0] sm:$0xff]
    %v294 = vld [vmem:[#allocation5 + $0x4e8] sm:$0xff]
    %v295 = vld [vmem:[#allocation5 + $0x4f0] sm:$0xff]
    %v296 = vld [vmem:[#allocation5 + $0x4f8] sm:$0xff]
    %v297 = vld [vmem:[#allocation5 + $0x500] sm:$0xff]
    %v298 = vld [vmem:[#allocation5 + $0x508] sm:$0xff]
    %v299 = vld [vmem:[#allocation5 + $0x510] sm:$0xff]
    %v300 = vld [vmem:[#allocation5 + $0x518] sm:$0xff]
    %v301 = vld [vmem:[#allocation5 + $0x520] sm:$0xff]
    %v302 = vld [vmem:[#allocation5 + $0x528] sm:$0xff]
    %v303 = vld [vmem:[#allocation5 + $0x530] sm:$0xff]
    %v304 = vld [vmem:[#allocation5 + $0x538] sm:$0xff]
    %v305 = vld [vmem:[#allocation5 + $0x540] sm:$0xff]
    %v306 = vld [vmem:[#allocation5 + $0x548] sm:$0xff]
    %v307 = vld [vmem:[#allocation5 + $0x550] sm:$0xff]
    %v308 = vld [vmem:[#allocation5 + $0x558] sm:$0xff]
    %v309 = vld [vmem:[#allocation5 + $0x560] sm:$0xff]
    %v310 = vld [vmem:[#allocation5 + $0x568] sm:$0xff]
    %v311 = vld [vmem:[#allocation5 + $0x570] sm:$0xff]
    %v312 = vld [vmem:[#allocation5 + $0x578] sm:$0xff]
    %v313 = vld [vmem:[#allocation5 + $0x580] sm:$0xff]
    %v314 = vld [vmem:[#allocation5 + $0x588] sm:$0xff]
    %v315 = vld [vmem:[#allocation5 + $0x590] sm:$0xff]
    %v316 = vld [vmem:[#allocation5 + $0x598] sm:$0xff]
    %v317 = vld [vmem:[#allocation5 + $0x5a0] sm:$0xff]
    %v318 = vld [vmem:[#allocation5 + $0x5a8] sm:$0xff]
    %v319 = vld [vmem:[#allocation5 + $0x5b0] sm:$0xff]
    %v320 = vld [vmem:[#allocation5 + $0x5b8] sm:$0xff]
    %v321 = vld [vmem:[#allocation5 + $0x5c0] sm:$0xff]
    %v322 = vld [vmem:[#allocation5 + $0x5c8] sm:$0xff]
    %v323 = vld [vmem:[#allocation5 + $0x5d0] sm:$0xff]
    %v324 = vld [vmem:[#allocation5 + $0x5d8] sm:$0xff]
    %v325 = vld [vmem:[#allocation5 + $0x5e0] sm:$0xff]
    %v326 = vld [vmem:[#allocation5 + $0x5e8] sm:$0xff]
    %v327 = vld [vmem:[#allocation5 + $0x5f0] sm:$0xff]
    %v328 = vld [vmem:[#allocation5 + $0x5f8] sm:$0xff]
    %v329 = vld [vmem:[%s4] sm:$0x3]
    %v331 = vperm.slane %v329, 0
    %v332 = vperm.slane %v329, 1
    %337 = vst [vmem:[#allocation1] ss:$4 sm:$0xff] %v135
    %s338 = scalar_lea.vmem [#allocation1], 32
    %339 = vst [vmem:[%s338] ss:$4 sm:$0xff] %v136
    %v340 = vld.sshfl [vmem:[#allocation1] sm:$0xff pattern:$0x73625140]
    %v341 = vld.sshfl [vmem:[#allocation1 + $0x8] sm:$0xff pattern:$0x73625140]
    %v342 = vld.sshfl [vmem:[#allocation1 + $0x10] sm:$0xff pattern:$0x73625140]
    %v343 = vld.sshfl [vmem:[#allocation1 + $0x18] sm:$0xff pattern:$0x73625140]
    %v344 = vld.sshfl [vmem:[#allocation1 + $0x20] sm:$0xff pattern:$0x73625140]
    %v345 = vld.sshfl [vmem:[#allocation1 + $0x28] sm:$0xff pattern:$0x73625140]
    %352 = vmatpush.msra.mxu0 %v167
    %353 = vmatpush.msra.mxu0 %v165
    %354 = vmatpush.msra.mxu0 %v163
    %355 = vmatpush.msra.mxu0 %v161
    %356 = vmatpush.msra.mxu0 %v159
    %357 = vmatpush.msra.mxu0 %v157
    %358 = vmatpush.msra.mxu0 %v155
    %359 = vmatpush.msra.mxu0 %v153
    %360 = vmatpush.msra.mxu0 %v151
    %361 = vmatpush.msra.mxu0 %v149
    %362 = vmatpush.msra.mxu0 %v147
    %363 = vmatpush.msra.mxu0 %v145
    %364 = vmatpush.msra.mxu0 %v143
    %365 = vmatpush.msra.mxu0 %v141
    %366 = vmatpush.msra.mxu0 %v139
    %367 = vmatpush.msra.mxu0 %v137
    %368 = vmatmul.f32.gmra.mxu0 %v340
    %v369 = vpop.f32.mrf.mxu0
    %v370 = vadd.f32 %v331, %v369
    %371 = vdwg.mxu0
    %372 = vmatpush.msra.mxu0 %v199
    %373 = vmatpush.msra.mxu0 %v197
    %374 = vmatpush.msra.mxu0 %v195
    %375 = vmatpush.msra.mxu0 %v193
    %376 = vmatpush.msra.mxu0 %v191
    %377 = vmatpush.msra.mxu0 %v189
    %378 = vmatpush.msra.mxu0 %v187
    %379 = vmatpush.msra.mxu0 %v185
    %380 = vmatpush.msra.mxu0 %v183
    %381 = vmatpush.msra.mxu0 %v181
    %382 = vmatpush.msra.mxu0 %v179
    %383 = vmatpush.msra.mxu0 %v177
    %384 = vmatpush.msra.mxu0 %v175
    %385 = vmatpush.msra.mxu0 %v173
    %386 = vmatpush.msra.mxu0 %v171
    %387 = vmatpush.msra.mxu0 %v169
    %388 = vmatmul.f32.gmra.mxu0 %v341
    %v389 = vpop.f32.mrf.mxu0
    %v390 = vadd.f32 %v370, %v389
    %391 = vdwg.mxu0
    %392 = vmatpush.msra.mxu0 %v231
    %393 = vmatpush.msra.mxu0 %v229
    %394 = vmatpush.msra.mxu0 %v227
    %395 = vmatpush.msra.mxu0 %v225
    %396 = vmatpush.msra.mxu0 %v223
    %397 = vmatpush.msra.mxu0 %v221
    %398 = vmatpush.msra.mxu0 %v219
    %399 = vmatpush.msra.mxu0 %v217
    %400 = vmatpush.msra.mxu0 %v215
    %401 = vmatpush.msra.mxu0 %v213
    %402 = vmatpush.msra.mxu0 %v211
    %403 = vmatpush.msra.mxu0 %v209
    %404 = vmatpush.msra.mxu0 %v207
    %405 = vmatpush.msra.mxu0 %v205
    %406 = vmatpush.msra.mxu0 %v203
    %407 = vmatpush.msra.mxu0 %v201
    %408 = vmatmul.f32.gmra.mxu0 %v342
    %v409 = vpop.f32.mrf.mxu0
    %v410 = vadd.f32 %v390, %v409
    %411 = vdwg.mxu0
    %412 = vmatpush.msra.mxu0 %v263
    %413 = vmatpush.msra.mxu0 %v261
    %414 = vmatpush.msra.mxu0 %v259
    %415 = vmatpush.msra.mxu0 %v257
    %416 = vmatpush.msra.mxu0 %v255
    %417 = vmatpush.msra.mxu0 %v253
    %418 = vmatpush.msra.mxu0 %v251
    %419 = vmatpush.msra.mxu0 %v249
    %420 = vmatpush.msra.mxu0 %v247
    %421 = vmatpush.msra.mxu0 %v245
    %422 = vmatpush.msra.mxu0 %v243
    %423 = vmatpush.msra.mxu0 %v241
    %424 = vmatpush.msra.mxu0 %v239
    %425 = vmatpush.msra.mxu0 %v237
    %426 = vmatpush.msra.mxu0 %v235
    %427 = vmatpush.msra.mxu0 %v233
    %428 = vmatmul.f32.gmra.mxu0 %v343
    %v429 = vpop.f32.mrf.mxu0
    %v430 = vadd.f32 %v410, %v429
    %431 = vdwg.mxu0
    %432 = vmatpush.msra.mxu0 %v295
    %433 = vmatpush.msra.mxu0 %v293
    %434 = vmatpush.msra.mxu0 %v291
    %435 = vmatpush.msra.mxu0 %v289
    %436 = vmatpush.msra.mxu0 %v287
    %437 = vmatpush.msra.mxu0 %v285
    %438 = vmatpush.msra.mxu0 %v283
    %439 = vmatpush.msra.mxu0 %v281
    %440 = vmatpush.msra.mxu0 %v279
    %441 = vmatpush.msra.mxu0 %v277
    %442 = vmatpush.msra.mxu0 %v275
    %443 = vmatpush.msra.mxu0 %v273
    %444 = vmatpush.msra.mxu0 %v271
    %445 = vmatpush.msra.mxu0 %v269
    %446 = vmatpush.msra.mxu0 %v267
    %447 = vmatpush.msra.mxu0 %v265
    %448 = vmatmul.f32.gmra.mxu0 %v344
    %v449 = vpop.f32.mrf.mxu0
    %v450 = vadd.f32 %v430, %v449
    %451 = vdwg.mxu0
    %452 = vmatpush.msra.mxu0 %v327
    %453 = vmatpush.msra.mxu0 %v325
    %454 = vmatpush.msra.mxu0 %v323
    %455 = vmatpush.msra.mxu0 %v321
    %456 = vmatpush.msra.mxu0 %v319
    %457 = vmatpush.msra.mxu0 %v317
    %458 = vmatpush.msra.mxu0 %v315
    %459 = vmatpush.msra.mxu0 %v313
    %460 = vmatpush.msra.mxu0 %v311
    %461 = vmatpush.msra.mxu0 %v309
    %462 = vmatpush.msra.mxu0 %v307
    %463 = vmatpush.msra.mxu0 %v305
    %464 = vmatpush.msra.mxu0 %v303
    %465 = vmatpush.msra.mxu0 %v301
    %466 = vmatpush.msra.mxu0 %v299
    %467 = vmatpush.msra.mxu0 %v297
    %468 = vmatmul.f32.gmra.mxu0 %v345
    %v469 = vpop.f32.mrf.mxu0
    %v470 = vadd.f32 %v450, %v469
    %471 = vdwg.mxu0
    %472 = vmatpush.msra.mxu0 %v168
    %473 = vmatpush.msra.mxu0 %v166
    %474 = vmatpush.msra.mxu0 %v164
    %475 = vmatpush.msra.mxu0 %v162
    %476 = vmatpush.msra.mxu0 %v160
    %477 = vmatpush.msra.mxu0 %v158
    %478 = vmatpush.msra.mxu0 %v156
    %479 = vmatpush.msra.mxu0 %v154
    %480 = vmatpush.msra.mxu0 %v152
    %481 = vmatpush.msra.mxu0 %v150
    %482 = vmatpush.msra.mxu0 %v148
    %483 = vmatpush.msra.mxu0 %v146
    %484 = vmatpush.msra.mxu0 %v144
    %485 = vmatpush.msra.mxu0 %v142
    %486 = vmatpush.msra.mxu0 %v140
    %487 = vmatpush.msra.mxu0 %v138
    %488 = vmatmul.f32.gmra.mxu0 %v340
    %v489 = vpop.f32.mrf.mxu0
    %v490 = vadd.f32 %v332, %v489
    %491 = vdwg.mxu0
    %492 = vmatpush.msra.mxu0 %v200
    %493 = vmatpush.msra.mxu0 %v198
    %494 = vmatpush.msra.mxu0 %v196
    %495 = vmatpush.msra.mxu0 %v194
    %496 = vmatpush.msra.mxu0 %v192
    %497 = vmatpush.msra.mxu0 %v190
    %498 = vmatpush.msra.mxu0 %v188
    %499 = vmatpush.msra.mxu0 %v186
    %500 = vmatpush.msra.mxu0 %v184
    %501 = vmatpush.msra.mxu0 %v182
    %502 = vmatpush.msra.mxu0 %v180
    %503 = vmatpush.msra.mxu0 %v178
    %504 = vmatpush.msra.mxu0 %v176
    %505 = vmatpush.msra.mxu0 %v174
    %506 = vmatpush.msra.mxu0 %v172
    %507 = vmatpush.msra.mxu0 %v170
    %508 = vmatmul.f32.gmra.mxu0 %v341
    %v509 = vpop.f32.mrf.mxu0
    %v510 = vadd.f32 %v490, %v509
    %511 = vdwg.mxu0
    %512 = vmatpush.msra.mxu0 %v232
    %513 = vmatpush.msra.mxu0 %v230
    %514 = vmatpush.msra.mxu0 %v228
    %515 = vmatpush.msra.mxu0 %v226
    %516 = vmatpush.msra.mxu0 %v224
    %517 = vmatpush.msra.mxu0 %v222
    %518 = vmatpush.msra.mxu0 %v220
    %519 = vmatpush.msra.mxu0 %v218
    %520 = vmatpush.msra.mxu0 %v216
    %521 = vmatpush.msra.mxu0 %v214
    %522 = vmatpush.msra.mxu0 %v212
    %523 = vmatpush.msra.mxu0 %v210
    %524 = vmatpush.msra.mxu0 %v208
    %525 = vmatpush.msra.mxu0 %v206
    %526 = vmatpush.msra.mxu0 %v204
    %527 = vmatpush.msra.mxu0 %v202
    %528 = vmatmul.f32.gmra.mxu0 %v342
    %v529 = vpop.f32.mrf.mxu0
    %v530 = vadd.f32 %v510, %v529
    %531 = vdwg.mxu0
    %532 = vmatpush.msra.mxu0 %v264
    %533 = vmatpush.msra.mxu0 %v262
    %534 = vmatpush.msra.mxu0 %v260
    %535 = vmatpush.msra.mxu0 %v258
    %536 = vmatpush.msra.mxu0 %v256
    %537 = vmatpush.msra.mxu0 %v254
    %538 = vmatpush.msra.mxu0 %v252
    %539 = vmatpush.msra.mxu0 %v250
    %540 = vmatpush.msra.mxu0 %v248
    %541 = vmatpush.msra.mxu0 %v246
    %542 = vmatpush.msra.mxu0 %v244
    %543 = vmatpush.msra.mxu0 %v242
    %544 = vmatpush.msra.mxu0 %v240
    %545 = vmatpush.msra.mxu0 %v238
    %546 = vmatpush.msra.mxu0 %v236
    %547 = vmatpush.msra.mxu0 %v234
    %548 = vmatmul.f32.gmra.mxu0 %v343
    %v549 = vpop.f32.mrf.mxu0
    %v550 = vadd.f32 %v530, %v549
    %551 = vdwg.mxu0
    %552 = vmatpush.msra.mxu0 %v296
    %553 = vmatpush.msra.mxu0 %v294
    %554 = vmatpush.msra.mxu0 %v292
    %555 = vmatpush.msra.mxu0 %v290
    %556 = vmatpush.msra.mxu0 %v288
    %557 = vmatpush.msra.mxu0 %v286
    %558 = vmatpush.msra.mxu0 %v284
    %559 = vmatpush.msra.mxu0 %v282
    %560 = vmatpush.msra.mxu0 %v280
    %561 = vmatpush.msra.mxu0 %v278
    %562 = vmatpush.msra.mxu0 %v276
    %563 = vmatpush.msra.mxu0 %v274
    %564 = vmatpush.msra.mxu0 %v272
    %565 = vmatpush.msra.mxu0 %v270
    %566 = vmatpush.msra.mxu0 %v268
    %567 = vmatpush.msra.mxu0 %v266
    %568 = vmatmul.f32.gmra.mxu0 %v344
    %v569 = vpop.f32.mrf.mxu0
    %v570 = vadd.f32 %v550, %v569
    %571 = vdwg.mxu0
    %572 = vmatpush.msra.mxu0 %v328
    %573 = vmatpush.msra.mxu0 %v326
    %574 = vmatpush.msra.mxu0 %v324
    %575 = vmatpush.msra.mxu0 %v322
    %576 = vmatpush.msra.mxu0 %v320
    %577 = vmatpush.msra.mxu0 %v318
    %578 = vmatpush.msra.mxu0 %v316
    %579 = vmatpush.msra.mxu0 %v314
    %580 = vmatpush.msra.mxu0 %v312
    %581 = vmatpush.msra.mxu0 %v310
    %582 = vmatpush.msra.mxu0 %v308
    %583 = vmatpush.msra.mxu0 %v306
    %584 = vmatpush.msra.mxu0 %v304
    %585 = vmatpush.msra.mxu0 %v302
    %586 = vmatpush.msra.mxu0 %v300
    %587 = vmatpush.msra.mxu0 %v298
    %588 = vmatmul.f32.gmra.mxu0 %v345
    %v589 = vpop.f32.mrf.mxu0
    %v590 = vadd.f32 %v570, %v589
    %591 = vdwg.mxu0
    %vm592 = vcmask 1041408
    %v593 = vsel %vm592, %v470, 0.0
    %v594 = vrot.slane %v593, 4
    %v595 = vadd.f32 %v593, %v594
    %v596 = vrot.slane %v595, 2
    %v597 = vadd.f32 %v595, %v596
    %v598 = vrot.slane %v597, 1
    %v599 = vadd.f32 %v597, %v598
    %v600 = vsel %vm592, %v590, 0.0
    %v601 = vrot.slane %v600, 4
    %v602 = vadd.f32 %v600, %v601
    %v603 = vrot.slane %v602, 2
    %v604 = vadd.f32 %v602, %v603
    %v605 = vrot.slane %v604, 1
    %v606 = vadd.f32 %v604, %v605
    %v607 = vrcp.pop 2.0
    %v608 = vmul.f32 2.0, %v607
    %v609 = vsub.f32 1.0, %v608
    %v610 = vmul.f32 %v607, %v609
    %v611 = vadd.f32 %v607, %v610
    %vm612 = vweird.f32 %v607
    %v613 = vsel %vm612, %v607, %v611
    %v614 = vmul.f32 %v599, %v613
    %v615 = vmul.f32 %v606, %v613
    %v616 = vsub.f32 %v470, %v614
    %v617 = vsub.f32 %v590, %v615
    %v618 = vmul.f32 %v616, %v616
    %v619 = vmul.f32 %v617, %v617
    %v620 = vsel %vm592, %v618, 0.0
    %v621 = vrot.slane %v620, 4
    %v622 = vadd.f32 %v620, %v621
    %v623 = vrot.slane %v622, 2
    %v624 = vadd.f32 %v622, %v623
    %v625 = vrot.slane %v624, 1
    %v626 = vadd.f32 %v624, %v625
    %v627 = vsel %vm592, %v619, 0.0
    %v628 = vrot.slane %v627, 4
    %v629 = vadd.f32 %v627, %v628
    %v630 = vrot.slane %v629, 2
    %v631 = vadd.f32 %v629, %v630
    %v632 = vrot.slane %v631, 1
    %v633 = vadd.f32 %v631, %v632
    %v634 = vmul.f32 %v626, %v613
    %v635 = vmul.f32 %v633, %v613
    %v636 = vld [vmem:[%s5] sm:$0x3]
    %v638 = vperm.slane %v636, 0
    %v639 = vperm.slane %v636, 1
    %v642 = vmul.f32 %v638, %v616
    %v643 = vmul.f32 %v639, %v617
    %v644 = vadd.f32 %v634, 1e-05
    %v645 = vadd.f32 %v635, 1e-05
    %v646 = vrsqrt.pop %v644
    %v647 = vmul.f32 %v646, %v644
    %v648 = vmul.f32 %v647, %v646
    %v649 = vmul.f32 0.5, %v648
    %v650 = vsub.f32 1.5, %v649
    %v651 = vmul.f32 %v646, %v650
    %vm652 = vweird.f32 %v644
    %vm653 = vweird.f32 %v646
    %vm654 = vmor %vm652, %vm653
    %v655 = vsel %vm654, %v646, %v651
    %v656 = vrsqrt.pop %v645
    %v657 = vmul.f32 %v656, %v645
    %v658 = vmul.f32 %v657, %v656
    %v659 = vmul.f32 0.5, %v658
    %v660 = vsub.f32 1.5, %v659
    %v661 = vmul.f32 %v656, %v660
    %vm662 = vweird.f32 %v645
    %vm663 = vweird.f32 %v656
    %vm664 = vmor %vm662, %vm663
    %v665 = vsel %vm664, %v656, %v661
    %v666 = vmul.f32 %v642, %v655
    %v667 = vmul.f32 %v643, %v665
    %v668 = vld [vmem:[%s6] sm:$0x3]
    %v670 = vperm.slane %v668, 0
    %v671 = vperm.slane %v668, 1
    %v674 = vadd.f32 %v666, %v670
    %v675 = vadd.f32 %v667, %v671
    %v676 = vmax.f32 %v674, 0.0
    %v677 = vmax.f32 %v675, 0.0
    %v678 = vld [vmem:[%s2] sm:$0x3f]
    %680 = vrot.lane.b32.xlu0 %v678, 64
    %v681 = vpop.permute.xlu0 %680
    %v683 = vsub.f32 %v678, %v681
    %v684 = vmul.f32 %v683, %v683
    %v685 = vrot.slane %v681, 2
    %vm686 = vcmask 523264
    %v687 = vsel %vm686, %v681, %v685
    %v689 = vsub.f32 %v678, %v687
    %v690 = vmul.f32 %v689, %v689
    %692 = vrot.lane.b32.xlu0 %v690, 64
    %v693 = vpop.permute.xlu0 %692
    %v695 = vadd.f32 %v684, %v693
    %v696 = vrot.slane %v678, 2
    %v698 = vsub.f32 %v696, %v678
    %v699 = vmul.f32 %v698, %v698
    %v700 = vadd.f32 %v695, %v699
    %v701 = vmul.f32 %v700, 0.5
    %v703 = vmul.f32 %v685, %v685
    %v704 = vrot.slane %v678, 4
    %v706 = vmul.f32 %v704, %v704
    %v707 = vadd.f32 %v703, %v706
    %v708 = vrot.slane %v681, 4
    %v710 = vmul.f32 %v708, %v708
    %v711 = vadd.f32 %v707, %v710
    %v712 = vmul.f32 %v711, 3.0
    %v713 = vadd.f32 %v701, %v712
    %vm714 = vcmask 517120
    %v715 = vsel %vm714, %v713, 0.0
    %716 = vadd.xlane.f32.xlu0 %v715
    %v717 = vpop.xlane.xlu0 %716
    %v718 = vadd.f32 %v678, %v681
    %v719 = vadd.f32 %v718, %v696
    %v720 = vmul.f32 %v719, 0.33333334
    %v721 = vsub.f32 %v678, %v720
    %723 = vrot.lane.b32.xlu0 %v720, 64
    %v724 = vpop.permute.xlu0 %723
    %v726 = vsub.f32 %v678, %v724
    %v727 = vsub.f32 %v696, %v720
    %s728 = smul.f32 %s128, %s130
    %s729 = sadd.f32 %s130, 1.0
    %s730 = smul.f32 %s130, 2.0
    %s731 = ssub.f32 1.0, %s730
    %s732 = smul.f32 %s729, %s731
    %v733 = vstv %s732
    %v734 = vrcp.pop %v733
    %v735 = vmul.f32 %v733, %v734
    %v736 = vsub.f32 1.0, %v735
    %v737 = vmul.f32 %v734, %v736
    %v738 = vadd.f32 %v734, %v737
    %vm739 = vweird.f32 %v733
    %vm740 = vweird.f32 %v734
    %vm741 = vmor %vm739, %vm740
    %v742 = vsel %vm741, %v734, %v738
    %v743 = vand.u32 2147483647, %v733
    %vm744 = vcmp.eq.f32.partialorder %v743, 8.507059e+37
    %v745 = vand.u32 %v733, 2147483648
    %v746 = vor.u32 1.1754944e-38, %v745
    %v747 = vsel %vm744, %v746, %v742
    %s748 = vtos %v747
    %s749 = smul.f32 %s728, %s748
    %s750 = smul.f32 %s729, 2.0
    %v751 = vstv %s750
    %v752 = vrcp.pop %v751
    %v753 = vmul.f32 %v751, %v752
    %v754 = vsub.f32 1.0, %v753
    %v755 = vmul.f32 %v752, %v754
    %v756 = vadd.f32 %v752, %v755
    %vm757 = vweird.f32 %v751
    %vm758 = vweird.f32 %v752
    %vm759 = vmor %vm757, %vm758
    %v760 = vsel %vm759, %v752, %v756
    %v761 = vand.u32 2147483647, %v751
    %vm762 = vcmp.eq.f32.partialorder %v761, 8.507059e+37
    %v763 = vand.u32 %v751, 2147483648
    %v764 = vor.u32 1.1754944e-38, %v763
    %v765 = vsel %vm762, %v764, %v760
    %s766 = vtos %v765
    %s767 = smul.f32 %s128, %s766
    %v768 = vstv %s128
    %v769 = vrcp.pop %v768
    %v770 = vmul.f32 %v768, %v769
    %v771 = vsub.f32 1.0, %v770
    %v772 = vmul.f32 %v769, %v771
    %v773 = vadd.f32 %v769, %v772
    %vm774 = vweird.f32 %v768
    %vm775 = vweird.f32 %v769
    %vm776 = vmor %vm774, %vm775
    %v777 = vsel %vm776, %v769, %v773
    %v778 = vand.u32 2147483647, %v768
    %vm779 = vcmp.eq.f32.partialorder %v778, 8.507059e+37
    %v780 = vand.u32 %v768, 2147483648
    %v781 = vor.u32 1.1754944e-38, %v780
    %v782 = vsel %vm779, %v781, %v777
    %s783 = vtos %v782
    %s784 = smul.f32 %s129, %s783
    %s785 = ssub.f32 1.0, %s784
    %v786 = vstv %s785
    %v787 = vrcp.pop %v786
    %v788 = vmul.f32 %v786, %v787
    %v789 = vsub.f32 1.0, %v788
    %v790 = vmul.f32 %v787, %v789
    %v791 = vadd.f32 %v787, %v790
    %vm792 = vweird.f32 %v786
    %vm793 = vweird.f32 %v787
    %vm794 = vmor %vm792, %vm793
    %v795 = vsel %vm794, %v787, %v791
    %v796 = vand.u32 2147483647, %v786
    %vm797 = vcmp.eq.f32.partialorder %v796, 8.507059e+37
    %v798 = vand.u32 %v786, 2147483648
    %v799 = vor.u32 1.1754944e-38, %v798
    %v800 = vsel %vm797, %v799, %v795
    %s801 = vtos %v800
    %s802 = smul.f32 %s129, %s801
    %s803 = smul.f32 %s767, 9.0
    %s804 = smul.f32 %s803, %s767
    %s805 = smul.f32 %s767, 3.0
    %s806 = sadd.f32 %s802, %s805
    %v807 = vstv %s806
    %v808 = vrcp.pop %v807
    %v809 = vmul.f32 %v807, %v808
    %v810 = vsub.f32 1.0, %v809
    %v811 = vmul.f32 %v808, %v810
    %v812 = vadd.f32 %v808, %v811
    %vm813 = vweird.f32 %v807
    %vm814 = vweird.f32 %v808
    %vm815 = vmor %vm813, %vm814
    %v816 = vsel %vm815, %v808, %v812
    %v817 = vand.u32 2147483647, %v807
    %vm818 = vcmp.eq.f32.partialorder %v817, 8.507059e+37
    %v819 = vand.u32 %v807, 2147483648
    %v820 = vor.u32 1.1754944e-38, %v819
    %v821 = vsel %vm818, %v820, %v816
    %s822 = vtos %v821
    %s823 = smul.f32 %s804, %s822
    %v824 = vstv %s823
    %v825 = vrcp.pop %v717
    %v826 = vmul.f32 %v717, %v825
    %v827 = vsub.f32 1.0, %v826
    %v828 = vmul.f32 %v825, %v827
    %v829 = vadd.f32 %v825, %v828
    %vm830 = vweird.f32 %v717
    %vm831 = vweird.f32 %v825
    %vm832 = vmor %vm830, %vm831
    %v833 = vsel %vm832, %v825, %v829
    %v834 = vand.u32 2147483647, %v717
    %vm835 = vcmp.eq.f32.partialorder %v834, 8.507059e+37
    %v836 = vand.u32 %v717, 2147483648
    %v837 = vor.u32 1.1754944e-38, %v836
    %v838 = vsel %vm835, %v837, %v833
    %v839 = vmul.f32 %v824, %v838
    %v840 = vmul.f32 %v721, %v721
    %v841 = vsel %vm714, %v840, 0.0
    %842 = vadd.xlane.f32.xlu0 %v841
    %v843 = vpop.xlane.xlu0 %842
    %845 = vrot.lane.b32.xlu0 %v726, 64
    %v846 = vpop.permute.xlu0 %845
    %v848 = vmul.f32 %v721, %v846
    %v849 = vsel %vm714, %v848, 0.0
    %850 = vadd.xlane.f32.xlu0 %v849
    %v851 = vpop.xlane.xlu0 %850
    %v852 = vmul.f32 %v721, %v727
    %v853 = vsel %vm714, %v852, 0.0
    %854 = vadd.xlane.f32.xlu0 %v853
    %v855 = vpop.xlane.xlu0 %854
    %v856 = vmul.f32 %v721, %v685
    %v857 = vsel %vm714, %v856, 0.0
    %858 = vadd.xlane.f32.xlu0 %v857
    %v859 = vpop.xlane.xlu0 %858
    %v860 = vmul.f32 %v721, %v704
    %v861 = vsel %vm714, %v860, 0.0
    %862 = vadd.xlane.f32.xlu0 %v861
    %v863 = vpop.xlane.xlu0 %862
    %v864 = vmul.f32 %v721, %v708
    %v865 = vsel %vm714, %v864, 0.0
    %866 = vadd.xlane.f32.xlu0 %v865
    %v867 = vpop.xlane.xlu0 %866
    %v868 = vmul.f32 %v726, %v726
    %870 = vst [vmem:[#allocation1] ss:$4 sm:$0xff] %v868
    %v871 = vld.sshfl [vmem:[#allocation1] sm:$0xff pattern:$0x73625140]
    %872 = vrot.lane.b32.xlu0 %v871, 64
    %v873 = vpop.permute.xlu0 %872
    %v875 = vsel %vm714, %v873, 0.0
    %876 = vadd.xlane.f32.xlu0 %v875
    %v877 = vpop.xlane.xlu0 %876
    %879 = vrot.lane.b32.xlu0 %v727, 64
    %v880 = vpop.permute.xlu0 %879
    %v882 = vmul.f32 %v726, %v880
    %884 = vst [vmem:[#allocation1] ss:$4 sm:$0xff] %v882
    %v885 = vld.sshfl [vmem:[#allocation1] sm:$0xff pattern:$0x73625140]
    %886 = vrot.lane.b32.xlu0 %v885, 64
    %v887 = vpop.permute.xlu0 %886
    %v889 = vsel %vm714, %v887, 0.0
    %890 = vadd.xlane.f32.xlu0 %v889
    %v891 = vpop.xlane.xlu0 %890
    %v892 = vmul.f32 %v726, %v696
    %894 = vst [vmem:[#allocation1] ss:$4 sm:$0xff] %v892
    %v895 = vld.sshfl [vmem:[#allocation1] sm:$0xff pattern:$0x73625140]
    %896 = vrot.lane.b32.xlu0 %v895, 64
    %v897 = vpop.permute.xlu0 %896
    %v899 = vsel %vm714, %v897, 0.0
    %900 = vadd.xlane.f32.xlu0 %v899
    %v901 = vpop.xlane.xlu0 %900
    %v902 = vsel %vm686, %v685, %v708
    %v904 = vmul.f32 %v726, %v902
    %906 = vst [vmem:[#allocation1] ss:$4 sm:$0xff] %v904
    %v907 = vld.sshfl [vmem:[#allocation1] sm:$0xff pattern:$0x73625140]
    %908 = vrot.lane.b32.xlu0 %v907, 64
    %v909 = vpop.permute.xlu0 %908
    %v911 = vsel %vm714, %v909, 0.0
    %912 = vadd.xlane.f32.xlu0 %v911
    %v913 = vpop.xlane.xlu0 %912
    %v914 = vmul.f32 %v726, %v704
    %916 = vst [vmem:[#allocation1] ss:$4 sm:$0xff] %v914
    %v917 = vld.sshfl [vmem:[#allocation1] sm:$0xff pattern:$0x73625140]
    %918 = vrot.lane.b32.xlu0 %v917, 64
    %v919 = vpop.permute.xlu0 %918
    %v921 = vsel %vm714, %v919, 0.0
    %922 = vadd.xlane.f32.xlu0 %v921
    %v923 = vpop.xlane.xlu0 %922
    %v924 = vmul.f32 %v727, %v727
    %v925 = vsel %vm714, %v924, 0.0
    %926 = vadd.xlane.f32.xlu0 %v925
    %v927 = vpop.xlane.xlu0 %926
    %v928 = vmul.f32 %v727, %v685
    %v929 = vsel %vm714, %v928, 0.0
    %930 = vadd.xlane.f32.xlu0 %v929
    %v931 = vpop.xlane.xlu0 %930
    %v932 = vmul.f32 %v727, %v704
    %v933 = vsel %vm714, %v932, 0.0
    %934 = vadd.xlane.f32.xlu0 %v933
    %v935 = vpop.xlane.xlu0 %934
    %v936 = vmul.f32 %v727, %v708
    %v937 = vsel %vm714, %v936, 0.0
    %938 = vadd.xlane.f32.xlu0 %v937
    %v939 = vpop.xlane.xlu0 %938
    %v940 = vsel %vm714, %v703, 0.0
    %941 = vadd.xlane.f32.xlu0 %v940
    %v942 = vpop.xlane.xlu0 %941
    %v943 = vmul.f32 %v685, %v704
    %v944 = vsel %vm714, %v943, 0.0
    %945 = vadd.xlane.f32.xlu0 %v944
    %v946 = vpop.xlane.xlu0 %945
    %v947 = vmul.f32 %v685, %v708
    %v948 = vsel %vm714, %v947, 0.0
    %949 = vadd.xlane.f32.xlu0 %v948
    %v950 = vpop.xlane.xlu0 %949
    %v951 = vsel %vm714, %v706, 0.0
    %952 = vadd.xlane.f32.xlu0 %v951
    %v953 = vpop.xlane.xlu0 %952
    %v954 = vmul.f32 %v704, %v708
    %v955 = vsel %vm714, %v954, 0.0
    %956 = vadd.xlane.f32.xlu0 %v955
    %v957 = vpop.xlane.xlu0 %956
    %v958 = vsel %vm714, %v710, 0.0
    %959 = vadd.xlane.f32.xlu0 %v958
    %v960 = vpop.xlane.xlu0 %959
    %s961 = smul.u32 8, 32
    %s962 = smul.u32 %s961, 4
    %s963 = sshll.u32 %s962, 4
    %964 = dma.done [#allocation4], %s963
    %v965 = vld [vmem:[#allocation2] sm:$0xff]
    %v966 = vld [vmem:[#allocation2 + $0x8] sm:$0xff]
    %v967 = vld [vmem:[#allocation2 + $0x10] sm:$0xff]
    %v968 = vld [vmem:[#allocation2 + $0x18] sm:$0xff]
    %v969 = vld [vmem:[#allocation2 + $0x20] sm:$0xff]
    %v970 = vld [vmem:[#allocation2 + $0x28] sm:$0xff]
    %v971 = vld [vmem:[#allocation2 + $0x30] sm:$0xff]
    %v972 = vld [vmem:[#allocation2 + $0x38] sm:$0xff]
    %v973 = vld [vmem:[#allocation2 + $0x40] sm:$0xff]
    %v974 = vld [vmem:[#allocation2 + $0x48] sm:$0xff]
    %v975 = vld [vmem:[#allocation2 + $0x50] sm:$0xff]
    %v976 = vld [vmem:[#allocation2 + $0x58] sm:$0xff]
    %v977 = vld [vmem:[#allocation2 + $0x60] sm:$0xff]
    %v978 = vld [vmem:[#allocation2 + $0x68] sm:$0xff]
    %v979 = vld [vmem:[#allocation2 + $0x70] sm:$0xff]
    %v980 = vld [vmem:[#allocation2 + $0x78] sm:$0xff]
    %v981 = vld [vmem:[#allocation2 + $0x80] sm:$0xff]
    %v982 = vld [vmem:[#allocation2 + $0x88] sm:$0xff]
    %v983 = vld [vmem:[#allocation2 + $0x90] sm:$0xff]
    %v984 = vld [vmem:[#allocation2 + $0x98] sm:$0xff]
    %v985 = vld [vmem:[#allocation2 + $0xa0] sm:$0xff]
    %v986 = vld [vmem:[#allocation2 + $0xa8] sm:$0xff]
    %v987 = vld [vmem:[#allocation2 + $0xb0] sm:$0xff]
    %v988 = vld [vmem:[#allocation2 + $0xb8] sm:$0xff]
    %v989 = vld [vmem:[#allocation2 + $0xc0] sm:$0xff]
    %v990 = vld [vmem:[#allocation2 + $0xc8] sm:$0xff]
    %v991 = vld [vmem:[#allocation2 + $0xd0] sm:$0xff]
    %v992 = vld [vmem:[#allocation2 + $0xd8] sm:$0xff]
    %v993 = vld [vmem:[#allocation2 + $0xe0] sm:$0xff]
    %v994 = vld [vmem:[#allocation2 + $0xe8] sm:$0xff]
    %v995 = vld [vmem:[#allocation2 + $0xf0] sm:$0xff]
    %v996 = vld [vmem:[#allocation2 + $0xf8] sm:$0xff]
    %v997 = vld [vmem:[#allocation2 + $0x100] sm:$0xff]
    %v998 = vld [vmem:[#allocation2 + $0x108] sm:$0xff]
    %v999 = vld [vmem:[#allocation2 + $0x110] sm:$0xff]
    %v1000 = vld [vmem:[#allocation2 + $0x118] sm:$0xff]
    %v1001 = vld [vmem:[#allocation2 + $0x120] sm:$0xff]
    %v1002 = vld [vmem:[#allocation2 + $0x128] sm:$0xff]
    %v1003 = vld [vmem:[#allocation2 + $0x130] sm:$0xff]
    %v1004 = vld [vmem:[#allocation2 + $0x138] sm:$0xff]
    %v1005 = vld [vmem:[#allocation2 + $0x140] sm:$0xff]
    %v1006 = vld [vmem:[#allocation2 + $0x148] sm:$0xff]
    %v1007 = vld [vmem:[#allocation2 + $0x150] sm:$0xff]
    %v1008 = vld [vmem:[#allocation2 + $0x158] sm:$0xff]
    %v1009 = vld [vmem:[#allocation2 + $0x160] sm:$0xff]
    %v1010 = vld [vmem:[#allocation2 + $0x168] sm:$0xff]
    %v1011 = vld [vmem:[#allocation2 + $0x170] sm:$0xff]
    %v1012 = vld [vmem:[#allocation2 + $0x178] sm:$0xff]
    %v1013 = vld [vmem:[#allocation2 + $0x180] sm:$0xff]
    %v1014 = vld [vmem:[#allocation2 + $0x188] sm:$0xff]
    %v1015 = vld [vmem:[#allocation2 + $0x190] sm:$0xff]
    %v1016 = vld [vmem:[#allocation2 + $0x198] sm:$0xff]
    %v1017 = vld [vmem:[#allocation2 + $0x1a0] sm:$0xff]
    %v1018 = vld [vmem:[#allocation2 + $0x1a8] sm:$0xff]
    %v1019 = vld [vmem:[#allocation2 + $0x1b0] sm:$0xff]
    %v1020 = vld [vmem:[#allocation2 + $0x1b8] sm:$0xff]
    %v1021 = vld [vmem:[#allocation2 + $0x1c0] sm:$0xff]
    %v1022 = vld [vmem:[#allocation2 + $0x1c8] sm:$0xff]
    %v1023 = vld [vmem:[#allocation2 + $0x1d0] sm:$0xff]
    %v1024 = vld [vmem:[#allocation2 + $0x1d8] sm:$0xff]
    %v1025 = vld [vmem:[#allocation2 + $0x1e0] sm:$0xff]
    %v1026 = vld [vmem:[#allocation2 + $0x1e8] sm:$0xff]
    %v1027 = vld [vmem:[#allocation2 + $0x1f0] sm:$0xff]
    %v1028 = vld [vmem:[#allocation2 + $0x1f8] sm:$0xff]
    %v1029 = vld [vmem:[#allocation2 + $0x200] sm:$0xff]
    %v1030 = vld [vmem:[#allocation2 + $0x208] sm:$0xff]
    %v1031 = vld [vmem:[#allocation2 + $0x210] sm:$0xff]
    %v1032 = vld [vmem:[#allocation2 + $0x218] sm:$0xff]
    %v1033 = vld [vmem:[#allocation2 + $0x220] sm:$0xff]
    %v1034 = vld [vmem:[#allocation2 + $0x228] sm:$0xff]
    %v1035 = vld [vmem:[#allocation2 + $0x230] sm:$0xff]
    %v1036 = vld [vmem:[#allocation2 + $0x238] sm:$0xff]
    %v1037 = vld [vmem:[#allocation2 + $0x240] sm:$0xff]
    %v1038 = vld [vmem:[#allocation2 + $0x248] sm:$0xff]
    %v1039 = vld [vmem:[#allocation2 + $0x250] sm:$0xff]
    %v1040 = vld [vmem:[#allocation2 + $0x258] sm:$0xff]
    %v1041 = vld [vmem:[#allocation2 + $0x260] sm:$0xff]
    %v1042 = vld [vmem:[#allocation2 + $0x268] sm:$0xff]
    %v1043 = vld [vmem:[#allocation2 + $0x270] sm:$0xff]
    %v1044 = vld [vmem:[#allocation2 + $0x278] sm:$0xff]
    %v1045 = vld [vmem:[#allocation2 + $0x280] sm:$0xff]
    %v1046 = vld [vmem:[#allocation2 + $0x288] sm:$0xff]
    %v1047 = vld [vmem:[#allocation2 + $0x290] sm:$0xff]
    %v1048 = vld [vmem:[#allocation2 + $0x298] sm:$0xff]
    %v1049 = vld [vmem:[#allocation2 + $0x2a0] sm:$0xff]
    %v1050 = vld [vmem:[#allocation2 + $0x2a8] sm:$0xff]
    %v1051 = vld [vmem:[#allocation2 + $0x2b0] sm:$0xff]
    %v1052 = vld [vmem:[#allocation2 + $0x2b8] sm:$0xff]
    %v1053 = vld [vmem:[#allocation2 + $0x2c0] sm:$0xff]
    %v1054 = vld [vmem:[#allocation2 + $0x2c8] sm:$0xff]
    %v1055 = vld [vmem:[#allocation2 + $0x2d0] sm:$0xff]
    %v1056 = vld [vmem:[#allocation2 + $0x2d8] sm:$0xff]
    %v1057 = vld [vmem:[#allocation2 + $0x2e0] sm:$0xff]
    %v1058 = vld [vmem:[#allocation2 + $0x2e8] sm:$0xff]
    %v1059 = vld [vmem:[#allocation2 + $0x2f0] sm:$0xff]
    %v1060 = vld [vmem:[#allocation2 + $0x2f8] sm:$0xff]
    %v1061 = vld [vmem:[#allocation2 + $0x300] sm:$0xff]
    %v1062 = vld [vmem:[#allocation2 + $0x308] sm:$0xff]
    %v1063 = vld [vmem:[#allocation2 + $0x310] sm:$0xff]
    %v1064 = vld [vmem:[#allocation2 + $0x318] sm:$0xff]
    %v1065 = vld [vmem:[#allocation2 + $0x320] sm:$0xff]
    %v1066 = vld [vmem:[#allocation2 + $0x328] sm:$0xff]
    %v1067 = vld [vmem:[#allocation2 + $0x330] sm:$0xff]
    %v1068 = vld [vmem:[#allocation2 + $0x338] sm:$0xff]
    %v1069 = vld [vmem:[#allocation2 + $0x340] sm:$0xff]
    %v1070 = vld [vmem:[#allocation2 + $0x348] sm:$0xff]
    %v1071 = vld [vmem:[#allocation2 + $0x350] sm:$0xff]
    %v1072 = vld [vmem:[#allocation2 + $0x358] sm:$0xff]
    %v1073 = vld [vmem:[#allocation2 + $0x360] sm:$0xff]
    %v1074 = vld [vmem:[#allocation2 + $0x368] sm:$0xff]
    %v1075 = vld [vmem:[#allocation2 + $0x370] sm:$0xff]
    %v1076 = vld [vmem:[#allocation2 + $0x378] sm:$0xff]
    %v1077 = vld [vmem:[#allocation2 + $0x380] sm:$0xff]
    %v1078 = vld [vmem:[#allocation2 + $0x388] sm:$0xff]
    %v1079 = vld [vmem:[#allocation2 + $0x390] sm:$0xff]
    %v1080 = vld [vmem:[#allocation2 + $0x398] sm:$0xff]
    %v1081 = vld [vmem:[#allocation2 + $0x3a0] sm:$0xff]
    %v1082 = vld [vmem:[#allocation2 + $0x3a8] sm:$0xff]
    %v1083 = vld [vmem:[#allocation2 + $0x3b0] sm:$0xff]
    %v1084 = vld [vmem:[#allocation2 + $0x3b8] sm:$0xff]
    %v1085 = vld [vmem:[#allocation2 + $0x3c0] sm:$0xff]
    %v1086 = vld [vmem:[#allocation2 + $0x3c8] sm:$0xff]
    %v1087 = vld [vmem:[#allocation2 + $0x3d0] sm:$0xff]
    %v1088 = vld [vmem:[#allocation2 + $0x3d8] sm:$0xff]
    %v1089 = vld [vmem:[#allocation2 + $0x3e0] sm:$0xff]
    %v1090 = vld [vmem:[#allocation2 + $0x3e8] sm:$0xff]
    %v1091 = vld [vmem:[#allocation2 + $0x3f0] sm:$0xff]
    %v1092 = vld [vmem:[#allocation2 + $0x3f8] sm:$0xff]
    %v1093 = vld [vmem:[%s8] sm:$0xf]
    %v1095 = vperm.slane %v1093, 0
    %v1096 = vperm.slane %v1093, 1
    %v1097 = vperm.slane %v1093, 2
    %v1098 = vperm.slane %v1093, 3
    %1103 = vmatpush.msra.mxu0 %v1025
    %1104 = vmatpush.msra.mxu0 %v1021
    %1105 = vmatpush.msra.mxu0 %v1017
    %1106 = vmatpush.msra.mxu0 %v1013
    %1107 = vmatpush.msra.mxu0 %v1009
    %1108 = vmatpush.msra.mxu0 %v1005
    %1109 = vmatpush.msra.mxu0 %v1001
    %1110 = vmatpush.msra.mxu0 %v997
    %1111 = vmatpush.msra.mxu0 %v993
    %1112 = vmatpush.msra.mxu0 %v989
    %1113 = vmatpush.msra.mxu0 %v985
    %1114 = vmatpush.msra.mxu0 %v981
    %1115 = vmatpush.msra.mxu0 %v977
    %1116 = vmatpush.msra.mxu0 %v973
    %1117 = vmatpush.msra.mxu0 %v969
    %1118 = vmatpush.msra.mxu0 %v965
    %1119 = vmatmul.f32.gmra.mxu0 %v676
    %v1120 = vpop.f32.mrf.mxu0
    %v1121 = vadd.f32 %v1095, %v1120
    %1122 = vdwg.mxu0
    %1123 = vmatpush.msra.mxu0 %v1089
    %1124 = vmatpush.msra.mxu0 %v1085
    %1125 = vmatpush.msra.mxu0 %v1081
    %1126 = vmatpush.msra.mxu0 %v1077
    %1127 = vmatpush.msra.mxu0 %v1073
    %1128 = vmatpush.msra.mxu0 %v1069
    %1129 = vmatpush.msra.mxu0 %v1065
    %1130 = vmatpush.msra.mxu0 %v1061
    %1131 = vmatpush.msra.mxu0 %v1057
    %1132 = vmatpush.msra.mxu0 %v1053
    %1133 = vmatpush.msra.mxu0 %v1049
    %1134 = vmatpush.msra.mxu0 %v1045
    %1135 = vmatpush.msra.mxu0 %v1041
    %1136 = vmatpush.msra.mxu0 %v1037
    %1137 = vmatpush.msra.mxu0 %v1033
    %1138 = vmatpush.msra.mxu0 %v1029
    %1139 = vmatmul.f32.gmra.mxu0 %v677
    %v1140 = vpop.f32.mrf.mxu0
    %v1141 = vadd.f32 %v1121, %v1140
    %1142 = vdwg.mxu0
    %1143 = vmatpush.msra.mxu0 %v1026
    %1144 = vmatpush.msra.mxu0 %v1022
    %1145 = vmatpush.msra.mxu0 %v1018
    %1146 = vmatpush.msra.mxu0 %v1014
    %1147 = vmatpush.msra.mxu0 %v1010
    %1148 = vmatpush.msra.mxu0 %v1006
    %1149 = vmatpush.msra.mxu0 %v1002
    %1150 = vmatpush.msra.mxu0 %v998
    %1151 = vmatpush.msra.mxu0 %v994
    %1152 = vmatpush.msra.mxu0 %v990
    %1153 = vmatpush.msra.mxu0 %v986
    %1154 = vmatpush.msra.mxu0 %v982
    %1155 = vmatpush.msra.mxu0 %v978
    %1156 = vmatpush.msra.mxu0 %v974
    %1157 = vmatpush.msra.mxu0 %v970
    %1158 = vmatpush.msra.mxu0 %v966
    %1159 = vmatmul.f32.gmra.mxu0 %v676
    %v1160 = vpop.f32.mrf.mxu0
    %v1161 = vadd.f32 %v1096, %v1160
    %1162 = vdwg.mxu0
    %1163 = vmatpush.msra.mxu0 %v1090
    %1164 = vmatpush.msra.mxu0 %v1086
    %1165 = vmatpush.msra.mxu0 %v1082
    %1166 = vmatpush.msra.mxu0 %v1078
    %1167 = vmatpush.msra.mxu0 %v1074
    %1168 = vmatpush.msra.mxu0 %v1070
    %1169 = vmatpush.msra.mxu0 %v1066
    %1170 = vmatpush.msra.mxu0 %v1062
    %1171 = vmatpush.msra.mxu0 %v1058
    %1172 = vmatpush.msra.mxu0 %v1054
    %1173 = vmatpush.msra.mxu0 %v1050
    %1174 = vmatpush.msra.mxu0 %v1046
    %1175 = vmatpush.msra.mxu0 %v1042
    %1176 = vmatpush.msra.mxu0 %v1038
    %1177 = vmatpush.msra.mxu0 %v1034
    %1178 = vmatpush.msra.mxu0 %v1030
    %1179 = vmatmul.f32.gmra.mxu0 %v677
    %v1180 = vpop.f32.mrf.mxu0
    %v1181 = vadd.f32 %v1161, %v1180
    %1182 = vdwg.mxu0
    %1183 = vmatpush.msra.mxu0 %v1027
    %1184 = vmatpush.msra.mxu0 %v1023
    %1185 = vmatpush.msra.mxu0 %v1019
    %1186 = vmatpush.msra.mxu0 %v1015
    %1187 = vmatpush.msra.mxu0 %v1011
    %1188 = vmatpush.msra.mxu0 %v1007
    %1189 = vmatpush.msra.mxu0 %v1003
    %1190 = vmatpush.msra.mxu0 %v999
    %1191 = vmatpush.msra.mxu0 %v995
    %1192 = vmatpush.msra.mxu0 %v991
    %1193 = vmatpush.msra.mxu0 %v987
    %1194 = vmatpush.msra.mxu0 %v983
    %1195 = vmatpush.msra.mxu0 %v979
    %1196 = vmatpush.msra.mxu0 %v975
    %1197 = vmatpush.msra.mxu0 %v971
    %1198 = vmatpush.msra.mxu0 %v967
    %1199 = vmatmul.f32.gmra.mxu0 %v676
    %v1200 = vpop.f32.mrf.mxu0
    %v1201 = vadd.f32 %v1097, %v1200
    %1202 = vdwg.mxu0
    %1203 = vmatpush.msra.mxu0 %v1091
    %1204 = vmatpush.msra.mxu0 %v1087
    %1205 = vmatpush.msra.mxu0 %v1083
    %1206 = vmatpush.msra.mxu0 %v1079
    %1207 = vmatpush.msra.mxu0 %v1075
    %1208 = vmatpush.msra.mxu0 %v1071
    %1209 = vmatpush.msra.mxu0 %v1067
    %1210 = vmatpush.msra.mxu0 %v1063
    %1211 = vmatpush.msra.mxu0 %v1059
    %1212 = vmatpush.msra.mxu0 %v1055
    %1213 = vmatpush.msra.mxu0 %v1051
    %1214 = vmatpush.msra.mxu0 %v1047
    %1215 = vmatpush.msra.mxu0 %v1043
    %1216 = vmatpush.msra.mxu0 %v1039
    %1217 = vmatpush.msra.mxu0 %v1035
    %1218 = vmatpush.msra.mxu0 %v1031
    %1219 = vmatmul.f32.gmra.mxu0 %v677
    %v1220 = vpop.f32.mrf.mxu0
    %v1221 = vadd.f32 %v1201, %v1220
    %1222 = vdwg.mxu0
    %1223 = vmatpush.msra.mxu0 %v1028
    %1224 = vmatpush.msra.mxu0 %v1024
    %1225 = vmatpush.msra.mxu0 %v1020
    %1226 = vmatpush.msra.mxu0 %v1016
    %1227 = vmatpush.msra.mxu0 %v1012
    %1228 = vmatpush.msra.mxu0 %v1008
    %1229 = vmatpush.msra.mxu0 %v1004
    %1230 = vmatpush.msra.mxu0 %v1000
    %1231 = vmatpush.msra.mxu0 %v996
    %1232 = vmatpush.msra.mxu0 %v992
    %1233 = vmatpush.msra.mxu0 %v988
    %1234 = vmatpush.msra.mxu0 %v984
    %1235 = vmatpush.msra.mxu0 %v980
    %1236 = vmatpush.msra.mxu0 %v976
    %1237 = vmatpush.msra.mxu0 %v972
    %1238 = vmatpush.msra.mxu0 %v968
    %1239 = vmatmul.f32.gmra.mxu0 %v676
    %v1240 = vpop.f32.mrf.mxu0
    %v1241 = vadd.f32 %v1098, %v1240
    %1242 = vdwg.mxu0
    %1243 = vmatpush.msra.mxu0 %v1092
    %1244 = vmatpush.msra.mxu0 %v1088
    %1245 = vmatpush.msra.mxu0 %v1084
    %1246 = vmatpush.msra.mxu0 %v1080
    %1247 = vmatpush.msra.mxu0 %v1076
    %1248 = vmatpush.msra.mxu0 %v1072
    %1249 = vmatpush.msra.mxu0 %v1068
    %1250 = vmatpush.msra.mxu0 %v1064
    %1251 = vmatpush.msra.mxu0 %v1060
    %1252 = vmatpush.msra.mxu0 %v1056
    %1253 = vmatpush.msra.mxu0 %v1052
    %1254 = vmatpush.msra.mxu0 %v1048
    %1255 = vmatpush.msra.mxu0 %v1044
    %1256 = vmatpush.msra.mxu0 %v1040
    %1257 = vmatpush.msra.mxu0 %v1036
    %1258 = vmatpush.msra.mxu0 %v1032
    %1259 = vmatmul.f32.gmra.mxu0 %v677
    %v1260 = vpop.f32.mrf.mxu0
    %v1261 = vadd.f32 %v1241, %v1260
    %1262 = vdwg.mxu0
    %v1263 = vsel %vm592, %v1141, 0.0
    %v1264 = vrot.slane %v1263, 4
    %v1265 = vadd.f32 %v1263, %v1264
    %v1266 = vrot.slane %v1265, 2
    %v1267 = vadd.f32 %v1265, %v1266
    %v1268 = vrot.slane %v1267, 1
    %v1269 = vadd.f32 %v1267, %v1268
    %v1270 = vsel %vm592, %v1181, 0.0
    %v1271 = vrot.slane %v1270, 4
    %v1272 = vadd.f32 %v1270, %v1271
    %v1273 = vrot.slane %v1272, 2
    %v1274 = vadd.f32 %v1272, %v1273
    %v1275 = vrot.slane %v1274, 1
    %v1276 = vadd.f32 %v1274, %v1275
    %v1277 = vsel %vm592, %v1221, 0.0
    %v1278 = vrot.slane %v1277, 4
    %v1279 = vadd.f32 %v1277, %v1278
    %v1280 = vrot.slane %v1279, 2
    %v1281 = vadd.f32 %v1279, %v1280
    %v1282 = vrot.slane %v1281, 1
    %v1283 = vadd.f32 %v1281, %v1282
    %v1284 = vsel %vm592, %v1261, 0.0
    %v1285 = vrot.slane %v1284, 4
    %v1286 = vadd.f32 %v1284, %v1285
    %v1287 = vrot.slane %v1286, 2
    %v1288 = vadd.f32 %v1286, %v1287
    %v1289 = vrot.slane %v1288, 1
    %v1290 = vadd.f32 %v1288, %v1289
    %v1291 = vmul.f32 %v1269, %v613
    %v1292 = vmul.f32 %v1276, %v613
    %v1293 = vmul.f32 %v1283, %v613
    %v1294 = vmul.f32 %v1290, %v613
    %v1295 = vsub.f32 %v1141, %v1291
    %v1296 = vsub.f32 %v1181, %v1292
    %v1297 = vsub.f32 %v1221, %v1293
    %v1298 = vsub.f32 %v1261, %v1294
    %v1299 = vmul.f32 %v1295, %v1295
    %v1300 = vmul.f32 %v1296, %v1296
    %v1301 = vmul.f32 %v1297, %v1297
    %v1302 = vmul.f32 %v1298, %v1298
    %v1303 = vsel %vm592, %v1299, 0.0
    %v1304 = vrot.slane %v1303, 4
    %v1305 = vadd.f32 %v1303, %v1304
    %v1306 = vrot.slane %v1305, 2
    %v1307 = vadd.f32 %v1305, %v1306
    %v1308 = vrot.slane %v1307, 1
    %v1309 = vadd.f32 %v1307, %v1308
    %v1310 = vsel %vm592, %v1300, 0.0
    %v1311 = vrot.slane %v1310, 4
    %v1312 = vadd.f32 %v1310, %v1311
    %v1313 = vrot.slane %v1312, 2
    %v1314 = vadd.f32 %v1312, %v1313
    %v1315 = vrot.slane %v1314, 1
    %v1316 = vadd.f32 %v1314, %v1315
    %v1317 = vsel %vm592, %v1301, 0.0
    %v1318 = vrot.slane %v1317, 4
    %v1319 = vadd.f32 %v1317, %v1318
    %v1320 = vrot.slane %v1319, 2
    %v1321 = vadd.f32 %v1319, %v1320
    %v1322 = vrot.slane %v1321, 1
    %v1323 = vadd.f32 %v1321, %v1322
    %v1324 = vsel %vm592, %v1302, 0.0
    %v1325 = vrot.slane %v1324, 4
    %v1326 = vadd.f32 %v1324, %v1325
    %v1327 = vrot.slane %v1326, 2
    %v1328 = vadd.f32 %v1326, %v1327
    %v1329 = vrot.slane %v1328, 1
    %v1330 = vadd.f32 %v1328, %v1329
    %v1331 = vmul.f32 %v1309, %v613
    %v1332 = vmul.f32 %v1316, %v613
    %v1333 = vmul.f32 %v1323, %v613
    %v1334 = vmul.f32 %v1330, %v613
    %v1335 = vld [vmem:[%s9] sm:$0xf]
    %v1337 = vperm.slane %v1335, 0
    %v1338 = vperm.slane %v1335, 1
    %v1339 = vperm.slane %v1335, 2
    %v1340 = vperm.slane %v1335, 3
    %v1345 = vmul.f32 %v1337, %v1295
    %v1346 = vmul.f32 %v1338, %v1296
    %v1347 = vmul.f32 %v1339, %v1297
    %v1348 = vmul.f32 %v1340, %v1298
    %v1349 = vadd.f32 %v1331, 1e-05
    %v1350 = vadd.f32 %v1332, 1e-05
    %v1351 = vadd.f32 %v1333, 1e-05
    %v1352 = vadd.f32 %v1334, 1e-05
    %v1353 = vrsqrt.pop %v1349
    %v1354 = vmul.f32 %v1353, %v1349
    %v1355 = vmul.f32 %v1354, %v1353
    %v1356 = vmul.f32 0.5, %v1355
    %v1357 = vsub.f32 1.5, %v1356
    %v1358 = vmul.f32 %v1353, %v1357
    %vm1359 = vweird.f32 %v1349
    %vm1360 = vweird.f32 %v1353
    %vm1361 = vmor %vm1359, %vm1360
    %v1362 = vsel %vm1361, %v1353, %v1358
    %v1363 = vrsqrt.pop %v1350
    %v1364 = vmul.f32 %v1363, %v1350
    %v1365 = vmul.f32 %v1364, %v1363
    %v1366 = vmul.f32 0.5, %v1365
    %v1367 = vsub.f32 1.5, %v1366
    %v1368 = vmul.f32 %v1363, %v1367
    %vm1369 = vweird.f32 %v1350
    %vm1370 = vweird.f32 %v1363
    %vm1371 = vmor %vm1369, %vm1370
    %v1372 = vsel %vm1371, %v1363, %v1368
    %v1373 = vrsqrt.pop %v1351
    %v1374 = vmul.f32 %v1373, %v1351
    %v1375 = vmul.f32 %v1374, %v1373
    %v1376 = vmul.f32 0.5, %v1375
    %v1377 = vsub.f32 1.5, %v1376
    %v1378 = vmul.f32 %v1373, %v1377
    %vm1379 = vweird.f32 %v1351
    %vm1380 = vweird.f32 %v1373
    %vm1381 = vmor %vm1379, %vm1380
    %v1382 = vsel %vm1381, %v1373, %v1378
    %v1383 = vrsqrt.pop %v1352
    %v1384 = vmul.f32 %v1383, %v1352
    %v1385 = vmul.f32 %v1384, %v1383
    %v1386 = vmul.f32 0.5, %v1385
    %v1387 = vsub.f32 1.5, %v1386
    %v1388 = vmul.f32 %v1383, %v1387
    %vm1389 = vweird.f32 %v1352
    %vm1390 = vweird.f32 %v1383
    %vm1391 = vmor %vm1389, %vm1390
    %v1392 = vsel %vm1391, %v1383, %v1388
    %v1393 = vmul.f32 %v1345, %v1362
    %v1394 = vmul.f32 %v1346, %v1372
    %v1395 = vmul.f32 %v1347, %v1382
    %v1396 = vmul.f32 %v1348, %v1392
    %v1397 = vld [vmem:[%s10] sm:$0xf]
    %v1399 = vperm.slane %v1397, 0
    %v1400 = vperm.slane %v1397, 1
    %v1401 = vperm.slane %v1397, 2
    %v1402 = vperm.slane %v1397, 3
    %v1407 = vadd.f32 %v1393, %v1399
    %v1408 = vadd.f32 %v1394, %v1400
    %v1409 = vadd.f32 %v1395, %v1401
    %v1410 = vadd.f32 %v1396, %v1402
    %v1411 = vmax.f32 %v1407, 0.0
    %v1412 = vmax.f32 %v1408, 0.0
    %v1413 = vmax.f32 %v1409, 0.0
    %v1414 = vmax.f32 %v1410, 0.0
    %s1415 = smul.u32 4, 64
    %s1416 = smul.u32 %s1415, 3
    %s1417 = sshll.u32 %s1416, 4
    %1418 = dma.done %s114, %s1417
    %v1419 = vld [vmem:[#allocation3] sm:$0xff]
    %v1420 = vld [vmem:[#allocation3 + $0x8] sm:$0xf]
    %v1421 = vld [vmem:[#allocation3 + $0xc] sm:$0xff]
    %v1422 = vld [vmem:[#allocation3 + $0x14] sm:$0xf]
    %v1423 = vld [vmem:[#allocation3 + $0x18] sm:$0xff]
    %v1424 = vld [vmem:[#allocation3 + $0x20] sm:$0xf]
    %v1425 = vld [vmem:[#allocation3 + $0x24] sm:$0xff]
    %v1426 = vld [vmem:[#allocation3 + $0x2c] sm:$0xf]
    %v1427 = vld [vmem:[#allocation3 + $0x30] sm:$0xff]
    %v1428 = vld [vmem:[#allocation3 + $0x38] sm:$0xf]
    %v1429 = vld [vmem:[#allocation3 + $0x3c] sm:$0xff]
    %v1430 = vld [vmem:[#allocation3 + $0x44] sm:$0xf]
    %v1431 = vld [vmem:[#allocation3 + $0x48] sm:$0xff]
    %v1432 = vld [vmem:[#allocation3 + $0x50] sm:$0xf]
    %v1433 = vld [vmem:[#allocation3 + $0x54] sm:$0xff]
    %v1434 = vld [vmem:[#allocation3 + $0x5c] sm:$0xf]
    %v1435 = vld [vmem:[#allocation3 + $0x60] sm:$0xff]
    %v1436 = vld [vmem:[#allocation3 + $0x68] sm:$0xf]
    %v1437 = vld [vmem:[#allocation3 + $0x6c] sm:$0xff]
    %v1438 = vld [vmem:[#allocation3 + $0x74] sm:$0xf]
    %v1439 = vld [vmem:[#allocation3 + $0x78] sm:$0xff]
    %v1440 = vld [vmem:[#allocation3 + $0x80] sm:$0xf]
    %v1441 = vld [vmem:[#allocation3 + $0x84] sm:$0xff]
    %v1442 = vld [vmem:[#allocation3 + $0x8c] sm:$0xf]
    %v1443 = vld [vmem:[#allocation3 + $0x90] sm:$0xff]
    %v1444 = vld [vmem:[#allocation3 + $0x98] sm:$0xf]
    %v1445 = vld [vmem:[#allocation3 + $0x9c] sm:$0xff]
    %v1446 = vld [vmem:[#allocation3 + $0xa4] sm:$0xf]
    %v1447 = vld [vmem:[#allocation3 + $0xa8] sm:$0xff]
    %v1448 = vld [vmem:[#allocation3 + $0xb0] sm:$0xf]
    %v1449 = vld [vmem:[#allocation3 + $0xb4] sm:$0xff]
    %v1450 = vld [vmem:[#allocation3 + $0xbc] sm:$0xf]
    %v1451 = vld [vmem:[#allocation3 + $0xc0] sm:$0xff]
    %v1452 = vld [vmem:[#allocation3 + $0xc8] sm:$0xf]
    %v1453 = vld [vmem:[#allocation3 + $0xcc] sm:$0xff]
    %v1454 = vld [vmem:[#allocation3 + $0xd4] sm:$0xf]
    %v1455 = vld [vmem:[#allocation3 + $0xd8] sm:$0xff]
    %v1456 = vld [vmem:[#allocation3 + $0xe0] sm:$0xf]
    %v1457 = vld [vmem:[#allocation3 + $0xe4] sm:$0xff]
    %v1458 = vld [vmem:[#allocation3 + $0xec] sm:$0xf]
    %v1459 = vld [vmem:[#allocation3 + $0xf0] sm:$0xff]
    %v1460 = vld [vmem:[#allocation3 + $0xf8] sm:$0xf]
    %v1461 = vld [vmem:[#allocation3 + $0xfc] sm:$0xff]
    %v1462 = vld [vmem:[#allocation3 + $0x104] sm:$0xf]
    %v1463 = vld [vmem:[#allocation3 + $0x108] sm:$0xff]
    %v1464 = vld [vmem:[#allocation3 + $0x110] sm:$0xf]
    %v1465 = vld [vmem:[#allocation3 + $0x114] sm:$0xff]
    %v1466 = vld [vmem:[#allocation3 + $0x11c] sm:$0xf]
    %v1467 = vld [vmem:[#allocation3 + $0x120] sm:$0xff]
    %v1468 = vld [vmem:[#allocation3 + $0x128] sm:$0xf]
    %v1469 = vld [vmem:[#allocation3 + $0x12c] sm:$0xff]
    %v1470 = vld [vmem:[#allocation3 + $0x134] sm:$0xf]
    %v1471 = vld [vmem:[#allocation3 + $0x138] sm:$0xff]
    %v1472 = vld [vmem:[#allocation3 + $0x140] sm:$0xf]
    %v1473 = vld [vmem:[#allocation3 + $0x144] sm:$0xff]
    %v1474 = vld [vmem:[#allocation3 + $0x14c] sm:$0xf]
    %v1475 = vld [vmem:[#allocation3 + $0x150] sm:$0xff]
    %v1476 = vld [vmem:[#allocation3 + $0x158] sm:$0xf]
    %v1477 = vld [vmem:[#allocation3 + $0x15c] sm:$0xff]
    %v1478 = vld [vmem:[#allocation3 + $0x164] sm:$0xf]
    %v1479 = vld [vmem:[#allocation3 + $0x168] sm:$0xff]
    %v1480 = vld [vmem:[#allocation3 + $0x170] sm:$0xf]
    %v1481 = vld [vmem:[#allocation3 + $0x174] sm:$0xff]
    %v1482 = vld [vmem:[#allocation3 + $0x17c] sm:$0xf]
    %v1483 = vld [vmem:[#allocation3 + $0x180] sm:$0xff]
    %v1484 = vld [vmem:[#allocation3 + $0x188] sm:$0xf]
    %v1485 = vld [vmem:[#allocation3 + $0x18c] sm:$0xff]
    %v1486 = vld [vmem:[#allocation3 + $0x194] sm:$0xf]
    %v1487 = vld [vmem:[#allocation3 + $0x198] sm:$0xff]
    %v1488 = vld [vmem:[#allocation3 + $0x1a0] sm:$0xf]
    %v1489 = vld [vmem:[#allocation3 + $0x1a4] sm:$0xff]
    %v1490 = vld [vmem:[#allocation3 + $0x1ac] sm:$0xf]
    %v1491 = vld [vmem:[#allocation3 + $0x1b0] sm:$0xff]
    %v1492 = vld [vmem:[#allocation3 + $0x1b8] sm:$0xf]
    %v1493 = vld [vmem:[#allocation3 + $0x1bc] sm:$0xff]
    %v1494 = vld [vmem:[#allocation3 + $0x1c4] sm:$0xf]
    %v1495 = vld [vmem:[#allocation3 + $0x1c8] sm:$0xff]
    %v1496 = vld [vmem:[#allocation3 + $0x1d0] sm:$0xf]
    %v1497 = vld [vmem:[#allocation3 + $0x1d4] sm:$0xff]
    %v1498 = vld [vmem:[#allocation3 + $0x1dc] sm:$0xf]
    %v1499 = vld [vmem:[#allocation3 + $0x1e0] sm:$0xff]
    %v1500 = vld [vmem:[#allocation3 + $0x1e8] sm:$0xf]
    %v1501 = vld [vmem:[#allocation3 + $0x1ec] sm:$0xff]
    %v1502 = vld [vmem:[#allocation3 + $0x1f4] sm:$0xf]
    %v1503 = vld [vmem:[#allocation3 + $0x1f8] sm:$0xff]
    %v1504 = vld [vmem:[#allocation3 + $0x200] sm:$0xf]
    %v1505 = vld [vmem:[#allocation3 + $0x204] sm:$0xff]
    %v1506 = vld [vmem:[#allocation3 + $0x20c] sm:$0xf]
    %v1507 = vld [vmem:[#allocation3 + $0x210] sm:$0xff]
    %v1508 = vld [vmem:[#allocation3 + $0x218] sm:$0xf]
    %v1509 = vld [vmem:[#allocation3 + $0x21c] sm:$0xff]
    %v1510 = vld [vmem:[#allocation3 + $0x224] sm:$0xf]
    %v1511 = vld [vmem:[#allocation3 + $0x228] sm:$0xff]
    %v1512 = vld [vmem:[#allocation3 + $0x230] sm:$0xf]
    %v1513 = vld [vmem:[#allocation3 + $0x234] sm:$0xff]
    %v1514 = vld [vmem:[#allocation3 + $0x23c] sm:$0xf]
    %v1515 = vld [vmem:[#allocation3 + $0x240] sm:$0xff]
    %v1516 = vld [vmem:[#allocation3 + $0x248] sm:$0xf]
    %v1517 = vld [vmem:[#allocation3 + $0x24c] sm:$0xff]
    %v1518 = vld [vmem:[#allocation3 + $0x254] sm:$0xf]
    %v1519 = vld [vmem:[#allocation3 + $0x258] sm:$0xff]
    %v1520 = vld [vmem:[#allocation3 + $0x260] sm:$0xf]
    %v1521 = vld [vmem:[#allocation3 + $0x264] sm:$0xff]
    %v1522 = vld [vmem:[#allocation3 + $0x26c] sm:$0xf]
    %v1523 = vld [vmem:[#allocation3 + $0x270] sm:$0xff]
    %v1524 = vld [vmem:[#allocation3 + $0x278] sm:$0xf]
    %v1525 = vld [vmem:[#allocation3 + $0x27c] sm:$0xff]
    %v1526 = vld [vmem:[#allocation3 + $0x284] sm:$0xf]
    %v1527 = vld [vmem:[#allocation3 + $0x288] sm:$0xff]
    %v1528 = vld [vmem:[#allocation3 + $0x290] sm:$0xf]
    %v1529 = vld [vmem:[#allocation3 + $0x294] sm:$0xff]
    %v1530 = vld [vmem:[#allocation3 + $0x29c] sm:$0xf]
    %v1531 = vld [vmem:[#allocation3 + $0x2a0] sm:$0xff]
    %v1532 = vld [vmem:[#allocation3 + $0x2a8] sm:$0xf]
    %v1533 = vld [vmem:[#allocation3 + $0x2ac] sm:$0xff]
    %v1534 = vld [vmem:[#allocation3 + $0x2b4] sm:$0xf]
    %v1535 = vld [vmem:[#allocation3 + $0x2b8] sm:$0xff]
    %v1536 = vld [vmem:[#allocation3 + $0x2c0] sm:$0xf]
    %v1537 = vld [vmem:[#allocation3 + $0x2c4] sm:$0xff]
    %v1538 = vld [vmem:[#allocation3 + $0x2cc] sm:$0xf]
    %v1539 = vld [vmem:[#allocation3 + $0x2d0] sm:$0xff]
    %v1540 = vld [vmem:[#allocation3 + $0x2d8] sm:$0xf]
    %v1541 = vld [vmem:[#allocation3 + $0x2dc] sm:$0xff]
    %v1542 = vld [vmem:[#allocation3 + $0x2e4] sm:$0xf]
    %v1543 = vld [vmem:[#allocation3 + $0x2e8] sm:$0xff]
    %v1544 = vld [vmem:[#allocation3 + $0x2f0] sm:$0xf]
    %v1545 = vld [vmem:[#allocation3 + $0x2f4] sm:$0xff]
    %v1546 = vld [vmem:[#allocation3 + $0x2fc] sm:$0xf]
    %v1547 = vunpack.c.l.bf16 %v1419
    %v1548 = vunpack.c.h.bf16 %v1419
    %v1549 = vunpack.c.l.bf16 %v1420
    %v1550 = vunpack.c.l.bf16 %v1421
    %v1551 = vunpack.c.h.bf16 %v1421
    %v1552 = vunpack.c.l.bf16 %v1422
    %v1553 = vunpack.c.l.bf16 %v1423
    %v1554 = vunpack.c.h.bf16 %v1423
    %v1555 = vunpack.c.l.bf16 %v1424
    %v1556 = vunpack.c.l.bf16 %v1425
    %v1557 = vunpack.c.h.bf16 %v1425
    %v1558 = vunpack.c.l.bf16 %v1426
    %v1559 = vunpack.c.l.bf16 %v1427
    %v1560 = vunpack.c.h.bf16 %v1427
    %v1561 = vunpack.c.l.bf16 %v1428
    %v1562 = vunpack.c.l.bf16 %v1429
    %v1563 = vunpack.c.h.bf16 %v1429
    %v1564 = vunpack.c.l.bf16 %v1430
    %v1565 = vunpack.c.l.bf16 %v1431
    %v1566 = vunpack.c.h.bf16 %v1431
    %v1567 = vunpack.c.l.bf16 %v1432
    %v1568 = vunpack.c.l.bf16 %v1433
    %v1569 = vunpack.c.h.bf16 %v1433
    %v1570 = vunpack.c.l.bf16 %v1434
    %v1571 = vunpack.c.l.bf16 %v1435
    %v1572 = vunpack.c.h.bf16 %v1435
    %v1573 = vunpack.c.l.bf16 %v1436
    %v1574 = vunpack.c.l.bf16 %v1437
    %v1575 = vunpack.c.h.bf16 %v1437
    %v1576 = vunpack.c.l.bf16 %v1438
    %v1577 = vunpack.c.l.bf16 %v1439
    %v1578 = vunpack.c.h.bf16 %v1439
    %v1579 = vunpack.c.l.bf16 %v1440
    %v1580 = vunpack.c.l.bf16 %v1441
    %v1581 = vunpack.c.h.bf16 %v1441
    %v1582 = vunpack.c.l.bf16 %v1442
    %v1583 = vunpack.c.l.bf16 %v1443
    %v1584 = vunpack.c.h.bf16 %v1443
    %v1585 = vunpack.c.l.bf16 %v1444
    %v1586 = vunpack.c.l.bf16 %v1445
    %v1587 = vunpack.c.h.bf16 %v1445
    %v1588 = vunpack.c.l.bf16 %v1446
    %v1589 = vunpack.c.l.bf16 %v1447
    %v1590 = vunpack.c.h.bf16 %v1447
    %v1591 = vunpack.c.l.bf16 %v1448
    %v1592 = vunpack.c.l.bf16 %v1449
    %v1593 = vunpack.c.h.bf16 %v1449
    %v1594 = vunpack.c.l.bf16 %v1450
    %v1595 = vunpack.c.l.bf16 %v1451
    %v1596 = vunpack.c.h.bf16 %v1451
    %v1597 = vunpack.c.l.bf16 %v1452
    %v1598 = vunpack.c.l.bf16 %v1453
    %v1599 = vunpack.c.h.bf16 %v1453
    %v1600 = vunpack.c.l.bf16 %v1454
    %v1601 = vunpack.c.l.bf16 %v1455
    %v1602 = vunpack.c.h.bf16 %v1455
    %v1603 = vunpack.c.l.bf16 %v1456
    %v1604 = vunpack.c.l.bf16 %v1457
    %v1605 = vunpack.c.h.bf16 %v1457
    %v1606 = vunpack.c.l.bf16 %v1458
    %v1607 = vunpack.c.l.bf16 %v1459
    %v1608 = vunpack.c.h.bf16 %v1459
    %v1609 = vunpack.c.l.bf16 %v1460
    %v1610 = vunpack.c.l.bf16 %v1461
    %v1611 = vunpack.c.h.bf16 %v1461
    %v1612 = vunpack.c.l.bf16 %v1462
    %v1613 = vunpack.c.l.bf16 %v1463
    %v1614 = vunpack.c.h.bf16 %v1463
    %v1615 = vunpack.c.l.bf16 %v1464
    %v1616 = vunpack.c.l.bf16 %v1465
    %v1617 = vunpack.c.h.bf16 %v1465
    %v1618 = vunpack.c.l.bf16 %v1466
    %v1619 = vunpack.c.l.bf16 %v1467
    %v1620 = vunpack.c.h.bf16 %v1467
    %v1621 = vunpack.c.l.bf16 %v1468
    %v1622 = vunpack.c.l.bf16 %v1469
    %v1623 = vunpack.c.h.bf16 %v1469
    %v1624 = vunpack.c.l.bf16 %v1470
    %v1625 = vunpack.c.l.bf16 %v1471
    %v1626 = vunpack.c.h.bf16 %v1471
    %v1627 = vunpack.c.l.bf16 %v1472
    %v1628 = vunpack.c.l.bf16 %v1473
    %v1629 = vunpack.c.h.bf16 %v1473
    %v1630 = vunpack.c.l.bf16 %v1474
    %v1631 = vunpack.c.l.bf16 %v1475
    %v1632 = vunpack.c.h.bf16 %v1475
    %v1633 = vunpack.c.l.bf16 %v1476
    %v1634 = vunpack.c.l.bf16 %v1477
    %v1635 = vunpack.c.h.bf16 %v1477
    %v1636 = vunpack.c.l.bf16 %v1478
    %v1637 = vunpack.c.l.bf16 %v1479
    %v1638 = vunpack.c.h.bf16 %v1479
    %v1639 = vunpack.c.l.bf16 %v1480
    %v1640 = vunpack.c.l.bf16 %v1481
    %v1641 = vunpack.c.h.bf16 %v1481
    %v1642 = vunpack.c.l.bf16 %v1482
    %v1643 = vunpack.c.l.bf16 %v1483
    %v1644 = vunpack.c.h.bf16 %v1483
    %v1645 = vunpack.c.l.bf16 %v1484
    %v1646 = vunpack.c.l.bf16 %v1485
    %v1647 = vunpack.c.h.bf16 %v1485
    %v1648 = vunpack.c.l.bf16 %v1486
    %v1649 = vunpack.c.l.bf16 %v1487
    %v1650 = vunpack.c.h.bf16 %v1487
    %v1651 = vunpack.c.l.bf16 %v1488
    %v1652 = vunpack.c.l.bf16 %v1489
    %v1653 = vunpack.c.h.bf16 %v1489
    %v1654 = vunpack.c.l.bf16 %v1490
    %v1655 = vunpack.c.l.bf16 %v1491
    %v1656 = vunpack.c.h.bf16 %v1491
    %v1657 = vunpack.c.l.bf16 %v1492
    %v1658 = vunpack.c.l.bf16 %v1493
    %v1659 = vunpack.c.h.bf16 %v1493
    %v1660 = vunpack.c.l.bf16 %v1494
    %v1661 = vunpack.c.l.bf16 %v1495
    %v1662 = vunpack.c.h.bf16 %v1495
    %v1663 = vunpack.c.l.bf16 %v1496
    %v1664 = vunpack.c.l.bf16 %v1497
    %v1665 = vunpack.c.h.bf16 %v1497
    %v1666 = vunpack.c.l.bf16 %v1498
    %v1667 = vunpack.c.l.bf16 %v1499
    %v1668 = vunpack.c.h.bf16 %v1499
    %v1669 = vunpack.c.l.bf16 %v1500
    %v1670 = vunpack.c.l.bf16 %v1501
    %v1671 = vunpack.c.h.bf16 %v1501
    %v1672 = vunpack.c.l.bf16 %v1502
    %v1673 = vunpack.c.l.bf16 %v1503
    %v1674 = vunpack.c.h.bf16 %v1503
    %v1675 = vunpack.c.l.bf16 %v1504
    %v1676 = vunpack.c.l.bf16 %v1505
    %v1677 = vunpack.c.h.bf16 %v1505
    %v1678 = vunpack.c.l.bf16 %v1506
    %v1679 = vunpack.c.l.bf16 %v1507
    %v1680 = vunpack.c.h.bf16 %v1507
    %v1681 = vunpack.c.l.bf16 %v1508
    %v1682 = vunpack.c.l.bf16 %v1509
    %v1683 = vunpack.c.h.bf16 %v1509
    %v1684 = vunpack.c.l.bf16 %v1510
    %v1685 = vunpack.c.l.bf16 %v1511
    %v1686 = vunpack.c.h.bf16 %v1511
    %v1687 = vunpack.c.l.bf16 %v1512
    %v1688 = vunpack.c.l.bf16 %v1513
    %v1689 = vunpack.c.h.bf16 %v1513
    %v1690 = vunpack.c.l.bf16 %v1514
    %v1691 = vunpack.c.l.bf16 %v1515
    %v1692 = vunpack.c.h.bf16 %v1515
    %v1693 = vunpack.c.l.bf16 %v1516
    %v1694 = vunpack.c.l.bf16 %v1517
    %v1695 = vunpack.c.h.bf16 %v1517
    %v1696 = vunpack.c.l.bf16 %v1518
    %v1697 = vunpack.c.l.bf16 %v1519
    %v1698 = vunpack.c.h.bf16 %v1519
    %v1699 = vunpack.c.l.bf16 %v1520
    %v1700 = vunpack.c.l.bf16 %v1521
    %v1701 = vunpack.c.h.bf16 %v1521
    %v1702 = vunpack.c.l.bf16 %v1522
    %v1703 = vunpack.c.l.bf16 %v1523
    %v1704 = vunpack.c.h.bf16 %v1523
    %v1705 = vunpack.c.l.bf16 %v1524
    %v1706 = vunpack.c.l.bf16 %v1525
    %v1707 = vunpack.c.h.bf16 %v1525
    %v1708 = vunpack.c.l.bf16 %v1526
    %v1709 = vunpack.c.l.bf16 %v1527
    %v1710 = vunpack.c.h.bf16 %v1527
    %v1711 = vunpack.c.l.bf16 %v1528
    %v1712 = vunpack.c.l.bf16 %v1529
    %v1713 = vunpack.c.h.bf16 %v1529
    %v1714 = vunpack.c.l.bf16 %v1530
    %v1715 = vunpack.c.l.bf16 %v1531
    %v1716 = vunpack.c.h.bf16 %v1531
    %v1717 = vunpack.c.l.bf16 %v1532
    %v1718 = vunpack.c.l.bf16 %v1533
    %v1719 = vunpack.c.h.bf16 %v1533
    %v1720 = vunpack.c.l.bf16 %v1534
    %v1721 = vunpack.c.l.bf16 %v1535
    %v1722 = vunpack.c.h.bf16 %v1535
    %v1723 = vunpack.c.l.bf16 %v1536
    %v1724 = vunpack.c.l.bf16 %v1537
    %v1725 = vunpack.c.h.bf16 %v1537
    %v1726 = vunpack.c.l.bf16 %v1538
    %v1727 = vunpack.c.l.bf16 %v1539
    %v1728 = vunpack.c.h.bf16 %v1539
    %v1729 = vunpack.c.l.bf16 %v1540
    %v1730 = vunpack.c.l.bf16 %v1541
    %v1731 = vunpack.c.h.bf16 %v1541
    %v1732 = vunpack.c.l.bf16 %v1542
    %v1733 = vunpack.c.l.bf16 %v1543
    %v1734 = vunpack.c.h.bf16 %v1543
    %v1735 = vunpack.c.l.bf16 %v1544
    %v1736 = vunpack.c.l.bf16 %v1545
    %v1737 = vunpack.c.h.bf16 %v1545
    %v1738 = vunpack.c.l.bf16 %v1546
    %v1739 = vld [vmem:[%s12] sm:$0x7]
    %v1741 = vperm.slane %v1739, 0
    %v1742 = vperm.slane %v1739, 1
    %v1743 = vperm.slane %v1739, 2
    %1747 = vmatpush.msra.mxu0 %v1592
    %1748 = vmatpush.msra.mxu0 %v1589
    %1749 = vmatpush.msra.mxu0 %v1586
    %1750 = vmatpush.msra.mxu0 %v1583
    %1751 = vmatpush.msra.mxu0 %v1580
    %1752 = vmatpush.msra.mxu0 %v1577
    %1753 = vmatpush.msra.mxu0 %v1574
    %1754 = vmatpush.msra.mxu0 %v1571
    %1755 = vmatpush.msra.mxu0 %v1568
    %1756 = vmatpush.msra.mxu0 %v1565
    %1757 = vmatpush.msra.mxu0 %v1562
    %1758 = vmatpush.msra.mxu0 %v1559
    %1759 = vmatpush.msra.mxu0 %v1556
    %1760 = vmatpush.msra.mxu0 %v1553
    %1761 = vmatpush.msra.mxu0 %v1550
    %1762 = vmatpush.msra.mxu0 %v1547
    %1763 = vmatmul.f32.gmra.mxu0 %v1411
    %v1764 = vpop.f32.mrf.mxu0
    %v1765 = vadd.f32 %v1741, %v1764
    %1766 = vdwg.mxu0
    %1767 = vmatpush.msra.mxu0 %v1640
    %1768 = vmatpush.msra.mxu0 %v1637
    %1769 = vmatpush.msra.mxu0 %v1634
    %1770 = vmatpush.msra.mxu0 %v1631
    %1771 = vmatpush.msra.mxu0 %v1628
    %1772 = vmatpush.msra.mxu0 %v1625
    %1773 = vmatpush.msra.mxu0 %v1622
    %1774 = vmatpush.msra.mxu0 %v1619
    %1775 = vmatpush.msra.mxu0 %v1616
    %1776 = vmatpush.msra.mxu0 %v1613
    %1777 = vmatpush.msra.mxu0 %v1610
    %1778 = vmatpush.msra.mxu0 %v1607
    %1779 = vmatpush.msra.mxu0 %v1604
    %1780 = vmatpush.msra.mxu0 %v1601
    %1781 = vmatpush.msra.mxu0 %v1598
    %1782 = vmatpush.msra.mxu0 %v1595
    %1783 = vmatmul.f32.gmra.mxu0 %v1412
    %v1784 = vpop.f32.mrf.mxu0
    %v1785 = vadd.f32 %v1765, %v1784
    %1786 = vdwg.mxu0
    %1787 = vmatpush.msra.mxu0 %v1688
    %1788 = vmatpush.msra.mxu0 %v1685
    %1789 = vmatpush.msra.mxu0 %v1682
    %1790 = vmatpush.msra.mxu0 %v1679
    %1791 = vmatpush.msra.mxu0 %v1676
    %1792 = vmatpush.msra.mxu0 %v1673
    %1793 = vmatpush.msra.mxu0 %v1670
    %1794 = vmatpush.msra.mxu0 %v1667
    %1795 = vmatpush.msra.mxu0 %v1664
    %1796 = vmatpush.msra.mxu0 %v1661
    %1797 = vmatpush.msra.mxu0 %v1658
    %1798 = vmatpush.msra.mxu0 %v1655
    %1799 = vmatpush.msra.mxu0 %v1652
    %1800 = vmatpush.msra.mxu0 %v1649
    %1801 = vmatpush.msra.mxu0 %v1646
    %1802 = vmatpush.msra.mxu0 %v1643
    %1803 = vmatmul.f32.gmra.mxu0 %v1413
    %v1804 = vpop.f32.mrf.mxu0
    %v1805 = vadd.f32 %v1785, %v1804
    %1806 = vdwg.mxu0
    %1807 = vmatpush.msra.mxu0 %v1736
    %1808 = vmatpush.msra.mxu0 %v1733
    %1809 = vmatpush.msra.mxu0 %v1730
    %1810 = vmatpush.msra.mxu0 %v1727
    %1811 = vmatpush.msra.mxu0 %v1724
    %1812 = vmatpush.msra.mxu0 %v1721
    %1813 = vmatpush.msra.mxu0 %v1718
    %1814 = vmatpush.msra.mxu0 %v1715
    %1815 = vmatpush.msra.mxu0 %v1712
    %1816 = vmatpush.msra.mxu0 %v1709
    %1817 = vmatpush.msra.mxu0 %v1706
    %1818 = vmatpush.msra.mxu0 %v1703
    %1819 = vmatpush.msra.mxu0 %v1700
    %1820 = vmatpush.msra.mxu0 %v1697
    %1821 = vmatpush.msra.mxu0 %v1694
    %1822 = vmatpush.msra.mxu0 %v1691
    %1823 = vmatmul.f32.gmra.mxu0 %v1414
    %v1824 = vpop.f32.mrf.mxu0
    %v1825 = vadd.f32 %v1805, %v1824
    %1826 = vdwg.mxu0
    %1827 = vmatpush.msra.mxu0 %v1593
    %1828 = vmatpush.msra.mxu0 %v1590
    %1829 = vmatpush.msra.mxu0 %v1587
    %1830 = vmatpush.msra.mxu0 %v1584
    %1831 = vmatpush.msra.mxu0 %v1581
    %1832 = vmatpush.msra.mxu0 %v1578
    %1833 = vmatpush.msra.mxu0 %v1575
    %1834 = vmatpush.msra.mxu0 %v1572
    %1835 = vmatpush.msra.mxu0 %v1569
    %1836 = vmatpush.msra.mxu0 %v1566
    %1837 = vmatpush.msra.mxu0 %v1563
    %1838 = vmatpush.msra.mxu0 %v1560
    %1839 = vmatpush.msra.mxu0 %v1557
    %1840 = vmatpush.msra.mxu0 %v1554
    %1841 = vmatpush.msra.mxu0 %v1551
    %1842 = vmatpush.msra.mxu0 %v1548
    %1843 = vmatmul.f32.gmra.mxu0 %v1411
    %v1844 = vpop.f32.mrf.mxu0
    %v1845 = vadd.f32 %v1742, %v1844
    %1846 = vdwg.mxu0
    %1847 = vmatpush.msra.mxu0 %v1641
    %1848 = vmatpush.msra.mxu0 %v1638
    %1849 = vmatpush.msra.mxu0 %v1635
    %1850 = vmatpush.msra.mxu0 %v1632
    %1851 = vmatpush.msra.mxu0 %v1629
    %1852 = vmatpush.msra.mxu0 %v1626
    %1853 = vmatpush.msra.mxu0 %v1623
    %1854 = vmatpush.msra.mxu0 %v1620
    %1855 = vmatpush.msra.mxu0 %v1617
    %1856 = vmatpush.msra.mxu0 %v1614
    %1857 = vmatpush.msra.mxu0 %v1611
    %1858 = vmatpush.msra.mxu0 %v1608
    %1859 = vmatpush.msra.mxu0 %v1605
    %1860 = vmatpush.msra.mxu0 %v1602
    %1861 = vmatpush.msra.mxu0 %v1599
    %1862 = vmatpush.msra.mxu0 %v1596
    %1863 = vmatmul.f32.gmra.mxu0 %v1412
    %v1864 = vpop.f32.mrf.mxu0
    %v1865 = vadd.f32 %v1845, %v1864
    %1866 = vdwg.mxu0
    %1867 = vmatpush.msra.mxu0 %v1689
    %1868 = vmatpush.msra.mxu0 %v1686
    %1869 = vmatpush.msra.mxu0 %v1683
    %1870 = vmatpush.msra.mxu0 %v1680
    %1871 = vmatpush.msra.mxu0 %v1677
    %1872 = vmatpush.msra.mxu0 %v1674
    %1873 = vmatpush.msra.mxu0 %v1671
    %1874 = vmatpush.msra.mxu0 %v1668
    %1875 = vmatpush.msra.mxu0 %v1665
    %1876 = vmatpush.msra.mxu0 %v1662
    %1877 = vmatpush.msra.mxu0 %v1659
    %1878 = vmatpush.msra.mxu0 %v1656
    %1879 = vmatpush.msra.mxu0 %v1653
    %1880 = vmatpush.msra.mxu0 %v1650
    %1881 = vmatpush.msra.mxu0 %v1647
    %1882 = vmatpush.msra.mxu0 %v1644
    %1883 = vmatmul.f32.gmra.mxu0 %v1413
    %v1884 = vpop.f32.mrf.mxu0
    %v1885 = vadd.f32 %v1865, %v1884
    %1886 = vdwg.mxu0
    %1887 = vmatpush.msra.mxu0 %v1737
    %1888 = vmatpush.msra.mxu0 %v1734
    %1889 = vmatpush.msra.mxu0 %v1731
    %1890 = vmatpush.msra.mxu0 %v1728
    %1891 = vmatpush.msra.mxu0 %v1725
    %1892 = vmatpush.msra.mxu0 %v1722
    %1893 = vmatpush.msra.mxu0 %v1719
    %1894 = vmatpush.msra.mxu0 %v1716
    %1895 = vmatpush.msra.mxu0 %v1713
    %1896 = vmatpush.msra.mxu0 %v1710
    %1897 = vmatpush.msra.mxu0 %v1707
    %1898 = vmatpush.msra.mxu0 %v1704
    %1899 = vmatpush.msra.mxu0 %v1701
    %1900 = vmatpush.msra.mxu0 %v1698
    %1901 = vmatpush.msra.mxu0 %v1695
    %1902 = vmatpush.msra.mxu0 %v1692
    %1903 = vmatmul.f32.gmra.mxu0 %v1414
    %v1904 = vpop.f32.mrf.mxu0
    %v1905 = vadd.f32 %v1885, %v1904
    %1906 = vdwg.mxu0
    %1907 = vmatpush.msra.mxu0 %v1594
    %1908 = vmatpush.msra.mxu0 %v1591
    %1909 = vmatpush.msra.mxu0 %v1588
    %1910 = vmatpush.msra.mxu0 %v1585
    %1911 = vmatpush.msra.mxu0 %v1582
    %1912 = vmatpush.msra.mxu0 %v1579
    %1913 = vmatpush.msra.mxu0 %v1576
    %1914 = vmatpush.msra.mxu0 %v1573
    %1915 = vmatpush.msra.mxu0 %v1570
    %1916 = vmatpush.msra.mxu0 %v1567
    %1917 = vmatpush.msra.mxu0 %v1564
    %1918 = vmatpush.msra.mxu0 %v1561
    %1919 = vmatpush.msra.mxu0 %v1558
    %1920 = vmatpush.msra.mxu0 %v1555
    %1921 = vmatpush.msra.mxu0 %v1552
    %1922 = vmatpush.msra.mxu0 %v1549
    %1923 = vmatmul.f32.gmra.mxu0 %v1411
    %v1924 = vpop.f32.mrf.mxu0
    %v1925 = vadd.f32 %v1743, %v1924
    %1926 = vdwg.mxu0
    %1927 = vmatpush.msra.mxu0 %v1642
    %1928 = vmatpush.msra.mxu0 %v1639
    %1929 = vmatpush.msra.mxu0 %v1636
    %1930 = vmatpush.msra.mxu0 %v1633
    %1931 = vmatpush.msra.mxu0 %v1630
    %1932 = vmatpush.msra.mxu0 %v1627
    %1933 = vmatpush.msra.mxu0 %v1624
    %1934 = vmatpush.msra.mxu0 %v1621
    %1935 = vmatpush.msra.mxu0 %v1618
    %1936 = vmatpush.msra.mxu0 %v1615
    %1937 = vmatpush.msra.mxu0 %v1612
    %1938 = vmatpush.msra.mxu0 %v1609
    %1939 = vmatpush.msra.mxu0 %v1606
    %1940 = vmatpush.msra.mxu0 %v1603
    %1941 = vmatpush.msra.mxu0 %v1600
    %1942 = vmatpush.msra.mxu0 %v1597
    %1943 = vmatmul.f32.gmra.mxu0 %v1412
    %v1944 = vpop.f32.mrf.mxu0
    %v1945 = vadd.f32 %v1925, %v1944
    %1946 = vdwg.mxu0
    %1947 = vmatpush.msra.mxu0 %v1690
    %1948 = vmatpush.msra.mxu0 %v1687
    %1949 = vmatpush.msra.mxu0 %v1684
    %1950 = vmatpush.msra.mxu0 %v1681
    %1951 = vmatpush.msra.mxu0 %v1678
    %1952 = vmatpush.msra.mxu0 %v1675
    %1953 = vmatpush.msra.mxu0 %v1672
    %1954 = vmatpush.msra.mxu0 %v1669
    %1955 = vmatpush.msra.mxu0 %v1666
    %1956 = vmatpush.msra.mxu0 %v1663
    %1957 = vmatpush.msra.mxu0 %v1660
    %1958 = vmatpush.msra.mxu0 %v1657
    %1959 = vmatpush.msra.mxu0 %v1654
    %1960 = vmatpush.msra.mxu0 %v1651
    %1961 = vmatpush.msra.mxu0 %v1648
    %1962 = vmatpush.msra.mxu0 %v1645
    %1963 = vmatmul.f32.gmra.mxu0 %v1413
    %v1964 = vpop.f32.mrf.mxu0
    %v1965 = vadd.f32 %v1945, %v1964
    %1966 = vdwg.mxu0
    %1967 = vmatpush.msra.mxu0 %v1738
    %1968 = vmatpush.msra.mxu0 %v1735
    %1969 = vmatpush.msra.mxu0 %v1732
    %1970 = vmatpush.msra.mxu0 %v1729
    %1971 = vmatpush.msra.mxu0 %v1726
    %1972 = vmatpush.msra.mxu0 %v1723
    %1973 = vmatpush.msra.mxu0 %v1720
    %1974 = vmatpush.msra.mxu0 %v1717
    %1975 = vmatpush.msra.mxu0 %v1714
    %1976 = vmatpush.msra.mxu0 %v1711
    %1977 = vmatpush.msra.mxu0 %v1708
    %1978 = vmatpush.msra.mxu0 %v1705
    %1979 = vmatpush.msra.mxu0 %v1702
    %1980 = vmatpush.msra.mxu0 %v1699
    %1981 = vmatpush.msra.mxu0 %v1696
    %1982 = vmatpush.msra.mxu0 %v1693
    %1983 = vmatmul.f32.gmra.mxu0 %v1414
    %v1984 = vpop.f32.mrf.mxu0
    %v1985 = vadd.f32 %v1965, %v1984
    %1986 = vdwg.mxu0
    %v1987 = vmax.f32 %v1825, 0.0
    %v1988 = vmax.f32 %v1905, 0.0
    %v1989 = vmax.f32 %v1985, 0.0
    %s1990 = sld [smem:[#allocation8]]
    %v1991 = vstv %s1990
    %v1992 = vmul.f32 %v1987, %v1991
    %s1993 = sld [smem:[#allocation8 + $0x1]]
    %v1994 = vstv %s1993
    %v1995 = vmul.f32 %v1987, %v1994
    %1997 = vrot.lane.b32.xlu0 %v1995, 64
    %v1998 = vpop.permute.xlu0 %1997
    %v2000 = vadd.f32 %v1992, %v1998
    %s2001 = sld [smem:[#allocation8 + $0x2]]
    %v2002 = vstv %s2001
    %v2003 = vmul.f32 %v1988, %v2002
    %v2004 = vadd.f32 %v2000, %v2003
    %s2005 = sld [smem:[#allocation8 + $0x3]]
    %v2006 = vstv %s2005
    %v2007 = vmul.f32 %v1988, %v2006
    %2009 = vrot.lane.b32.xlu0 %v2007, 64
    %v2010 = vpop.permute.xlu0 %2009
    %v2012 = vadd.f32 %v2004, %v2010
    %s2013 = sld [smem:[#allocation8 + $0x4]]
    %v2014 = vstv %s2013
    %v2015 = vmul.f32 %v1989, %v2014
    %v2016 = vadd.f32 %v2012, %v2015
    %s2017 = sld [smem:[#allocation8 + $0x5]]
    %v2018 = vstv %s2017
    %v2019 = vmul.f32 %v1989, %v2018
    %2021 = vrot.lane.b32.xlu0 %v2019, 64
    %v2022 = vpop.permute.xlu0 %2021
    %v2024 = vadd.f32 %v2016, %v2022
    %s2025 = sld [smem:[#allocation9]]
    %v2026 = vstv %s2025
    %v2027 = vadd.f32 %v2024, %v2026
    %s2028 = sld [smem:[#allocation8 + $0x6]]
    %v2029 = vstv %s2028
    %v2030 = vmul.f32 %v1987, %v2029
    %s2031 = sld [smem:[#allocation8 + $0x7]]
    %v2032 = vstv %s2031
    %v2033 = vmul.f32 %v1987, %v2032
    %2035 = vrot.lane.b32.xlu0 %v2033, 64
    %v2036 = vpop.permute.xlu0 %2035
    %v2038 = vadd.f32 %v2030, %v2036
    %s2039 = sld [smem:[#allocation8 + $0x8]]
    %v2040 = vstv %s2039
    %v2041 = vmul.f32 %v1988, %v2040
    %v2042 = vadd.f32 %v2038, %v2041
    %s2043 = sld [smem:[#allocation8 + $0x9]]
    %v2044 = vstv %s2043
    %v2045 = vmul.f32 %v1988, %v2044
    %2047 = vrot.lane.b32.xlu0 %v2045, 64
    %v2048 = vpop.permute.xlu0 %2047
    %v2050 = vadd.f32 %v2042, %v2048
    %s2051 = sld [smem:[#allocation8 + $0xa]]
    %v2052 = vstv %s2051
    %v2053 = vmul.f32 %v1989, %v2052
    %v2054 = vadd.f32 %v2050, %v2053
    %s2055 = sld [smem:[#allocation8 + $0xb]]
    %v2056 = vstv %s2055
    %v2057 = vmul.f32 %v1989, %v2056
    %2059 = vrot.lane.b32.xlu0 %v2057, 64
    %v2060 = vpop.permute.xlu0 %2059
    %v2062 = vadd.f32 %v2054, %v2060
    %s2063 = sld [smem:[#allocation9 + $0x1]]
    %v2064 = vstv %s2063
    %v2065 = vadd.f32 %v2062, %v2064
    %s2066 = sld [smem:[#allocation8 + $0xc]]
    %v2067 = vstv %s2066
    %v2068 = vmul.f32 %v1987, %v2067
    %s2069 = sld [smem:[#allocation8 + $0xd]]
    %v2070 = vstv %s2069
    %v2071 = vmul.f32 %v1987, %v2070
    %2073 = vrot.lane.b32.xlu0 %v2071, 64
    %v2074 = vpop.permute.xlu0 %2073
    %v2076 = vadd.f32 %v2068, %v2074
    %s2077 = sld [smem:[#allocation8 + $0xe]]
    %v2078 = vstv %s2077
    %v2079 = vmul.f32 %v1988, %v2078
    %v2080 = vadd.f32 %v2076, %v2079
    %s2081 = sld [smem:[#allocation8 + $0xf]]
    %v2082 = vstv %s2081
    %v2083 = vmul.f32 %v1988, %v2082
    %2085 = vrot.lane.b32.xlu0 %v2083, 64
    %v2086 = vpop.permute.xlu0 %2085
    %v2088 = vadd.f32 %v2080, %v2086
    %s2089 = sld [smem:[#allocation8 + $0x10]]
    %v2090 = vstv %s2089
    %v2091 = vmul.f32 %v1989, %v2090
    %v2092 = vadd.f32 %v2088, %v2091
    %s2093 = sld [smem:[#allocation8 + $0x11]]
    %v2094 = vstv %s2093
    %v2095 = vmul.f32 %v1989, %v2094
    %2097 = vrot.lane.b32.xlu0 %v2095, 64
    %v2098 = vpop.permute.xlu0 %2097
    %v2100 = vadd.f32 %v2092, %v2098
    %s2101 = sld [smem:[#allocation9 + $0x2]]
    %v2102 = vstv %s2101
    %v2103 = vadd.f32 %v2100, %v2102
    %s2104 = sld [smem:[#allocation8 + $0x12]]
    %v2105 = vstv %s2104
    %v2106 = vmul.f32 %v1987, %v2105
    %s2107 = sld [smem:[#allocation8 + $0x13]]
    %v2108 = vstv %s2107
    %v2109 = vmul.f32 %v1987, %v2108
    %2111 = vrot.lane.b32.xlu0 %v2109, 64
    %v2112 = vpop.permute.xlu0 %2111
    %v2114 = vadd.f32 %v2106, %v2112
    %s2115 = sld [smem:[#allocation8 + $0x14]]
    %v2116 = vstv %s2115
    %v2117 = vmul.f32 %v1988, %v2116
    %v2118 = vadd.f32 %v2114, %v2117
    %s2119 = sld [smem:[#allocation8 + $0x15]]
    %v2120 = vstv %s2119
    %v2121 = vmul.f32 %v1988, %v2120
    %2123 = vrot.lane.b32.xlu0 %v2121, 64
    %v2124 = vpop.permute.xlu0 %2123
    %v2126 = vadd.f32 %v2118, %v2124
    %s2127 = sld [smem:[#allocation8 + $0x16]]
    %v2128 = vstv %s2127
    %v2129 = vmul.f32 %v1989, %v2128
    %v2130 = vadd.f32 %v2126, %v2129
    %s2131 = sld [smem:[#allocation8 + $0x17]]
    %v2132 = vstv %s2131
    %v2133 = vmul.f32 %v1989, %v2132
    %2135 = vrot.lane.b32.xlu0 %v2133, 64
    %v2136 = vpop.permute.xlu0 %2135
    %v2138 = vadd.f32 %v2130, %v2136
    %s2139 = sld [smem:[#allocation9 + $0x3]]
    %v2140 = vstv %s2139
    %v2141 = vadd.f32 %v2138, %v2140
    %s2142 = sld [smem:[#allocation8 + $0x18]]
    %v2143 = vstv %s2142
    %v2144 = vmul.f32 %v1987, %v2143
    %s2145 = sld [smem:[#allocation8 + $0x19]]
    %v2146 = vstv %s2145
    %v2147 = vmul.f32 %v1987, %v2146
    %2149 = vrot.lane.b32.xlu0 %v2147, 64
    %v2150 = vpop.permute.xlu0 %2149
    %v2152 = vadd.f32 %v2144, %v2150
    %s2153 = sld [smem:[#allocation8 + $0x1a]]
    %v2154 = vstv %s2153
    %v2155 = vmul.f32 %v1988, %v2154
    %v2156 = vadd.f32 %v2152, %v2155
    %s2157 = sld [smem:[#allocation8 + $0x1b]]
    %v2158 = vstv %s2157
    %v2159 = vmul.f32 %v1988, %v2158
    %2161 = vrot.lane.b32.xlu0 %v2159, 64
    %v2162 = vpop.permute.xlu0 %2161
    %v2164 = vadd.f32 %v2156, %v2162
    %s2165 = sld [smem:[#allocation8 + $0x1c]]
    %v2166 = vstv %s2165
    %v2167 = vmul.f32 %v1989, %v2166
    %v2168 = vadd.f32 %v2164, %v2167
    %s2169 = sld [smem:[#allocation8 + $0x1d]]
    %v2170 = vstv %s2169
    %v2171 = vmul.f32 %v1989, %v2170
    %2173 = vrot.lane.b32.xlu0 %v2171, 64
    %v2174 = vpop.permute.xlu0 %2173
    %v2176 = vadd.f32 %v2168, %v2174
    %s2177 = sld [smem:[#allocation9 + $0x4]]
    %v2178 = vstv %s2177
    %v2179 = vadd.f32 %v2176, %v2178
    %s2180 = sld [smem:[#allocation8 + $0x1e]]
    %v2181 = vstv %s2180
    %v2182 = vmul.f32 %v1987, %v2181
    %s2183 = sld [smem:[#allocation8 + $0x1f]]
    %v2184 = vstv %s2183
    %v2185 = vmul.f32 %v1987, %v2184
    %2187 = vrot.lane.b32.xlu0 %v2185, 64
    %v2188 = vpop.permute.xlu0 %2187
    %v2190 = vadd.f32 %v2182, %v2188
    %s2191 = sld [smem:[#allocation8 + $0x20]]
    %v2192 = vstv %s2191
    %v2193 = vmul.f32 %v1988, %v2192
    %v2194 = vadd.f32 %v2190, %v2193
    %s2195 = sld [smem:[#allocation8 + $0x21]]
    %v2196 = vstv %s2195
    %v2197 = vmul.f32 %v1988, %v2196
    %2199 = vrot.lane.b32.xlu0 %v2197, 64
    %v2200 = vpop.permute.xlu0 %2199
    %v2202 = vadd.f32 %v2194, %v2200
    %s2203 = sld [smem:[#allocation8 + $0x22]]
    %v2204 = vstv %s2203
    %v2205 = vmul.f32 %v1989, %v2204
    %v2206 = vadd.f32 %v2202, %v2205
    %s2207 = sld [smem:[#allocation8 + $0x23]]
    %v2208 = vstv %s2207
    %v2209 = vmul.f32 %v1989, %v2208
    %2211 = vrot.lane.b32.xlu0 %v2209, 64
    %v2212 = vpop.permute.xlu0 %2211
    %v2214 = vadd.f32 %v2206, %v2212
    %s2215 = sld [smem:[#allocation9 + $0x5]]
    %v2216 = vstv %s2215
    %v2217 = vadd.f32 %v2214, %v2216
    %s2218 = smul.f32 %s767, 2.0
    %s2219 = sadd.f32 %s749, %s2218
    %v2220 = vmul.f32 %v839, %v843
    %v2221 = vstv %s2219
    %v2222 = vsub.f32 %v2221, %v2220
    %v2223 = vmul.f32 %v2222, 1e-11
    %v2224 = vmul.f32 %v2223, %v2027
    %v2225 = vmul.f32 %v839, %v851
    %v2226 = vstv %s749
    %v2227 = vsub.f32 %v2226, %v2225
    %v2228 = vmul.f32 %v2227, 1e-11
    %v2229 = vmul.f32 %v2228, %v2065
    %v2230 = vadd.f32 %v2224, %v2229
    %v2231 = vmul.f32 %v839, %v855
    %v2232 = vsub.f32 %v2226, %v2231
    %v2233 = vmul.f32 %v2232, 1e-11
    %v2234 = vmul.f32 %v2233, %v2103
    %v2235 = vadd.f32 %v2230, %v2234
    %v2236 = vmul.f32 %v839, %v859
    %v2237 = vsub.f32 0.0, %v2236
    %v2238 = vmul.f32 %v2237, 1e-11
    %v2239 = vmul.f32 %v2238, %v2141
    %v2240 = vadd.f32 %v2235, %v2239
    %v2241 = vmul.f32 %v839, %v863
    %v2242 = vsub.f32 0.0, %v2241
    %v2243 = vmul.f32 %v2242, 1e-11
    %v2244 = vmul.f32 %v2243, %v2179
    %v2245 = vadd.f32 %v2240, %v2244
    %v2246 = vmul.f32 %v839, %v867
    %v2247 = vsub.f32 0.0, %v2246
    %v2248 = vmul.f32 %v2247, 1e-11
    %v2249 = vmul.f32 %v2248, %v2217
    %v2250 = vadd.f32 %v2245, %v2249
    %2251 = vst.msk [vmem:[%s16] sm:$0x3] %vm714, %v2250
    %v2252 = vsub.f32 0.0, %v2225
    %v2253 = vmul.f32 %v2252, 1e-11
    %v2254 = vmul.f32 %v2253, %v2027
    %v2255 = vmul.f32 %v839, %v877
    %v2256 = vsub.f32 %v2221, %v2255
    %v2257 = vmul.f32 %v2256, 1e-11
    %v2258 = vmul.f32 %v2257, %v2065
    %v2259 = vadd.f32 %v2254, %v2258
    %v2260 = vmul.f32 %v839, %v891
    %v2261 = vsub.f32 %v2226, %v2260
    %v2262 = vmul.f32 %v2261, 1e-11
    %v2263 = vmul.f32 %v2262, %v2103
    %v2264 = vadd.f32 %v2259, %v2263
    %v2265 = vmul.f32 %v839, %v901
    %v2266 = vsub.f32 0.0, %v2265
    %v2267 = vmul.f32 %v2266, 1e-11
    %v2268 = vmul.f32 %v2267, %v2141
    %v2269 = vadd.f32 %v2264, %v2268
    %v2270 = vmul.f32 %v839, %v913
    %v2271 = vsub.f32 0.0, %v2270
    %v2272 = vmul.f32 %v2271, 1e-11
    %v2273 = vmul.f32 %v2272, %v2179
    %v2274 = vadd.f32 %v2269, %v2273
    %v2275 = vmul.f32 %v839, %v923
    %v2276 = vsub.f32 0.0, %v2275
    %v2277 = vmul.f32 %v2276, 1e-11
    %v2278 = vmul.f32 %v2277, %v2217
    %v2279 = vadd.f32 %v2274, %v2278
    %2281 = vrot.lane.b32.xlu0 %v2279, 64
    %v2282 = vpop.permute.xlu0 %2281
    %vm2284 = vcmask 1041920
    %2285 = vst.msk [vmem:[%s16] sm:$0x3] %vm2284, %v2282
    %v2286 = vsub.f32 0.0, %v2231
    %v2287 = vmul.f32 %v2286, 1e-11
    %v2288 = vmul.f32 %v2287, %v2027
    %v2289 = vsub.f32 0.0, %v2260
    %v2290 = vmul.f32 %v2289, 1e-11
    %v2291 = vmul.f32 %v2290, %v2065
    %v2292 = vadd.f32 %v2288, %v2291
    %v2293 = vmul.f32 %v839, %v927
    %v2294 = vsub.f32 %v2221, %v2293
    %v2295 = vmul.f32 %v2294, 1e-11
    %v2296 = vmul.f32 %v2295, %v2103
    %v2297 = vadd.f32 %v2292, %v2296
    %v2298 = vmul.f32 %v839, %v931
    %v2299 = vsub.f32 0.0, %v2298
    %v2300 = vmul.f32 %v2299, 1e-11
    %v2301 = vmul.f32 %v2300, %v2141
    %v2302 = vadd.f32 %v2297, %v2301
    %v2303 = vmul.f32 %v839, %v935
    %v2304 = vsub.f32 0.0, %v2303
    %v2305 = vmul.f32 %v2304, 1e-11
    %v2306 = vmul.f32 %v2305, %v2179
    %v2307 = vadd.f32 %v2302, %v2306
    %v2308 = vmul.f32 %v839, %v939
    %v2309 = vsub.f32 0.0, %v2308
    %v2310 = vmul.f32 %v2309, 1e-11
    %v2311 = vmul.f32 %v2310, %v2217
    %v2312 = vadd.f32 %v2307, %v2311
    %2313 = vst.msk [vmem:[%s16 + $0x2] sm:$0x3] %vm714, %v2312
    %v2314 = vmul.f32 %v2238, %v2027
    %v2315 = vmul.f32 %v2267, %v2065
    %v2316 = vadd.f32 %v2314, %v2315
    %v2317 = vmul.f32 %v2300, %v2103
    %v2318 = vadd.f32 %v2316, %v2317
    %v2319 = vmul.f32 %v839, %v942
    %v2320 = vstv %s767
    %v2321 = vsub.f32 %v2320, %v2319
    %v2322 = vmul.f32 %v2321, 1e-11
    %v2323 = vmul.f32 %v2322, %v2141
    %v2324 = vadd.f32 %v2318, %v2323
    %v2325 = vmul.f32 %v839, %v946
    %v2326 = vsub.f32 0.0, %v2325
    %v2327 = vmul.f32 %v2326, 1e-11
    %v2328 = vmul.f32 %v2327, %v2179
    %v2329 = vadd.f32 %v2324, %v2328
    %v2330 = vmul.f32 %v839, %v950
    %v2331 = vsub.f32 0.0, %v2330
    %v2332 = vmul.f32 %v2331, 1e-11
    %v2333 = vmul.f32 %v2332, %v2217
    %v2334 = vadd.f32 %v2329, %v2333
    %2336 = vrot.lane.b32.xlu0 %v2334, 64
    %v2337 = vpop.permute.xlu0 %2336
    %2339 = vst.msk [vmem:[%s16 + $0x2] sm:$0x3] %vm2284, %v2337
    %v2340 = vmul.f32 %v2243, %v2027
    %v2341 = vmul.f32 %v2272, %v2065
    %v2342 = vadd.f32 %v2340, %v2341
    %v2343 = vmul.f32 %v2305, %v2103
    %v2344 = vadd.f32 %v2342, %v2343
    %v2345 = vmul.f32 %v2327, %v2141
    %v2346 = vadd.f32 %v2344, %v2345
    %v2347 = vmul.f32 %v839, %v953
    %v2348 = vsub.f32 %v2320, %v2347
    %v2349 = vmul.f32 %v2348, 1e-11
    %v2350 = vmul.f32 %v2349, %v2179
    %v2351 = vadd.f32 %v2346, %v2350
    %v2352 = vmul.f32 %v839, %v957
    %v2353 = vsub.f32 0.0, %v2352
    %v2354 = vmul.f32 %v2353, 1e-11
    %v2355 = vmul.f32 %v2354, %v2217
    %v2356 = vadd.f32 %v2351, %v2355
    %2357 = vst.msk [vmem:[%s16 + $0x4] sm:$0x3] %vm714, %v2356
    %v2358 = vmul.f32 %v2248, %v2027
    %v2359 = vmul.f32 %v2277, %v2065
    %v2360 = vadd.f32 %v2358, %v2359
    %v2361 = vmul.f32 %v2310, %v2103
    %v2362 = vadd.f32 %v2360, %v2361
    %v2363 = vmul.f32 %v2332, %v2141
    %v2364 = vadd.f32 %v2362, %v2363
    %v2365 = vmul.f32 %v2354, %v2179
    %v2366 = vadd.f32 %v2364, %v2365
    %v2367 = vmul.f32 %v839, %v960
    %v2368 = vsub.f32 %v2320, %v2367
    %v2369 = vmul.f32 %v2368, 1e-11
    %v2370 = vmul.f32 %v2369, %v2217
    %v2371 = vadd.f32 %v2366, %v2370
    %2373 = vrot.lane.b32.xlu0 %v2371, 64
    %v2374 = vpop.permute.xlu0 %2373
    %2376 = vst.msk [vmem:[%s16 + $0x4] sm:$0x3] %vm2284, %v2374
    // Predicated region
    $region82: #{_forward_jit.1} parent=1 // pred_check
      _
    $region83: #{_forward_jit.1} parent=1 // pred_check_branch
      %2378 = sbr.rel (0) target = $region85
    $region84: #{_forward_jit.1} parent=1 // pred_region
      _
    $region85: #{_forward_jit.1} parent=1 // pred_fallthru
      _
    // Predicated region
    $region86: #{_forward_jit.1} parent=1 // pred_check
      _
    $region87: #{_forward_jit.1} parent=1 // pred_check_branch
      %2380 = sbr.rel (0) target = $region89
    $region88: #{_forward_jit.1} parent=1 // pred_region
      _
    $region89: #{_forward_jit.1} parent=1 // pred_fallthru
      _
    %2381 = vsyncpa [#allocation6], 1
    %2382 = vsyncpa [#allocation7], 1
    %2383 = vsyncpa [#allocation10], 1
  %2384 = vsyncmov [#allocation4]
  %s2385 = vpop.sfrf %2384
  %p2386 = scmp.eq.s32.totalorder %s2385, 0
  %p2387 = pneg %p2386
  %2389 = shalt.err (%p2387)
  %s2390 = scalar_lea.sflag [#allocation4], 1
  %2391 = vsyncmov %s2390
  %s2392 = vpop.sfrf %2391
  %p2393 = scmp.eq.s32.totalorder %s2392, 0
  %p2394 = pneg %p2393
  %2396 = shalt.err (%p2394)

</llo_original>
